<compile_context>
chip_gen: v6e
topology: v6e:2x2x1
jax: 0.10.0
libtpu: 0.0.40
codegen_flags: <defaults>
</compile_context>

<pallas_src>
import jax
import jax.numpy as jnp
from jax import lax
from jax.experimental import pallas as pl
from jax.experimental.pallas import tpu as pltpu


def _lstm_model_kernel(x_ref,            # (S*B, D)  time-major, flattened
                       wih0_ref,         # (D, 4H)
                       whh0_ref,         # (H, 4H)
                       b0_ref,           # (1, 4H)   b_ih_l0 + b_hh_l0
                       w1cat_ref,        # (2H, 4H)  [Wih1; Whh1] pre-concat
                       b1_ref,           # (1, 4H)   b_ih_l1 + b_hh_l1
                       wfc_ref,          # (1, H)    fc weight row
                       bfc_ref,          # (1, 1)
                       out_ref,          # (B, 1)
                       xproj_ref):       # VMEM scratch (S*B, 4H)
    B = out_ref.shape[0]
    SB = x_ref.shape[0]
    S = SB // B
    H = whh0_ref.shape[0]

    # ---- Hoisted layer-0 input projection (no recurrence dependency) -------
    # One well-shaped matmul for all timesteps; bias folded in here once.
    xproj_ref[...] = (jnp.dot(x_ref[...], wih0_ref[...],
                              preferred_element_type=jnp.float32)
                      + b0_ref[...])

    # Layer-1 bias pre-broadcast once (JAX does not CSE broadcast_in_dim).
    b1b = jnp.broadcast_to(b1_ref[...], (B, 4 * H))

    def cell_nonlin(z, c):
        i = jax.nn.sigmoid(z[:, 0 * H:1 * H])
        f = jax.nn.sigmoid(z[:, 1 * H:2 * H])
        g = jnp.tanh(z[:, 2 * H:3 * H])
        o = jax.nn.sigmoid(z[:, 3 * H:4 * H])
        c_new = f * c + i * g
        h_new = o * jnp.tanh(c_new)
        return h_new, c_new

    def step(t, carry):
        h0, c0, h1, c1 = carry

        # Layer 0: recurrent matmul only; input projection read from scratch.
        start = pl.multiple_of(t * B, B)
        z0 = (xproj_ref[pl.ds(start, B), :]
              + jnp.dot(h0, whh0_ref[...], preferred_element_type=jnp.float32))
        h0, c0 = cell_nonlin(z0, c0)

        # Layer 1: fused input+recurrent matmul via [h0, h1] @ [Wih1; Whh1].
        hcat = jnp.concatenate([h0, h1], axis=1)             # (B, 2H)
        z1 = (jnp.dot(hcat, w1cat_ref[...],
                      preferred_element_type=jnp.float32)
              + b1b)
        h1, c1 = cell_nonlin(z1, c1)

        return h0, c0, h1, c1

    # State lives in registers ((B,H)=(8,128) f32 = one vreg each); loop is
    # fully unrolled (S static) for cross-iteration scheduling.
    zeros = jnp.zeros((B, H), jnp.float32)
    _, _, h1, _ = lax.fori_loop(0, S, step, (zeros, zeros, zeros, zeros),
                                unroll=True)

    # fc(h_n[-1]) as VPU multiply + lane reduction (avoid N=1 MXU matmul):
    # (B,H) * (1,H) -> sum over lanes -> (B,1)
    out_ref[...] = (jnp.sum(h1 * wfc_ref[...], axis=-1, keepdims=True)
                    + bfc_ref[...])


def lstm_model_forward(x, params):
    """x: (B, S, D) float32 (batch_first, like the PyTorch module)."""
    B, S, D = x.shape
    H = params["w_hh_l0"].shape[1]            # w_hh_l0: (4H, H)

    # Pre-transpose weights so the kernel does (rows, in) @ (in, 4H);
    # combine biases; pre-concatenate layer-1 weights for the fused matmul.
    wih0_t = params["w_ih_l0"].T                                   # (D, 4H)
    whh0_t = params["w_hh_l0"].T                                   # (H, 4H)
    b0 = (params["b_ih_l0"] + params["b_hh_l0"]).reshape(1, 4 * H)
    w1cat = jnp.concatenate(
        [params["w_ih_l1"].T, params["w_hh_l1"].T], axis=0)        # (2H, 4H)
    b1 = (params["b_ih_l1"] + params["b_hh_l1"]).reshape(1, 4 * H)
    wfc = params["fc_w"].reshape(1, H)                             # (1, H)
    bfc = params["fc_b"].reshape(1, 1)                             # (1, 1)

    # Time-major, flattened input so the hoisted layer-0 projection is a
    # single (S*B, D) @ (D, 4H) matmul inside the kernel.
    x_flat = jnp.transpose(x, (1, 0, 2)).reshape(S * B, D)

    vmem = pl.BlockSpec(memory_space=pltpu.MemorySpace.VMEM)
    out = pl.pallas_call(
        _lstm_model_kernel,
        out_shape=jax.ShapeDtypeStruct((B, 1), jnp.float32),
        in_specs=[vmem] * 8,
        out_specs=vmem,
        scratch_shapes=[pltpu.VMEM((S * B, 4 * H), jnp.float32)],
    )(x_flat, wih0_t, whh0_t, b0, w1cat, b1, wfc, bfc)
    return out


def init_params(key, input_dim, hidden_dim):
    """Deterministic PyTorch-shaped parameter init (U(-k, k), k = 1/sqrt(H))."""
    k = 1.0 / jnp.sqrt(hidden_dim)
    keys = jax.random.split(key, 10)
    u = lambda kk, shape: jax.random.uniform(kk, shape, jnp.float32, -k, k)
    H4 = 4 * hidden_dim
    return {
        "w_ih_l0": u(keys[0], (H4, input_dim)),
        "w_hh_l0": u(keys[1], (H4, hidden_dim)),
        "b_ih_l0": u(keys[2], (H4,)),
        "b_hh_l0": u(keys[3], (H4,)),
        "w_ih_l1": u(keys[4], (H4, hidden_dim)),
        "w_hh_l1": u(keys[5], (H4, hidden_dim)),
        "b_ih_l1": u(keys[6], (H4,)),
        "b_hh_l1": u(keys[7], (H4,)),
        "fc_w":    u(keys[8], (1, hidden_dim)),
        "fc_b":    u(keys[9], (1,)),
    }


def lstm_model_reference(x, params):
    """Pure-JAX reference matching PyTorch nn.LSTM semantics (for validation)."""
    H = params["w_hh_l0"].shape[1]

    def cell(x_t, h, c, w_ih, w_hh, b_ih, b_hh):
        z = x_t @ w_ih.T + b_ih + h @ w_hh.T + b_hh
        i = jax.nn.sigmoid(z[:, 0 * H:1 * H])
        f = jax.nn.sigmoid(z[:, 1 * H:2 * H])
        g = jnp.tanh(z[:, 2 * H:3 * H])
        o = jax.nn.sigmoid(z[:, 3 * H:4 * H])
        c = f * c + i * g
        h = o * jnp.tanh(c)
        return h, c

    B, S, _ = x.shape
    h0 = c0 = h1 = c1 = jnp.zeros((B, H), jnp.float32)
    for t in range(S):
        h0, c0 = cell(x[:, t, :], h0, c0, params["w_ih_l0"], params["w_hh_l0"],
                      params["b_ih_l0"], params["b_hh_l0"])
        h1, c1 = cell(h0, h1, c1, params["w_ih_l1"], params["w_hh_l1"],
                      params["b_ih_l1"], params["b_hh_l1"])
    return h1 @ params["fc_w"].T + params["fc_b"]


if __name__ == "__main__":
    B, S, D, H = 8, 8, 32, 128   # batch, seq, input_dim, hidden_dim (module default H=128)

    key = jax.random.PRNGKey(0)
    kx, kp = jax.random.split(key)
    x = jax.random.normal(kx, (B, S, D), jnp.float32)
    params = init_params(kp, D, H)

    out = jax.block_until_ready(lstm_model_forward(x, params))
    assert out.shape == (B, 1), out.shape

    ref = lstm_model_reference(x, params)
    assert jnp.allclose(out, ref, atol=1e-4, rtol=1e-4), (out, ref)

    print("KERNEL_OK")
</pallas_src>

<mosaic_0001>
module attributes {stable_mosaic.version = 11 : i64} {
  func.func @_lstm_model_kernel(%arg0: memref<64x32xf32, #tpu.memory_space<vmem>>, %arg1: memref<32x512xf32, #tpu.memory_space<vmem>>, %arg2: memref<128x512xf32, #tpu.memory_space<vmem>>, %arg3: memref<1x512xf32, #tpu.memory_space<vmem>>, %arg4: memref<256x512xf32, #tpu.memory_space<vmem>>, %arg5: memref<1x512xf32, #tpu.memory_space<vmem>>, %arg6: memref<1x128xf32, #tpu.memory_space<vmem>>, %arg7: memref<1x1xf32, #tpu.memory_space<vmem>>, %arg8: memref<8x1xf32, #tpu.memory_space<vmem>>, %arg9: memref<64x512xf32, #tpu.memory_space<vmem>>) attributes {dimension_semantics = [], scalar_prefetch = 0 : i64, scratch_operands = 1 : i64, tpu.core_type = #tpu.core_type<tc>} {
    %c0 = arith.constant 0 : index
    %c0_0 = arith.constant 0 : index
    %0 = vector.load %arg0[%c0, %c0_0] : memref<64x32xf32, #tpu.memory_space<vmem>>, vector<64x32xf32>
    %c0_1 = arith.constant 0 : index
    %c0_2 = arith.constant 0 : index
    %1 = vector.load %arg1[%c0_1, %c0_2] : memref<32x512xf32, #tpu.memory_space<vmem>>, vector<32x512xf32>
    %cst = arith.constant dense<0.000000e+00> : vector<64x512xf32>
    %2 = tpu.matmul %0, %1, %cst {dimension_numbers = #tpu.dot_dimension_numbers<[1], [0], [0], [1], [0, 0, 1, 1], [], []>} : vector<64x32xf32>, vector<32x512xf32>, vector<64x512xf32> -> vector<64x512xf32>
    %c0_3 = arith.constant 0 : index
    %c0_4 = arith.constant 0 : index
    %3 = vector.load %arg3[%c0_3, %c0_4] : memref<1x512xf32, #tpu.memory_space<vmem>>, vector<1x512xf32>
    %4 = vector.broadcast %3 : vector<1x512xf32> to vector<64x512xf32>
    %5 = arith.addf %2, %4 : vector<64x512xf32>
    %c0_5 = arith.constant 0 : index
    %c0_6 = arith.constant 0 : index
    %6 = vector.load %arg9[%c0_5, %c0_6] : memref<64x512xf32, #tpu.memory_space<vmem>>, vector<64x512xf32>
    tpu.vector_store %arg9[%c0_5, %c0_6], %5 {strides = array<i32>} : memref<64x512xf32, #tpu.memory_space<vmem>>, vector<64x512xf32>,
    %c0_7 = arith.constant 0 : index
    %c0_8 = arith.constant 0 : index
    %7 = vector.load %arg5[%c0_7, %c0_8] : memref<1x512xf32, #tpu.memory_space<vmem>>, vector<1x512xf32>
    %8 = vector.shape_cast %7 : vector<1x512xf32> to vector<1x512xf32>
    %9 = vector.broadcast %8 : vector<1x512xf32> to vector<8x512xf32>
    %cst_9 = arith.constant 0.000000e+00 : f32
    %10 = vector.broadcast %cst_9 : f32 to vector<8x128xf32>
    %c0_i32 = arith.constant 0 : i32
    %c8_i32 = arith.constant 8 : i32
    %11 = arith.muli %c0_i32, %c8_i32 : i32
    %12 = tpu.assume_multiple %11, 8 : i32
    %13 = arith.index_cast %12 : i32 to index
    %c0_10 = arith.constant 0 : index
    %14 = vector.load %arg9[%13, %c0_10] : memref<64x512xf32, #tpu.memory_space<vmem>>, vector<8x512xf32>
    %c0_11 = arith.constant 0 : index
    %c0_12 = arith.constant 0 : index
    %15 = vector.load %arg2[%c0_11, %c0_12] : memref<128x512xf32, #tpu.memory_space<vmem>>, vector<128x512xf32>
    %cst_13 = arith.constant dense<0.000000e+00> : vector<8x512xf32>
    %16 = tpu.matmul %10, %15, %cst_13 {dimension_numbers = #tpu.dot_dimension_numbers<[1], [0], [0], [1], [0, 0, 1, 1], [], []>} : vector<8x128xf32>, vector<128x512xf32>, vector<8x512xf32> -> vector<8x512xf32>
    %17 = arith.addf %14, %16 : vector<8x512xf32>
    %18 = vector.extract_strided_slice %17 {offsets = [0, 0], sizes = [8, 128], strides = [1, 1]} : vector<8x512xf32> to vector<8x128xf32>
    %19 = arith.negf %18 : vector<8x128xf32>
    %20 = math.exp %19 : vector<8x128xf32>
    %cst_14 = arith.constant 1.000000e+00 : f32
    %21 = vector.broadcast %cst_14 : f32 to vector<8x128xf32>
    %22 = arith.addf %21, %20 : vector<8x128xf32>
    %23 = arith.divf %21, %22 : vector<8x128xf32>
    %24 = vector.extract_strided_slice %17 {offsets = [0, 128], sizes = [8, 128], strides = [1, 1]} : vector<8x512xf32> to vector<8x128xf32>
    %25 = arith.negf %24 : vector<8x128xf32>
    %26 = math.exp %25 : vector<8x128xf32>
    %cst_15 = arith.constant 1.000000e+00 : f32
    %27 = vector.broadcast %cst_15 : f32 to vector<8x128xf32>
    %28 = arith.addf %27, %26 : vector<8x128xf32>
    %29 = arith.divf %27, %28 : vector<8x128xf32>
    %30 = vector.extract_strided_slice %17 {offsets = [0, 256], sizes = [8, 128], strides = [1, 1]} : vector<8x512xf32> to vector<8x128xf32>
    %31 = math.tanh %30 : vector<8x128xf32>
    %32 = vector.extract_strided_slice %17 {offsets = [0, 384], sizes = [8, 128], strides = [1, 1]} : vector<8x512xf32> to vector<8x128xf32>
    %33 = arith.negf %32 : vector<8x128xf32>
    %34 = math.exp %33 : vector<8x128xf32>
    %cst_16 = arith.constant 1.000000e+00 : f32
    %35 = vector.broadcast %cst_16 : f32 to vector<8x128xf32>
    %36 = arith.addf %35, %34 : vector<8x128xf32>
    %37 = arith.divf %35, %36 : vector<8x128xf32>
    %38 = arith.mulf %29, %10 : vector<8x128xf32>
    %39 = arith.mulf %23, %31 : vector<8x128xf32>
    %40 = arith.addf %38, %39 : vector<8x128xf32>
    %41 = math.tanh %40 : vector<8x128xf32>
    %42 = arith.mulf %37, %41 : vector<8x128xf32>
    %43 = tpu.concatenate %42, %10 in 1 : vector<8x128xf32>, vector<8x128xf32> -> vector<8x256xf32>
    %c0_17 = arith.constant 0 : index
    %c0_18 = arith.constant 0 : index
    %44 = vector.load %arg4[%c0_17, %c0_18] : memref<256x512xf32, #tpu.memory_space<vmem>>, vector<256x512xf32>
    %cst_19 = arith.constant dense<0.000000e+00> : vector<8x512xf32>
    %45 = tpu.matmul %43, %44, %cst_19 {dimension_numbers = #tpu.dot_dimension_numbers<[1], [0], [0], [1], [0, 0, 1, 1], [], []>} : vector<8x256xf32>, vector<256x512xf32>, vector<8x512xf32> -> vector<8x512xf32>
    %46 = arith.addf %45, %9 : vector<8x512xf32>
    %47 = vector.extract_strided_slice %46 {offsets = [0, 0], sizes = [8, 128], strides = [1, 1]} : vector<8x512xf32> to vector<8x128xf32>
    %48 = arith.negf %47 : vector<8x128xf32>
    %49 = math.exp %48 : vector<8x128xf32>
    %cst_20 = arith.constant 1.000000e+00 : f32
    %50 = vector.broadcast %cst_20 : f32 to vector<8x128xf32>
    %51 = arith.addf %50, %49 : vector<8x128xf32>
    %52 = arith.divf %50, %51 : vector<8x128xf32>
    %53 = vector.extract_strided_slice %46 {offsets = [0, 128], sizes = [8, 128], strides = [1, 1]} : vector<8x512xf32> to vector<8x128xf32>
    %54 = arith.negf %53 : vector<8x128xf32>
    %55 = math.exp %54 : vector<8x128xf32>
    %cst_21 = arith.constant 1.000000e+00 : f32
    %56 = vector.broadcast %cst_21 : f32 to vector<8x128xf32>
    %57 = arith.addf %56, %55 : vector<8x128xf32>
    %58 = arith.divf %56, %57 : vector<8x128xf32>
    %59 = vector.extract_strided_slice %46 {offsets = [0, 256], sizes = [8, 128], strides = [1, 1]} : vector<8x512xf32> to vector<8x128xf32>
    %60 = math.tanh %59 : vector<8x128xf32>
    %61 = vector.extract_strided_slice %46 {offsets = [0, 384], sizes = [8, 128], strides = [1, 1]} : vector<8x512xf32> to vector<8x128xf32>
    %62 = arith.negf %61 : vector<8x128xf32>
    %63 = math.exp %62 : vector<8x128xf32>
    %cst_22 = arith.constant 1.000000e+00 : f32
    %64 = vector.broadcast %cst_22 : f32 to vector<8x128xf32>
    %65 = arith.addf %64, %63 : vector<8x128xf32>
    %66 = arith.divf %64, %65 : vector<8x128xf32>
    %67 = arith.mulf %58, %10 : vector<8x128xf32>
    %68 = arith.mulf %52, %60 : vector<8x128xf32>
    %69 = arith.addf %67, %68 : vector<8x128xf32>
    %70 = math.tanh %69 : vector<8x128xf32>
    %71 = arith.mulf %66, %70 : vector<8x128xf32>
    %c1_i32 = arith.constant 1 : i32
    %c8_i32_23 = arith.constant 8 : i32
    %72 = arith.muli %c1_i32, %c8_i32_23 : i32
    %73 = tpu.assume_multiple %72, 8 : i32
    %74 = arith.index_cast %73 : i32 to index
    %c0_24 = arith.constant 0 : index
    %75 = vector.load %arg9[%74, %c0_24] : memref<64x512xf32, #tpu.memory_space<vmem>>, vector<8x512xf32>
    %c0_25 = arith.constant 0 : index
    %c0_26 = arith.constant 0 : index
    %76 = vector.load %arg2[%c0_25, %c0_26] : memref<128x512xf32, #tpu.memory_space<vmem>>, vector<128x512xf32>
    %cst_27 = arith.constant dense<0.000000e+00> : vector<8x512xf32>
    %77 = tpu.matmul %42, %76, %cst_27 {dimension_numbers = #tpu.dot_dimension_numbers<[1], [0], [0], [1], [0, 0, 1, 1], [], []>} : vector<8x128xf32>, vector<128x512xf32>, vector<8x512xf32> -> vector<8x512xf32>
    %78 = arith.addf %75, %77 : vector<8x512xf32>
    %79 = vector.extract_strided_slice %78 {offsets = [0, 0], sizes = [8, 128], strides = [1, 1]} : vector<8x512xf32> to vector<8x128xf32>
    %80 = arith.negf %79 : vector<8x128xf32>
    %81 = math.exp %80 : vector<8x128xf32>
    %cst_28 = arith.constant 1.000000e+00 : f32
    %82 = vector.broadcast %cst_28 : f32 to vector<8x128xf32>
    %83 = arith.addf %82, %81 : vector<8x128xf32>
    %84 = arith.divf %82, %83 : vector<8x128xf32>
    %85 = vector.extract_strided_slice %78 {offsets = [0, 128], sizes = [8, 128], strides = [1, 1]} : vector<8x512xf32> to vector<8x128xf32>
    %86 = arith.negf %85 : vector<8x128xf32>
    %87 = math.exp %86 : vector<8x128xf32>
    %cst_29 = arith.constant 1.000000e+00 : f32
    %88 = vector.broadcast %cst_29 : f32 to vector<8x128xf32>
    %89 = arith.addf %88, %87 : vector<8x128xf32>
    %90 = arith.divf %88, %89 : vector<8x128xf32>
    %91 = vector.extract_strided_slice %78 {offsets = [0, 256], sizes = [8, 128], strides = [1, 1]} : vector<8x512xf32> to vector<8x128xf32>
    %92 = math.tanh %91 : vector<8x128xf32>
    %93 = vector.extract_strided_slice %78 {offsets = [0, 384], sizes = [8, 128], strides = [1, 1]} : vector<8x512xf32> to vector<8x128xf32>
    %94 = arith.negf %93 : vector<8x128xf32>
    %95 = math.exp %94 : vector<8x128xf32>
    %cst_30 = arith.constant 1.000000e+00 : f32
    %96 = vector.broadcast %cst_30 : f32 to vector<8x128xf32>
    %97 = arith.addf %96, %95 : vector<8x128xf32>
    %98 = arith.divf %96, %97 : vector<8x128xf32>
    %99 = arith.mulf %90, %40 : vector<8x128xf32>
    %100 = arith.mulf %84, %92 : vector<8x128xf32>
    %101 = arith.addf %99, %100 : vector<8x128xf32>
    %102 = math.tanh %101 : vector<8x128xf32>
    %103 = arith.mulf %98, %102 : vector<8x128xf32>
    %104 = tpu.concatenate %103, %71 in 1 : vector<8x128xf32>, vector<8x128xf32> -> vector<8x256xf32>
    %c0_31 = arith.constant 0 : index
    %c0_32 = arith.constant 0 : index
    %105 = vector.load %arg4[%c0_31, %c0_32] : memref<256x512xf32, #tpu.memory_space<vmem>>, vector<256x512xf32>
    %cst_33 = arith.constant dense<0.000000e+00> : vector<8x512xf32>
    %106 = tpu.matmul %104, %105, %cst_33 {dimension_numbers = #tpu.dot_dimension_numbers<[1], [0], [0], [1], [0, 0, 1, 1], [], []>} : vector<8x256xf32>, vector<256x512xf32>, vector<8x512xf32> -> vector<8x512xf32>
    %107 = arith.addf %106, %9 : vector<8x512xf32>
    %108 = vector.extract_strided_slice %107 {offsets = [0, 0], sizes = [8, 128], strides = [1, 1]} : vector<8x512xf32> to vector<8x128xf32>
    %109 = arith.negf %108 : vector<8x128xf32>
    %110 = math.exp %109 : vector<8x128xf32>
    %cst_34 = arith.constant 1.000000e+00 : f32
    %111 = vector.broadcast %cst_34 : f32 to vector<8x128xf32>
    %112 = arith.addf %111, %110 : vector<8x128xf32>
    %113 = arith.divf %111, %112 : vector<8x128xf32>
    %114 = vector.extract_strided_slice %107 {offsets = [0, 128], sizes = [8, 128], strides = [1, 1]} : vector<8x512xf32> to vector<8x128xf32>
    %115 = arith.negf %114 : vector<8x128xf32>
    %116 = math.exp %115 : vector<8x128xf32>
    %cst_35 = arith.constant 1.000000e+00 : f32
    %117 = vector.broadcast %cst_35 : f32 to vector<8x128xf32>
    %118 = arith.addf %117, %116 : vector<8x128xf32>
    %119 = arith.divf %117, %118 : vector<8x128xf32>
    %120 = vector.extract_strided_slice %107 {offsets = [0, 256], sizes = [8, 128], strides = [1, 1]} : vector<8x512xf32> to vector<8x128xf32>
    %121 = math.tanh %120 : vector<8x128xf32>
    %122 = vector.extract_strided_slice %107 {offsets = [0, 384], sizes = [8, 128], strides = [1, 1]} : vector<8x512xf32> to vector<8x128xf32>
    %123 = arith.negf %122 : vector<8x128xf32>
    %124 = math.exp %123 : vector<8x128xf32>
    %cst_36 = arith.constant 1.000000e+00 : f32
    %125 = vector.broadcast %cst_36 : f32 to vector<8x128xf32>
    %126 = arith.addf %125, %124 : vector<8x128xf32>
    %127 = arith.divf %125, %126 : vector<8x128xf32>
    %128 = arith.mulf %119, %69 : vector<8x128xf32>
    %129 = arith.mulf %113, %121 : vector<8x128xf32>
    %130 = arith.addf %128, %129 : vector<8x128xf32>
    %131 = math.tanh %130 : vector<8x128xf32>
    %132 = arith.mulf %127, %131 : vector<8x128xf32>
    %c2_i32 = arith.constant 2 : i32
    %c8_i32_37 = arith.constant 8 : i32
    %133 = arith.muli %c2_i32, %c8_i32_37 : i32
    %134 = tpu.assume_multiple %133, 8 : i32
    %135 = arith.index_cast %134 : i32 to index
    %c0_38 = arith.constant 0 : index
    %136 = vector.load %arg9[%135, %c0_38] : memref<64x512xf32, #tpu.memory_space<vmem>>, vector<8x512xf32>
    %c0_39 = arith.constant 0 : index
    %c0_40 = arith.constant 0 : index
    %137 = vector.load %arg2[%c0_39, %c0_40] : memref<128x512xf32, #tpu.memory_space<vmem>>, vector<128x512xf32>
    %cst_41 = arith.constant dense<0.000000e+00> : vector<8x512xf32>
    %138 = tpu.matmul %103, %137, %cst_41 {dimension_numbers = #tpu.dot_dimension_numbers<[1], [0], [0], [1], [0, 0, 1, 1], [], []>} : vector<8x128xf32>, vector<128x512xf32>, vector<8x512xf32> -> vector<8x512xf32>
    %139 = arith.addf %136, %138 : vector<8x512xf32>
    %140 = vector.extract_strided_slice %139 {offsets = [0, 0], sizes = [8, 128], strides = [1, 1]} : vector<8x512xf32> to vector<8x128xf32>
    %141 = arith.negf %140 : vector<8x128xf32>
    %142 = math.exp %141 : vector<8x128xf32>
    %cst_42 = arith.constant 1.000000e+00 : f32
    %143 = vector.broadcast %cst_42 : f32 to vector<8x128xf32>
    %144 = arith.addf %143, %142 : vector<8x128xf32>
    %145 = arith.divf %143, %144 : vector<8x128xf32>
    %146 = vector.extract_strided_slice %139 {offsets = [0, 128], sizes = [8, 128], strides = [1, 1]} : vector<8x512xf32> to vector<8x128xf32>
    %147 = arith.negf %146 : vector<8x128xf32>
    %148 = math.exp %147 : vector<8x128xf32>
    %cst_43 = arith.constant 1.000000e+00 : f32
    %149 = vector.broadcast %cst_43 : f32 to vector<8x128xf32>
    %150 = arith.addf %149, %148 : vector<8x128xf32>
    %151 = arith.divf %149, %150 : vector<8x128xf32>
    %152 = vector.extract_strided_slice %139 {offsets = [0, 256], sizes = [8, 128], strides = [1, 1]} : vector<8x512xf32> to vector<8x128xf32>
    %153 = math.tanh %152 : vector<8x128xf32>
    %154 = vector.extract_strided_slice %139 {offsets = [0, 384], sizes = [8, 128], strides = [1, 1]} : vector<8x512xf32> to vector<8x128xf32>
    %155 = arith.negf %154 : vector<8x128xf32>
    %156 = math.exp %155 : vector<8x128xf32>
    %cst_44 = arith.constant 1.000000e+00 : f32
    %157 = vector.broadcast %cst_44 : f32 to vector<8x128xf32>
    %158 = arith.addf %157, %156 : vector<8x128xf32>
    %159 = arith.divf %157, %158 : vector<8x128xf32>
    %160 = arith.mulf %151, %101 : vector<8x128xf32>
    %161 = arith.mulf %145, %153 : vector<8x128xf32>
    %162 = arith.addf %160, %161 : vector<8x128xf32>
    %163 = math.tanh %162 : vector<8x128xf32>
    %164 = arith.mulf %159, %163 : vector<8x128xf32>
    %165 = tpu.concatenate %164, %132 in 1 : vector<8x128xf32>, vector<8x128xf32> -> vector<8x256xf32>
    %c0_45 = arith.constant 0 : index
    %c0_46 = arith.constant 0 : index
    %166 = vector.load %arg4[%c0_45, %c0_46] : memref<256x512xf32, #tpu.memory_space<vmem>>, vector<256x512xf32>
    %cst_47 = arith.constant dense<0.000000e+00> : vector<8x512xf32>
    %167 = tpu.matmul %165, %166, %cst_47 {dimension_numbers = #tpu.dot_dimension_numbers<[1], [0], [0], [1], [0, 0, 1, 1], [], []>} : vector<8x256xf32>, vector<256x512xf32>, vector<8x512xf32> -> vector<8x512xf32>
    %168 = arith.addf %167, %9 : vector<8x512xf32>
    %169 = vector.extract_strided_slice %168 {offsets = [0, 0], sizes = [8, 128], strides = [1, 1]} : vector<8x512xf32> to vector<8x128xf32>
    %170 = arith.negf %169 : vector<8x128xf32>
    %171 = math.exp %170 : vector<8x128xf32>
    %cst_48 = arith.constant 1.000000e+00 : f32
    %172 = vector.broadcast %cst_48 : f32 to vector<8x128xf32>
    %173 = arith.addf %172, %171 : vector<8x128xf32>
    %174 = arith.divf %172, %173 : vector<8x128xf32>
    %175 = vector.extract_strided_slice %168 {offsets = [0, 128], sizes = [8, 128], strides = [1, 1]} : vector<8x512xf32> to vector<8x128xf32>
    %176 = arith.negf %175 : vector<8x128xf32>
    %177 = math.exp %176 : vector<8x128xf32>
    %cst_49 = arith.constant 1.000000e+00 : f32
    %178 = vector.broadcast %cst_49 : f32 to vector<8x128xf32>
    %179 = arith.addf %178, %177 : vector<8x128xf32>
    %180 = arith.divf %178, %179 : vector<8x128xf32>
    %181 = vector.extract_strided_slice %168 {offsets = [0, 256], sizes = [8, 128], strides = [1, 1]} : vector<8x512xf32> to vector<8x128xf32>
    %182 = math.tanh %181 : vector<8x128xf32>
    %183 = vector.extract_strided_slice %168 {offsets = [0, 384], sizes = [8, 128], strides = [1, 1]} : vector<8x512xf32> to vector<8x128xf32>
    %184 = arith.negf %183 : vector<8x128xf32>
    %185 = math.exp %184 : vector<8x128xf32>
    %cst_50 = arith.constant 1.000000e+00 : f32
    %186 = vector.broadcast %cst_50 : f32 to vector<8x128xf32>
    %187 = arith.addf %186, %185 : vector<8x128xf32>
    %188 = arith.divf %186, %187 : vector<8x128xf32>
    %189 = arith.mulf %180, %130 : vector<8x128xf32>
    %190 = arith.mulf %174, %182 : vector<8x128xf32>
    %191 = arith.addf %189, %190 : vector<8x128xf32>
    %192 = math.tanh %191 : vector<8x128xf32>
    %193 = arith.mulf %188, %192 : vector<8x128xf32>
    %c3_i32 = arith.constant 3 : i32
    %c8_i32_51 = arith.constant 8 : i32
    %194 = arith.muli %c3_i32, %c8_i32_51 : i32
    %195 = tpu.assume_multiple %194, 8 : i32
    %196 = arith.index_cast %195 : i32 to index
    %c0_52 = arith.constant 0 : index
    %197 = vector.load %arg9[%196, %c0_52] : memref<64x512xf32, #tpu.memory_space<vmem>>, vector<8x512xf32>
    %c0_53 = arith.constant 0 : index
    %c0_54 = arith.constant 0 : index
    %198 = vector.load %arg2[%c0_53, %c0_54] : memref<128x512xf32, #tpu.memory_space<vmem>>, vector<128x512xf32>
    %cst_55 = arith.constant dense<0.000000e+00> : vector<8x512xf32>
    %199 = tpu.matmul %164, %198, %cst_55 {dimension_numbers = #tpu.dot_dimension_numbers<[1], [0], [0], [1], [0, 0, 1, 1], [], []>} : vector<8x128xf32>, vector<128x512xf32>, vector<8x512xf32> -> vector<8x512xf32>
    %200 = arith.addf %197, %199 : vector<8x512xf32>
    %201 = vector.extract_strided_slice %200 {offsets = [0, 0], sizes = [8, 128], strides = [1, 1]} : vector<8x512xf32> to vector<8x128xf32>
    %202 = arith.negf %201 : vector<8x128xf32>
    %203 = math.exp %202 : vector<8x128xf32>
    %cst_56 = arith.constant 1.000000e+00 : f32
    %204 = vector.broadcast %cst_56 : f32 to vector<8x128xf32>
    %205 = arith.addf %204, %203 : vector<8x128xf32>
    %206 = arith.divf %204, %205 : vector<8x128xf32>
    %207 = vector.extract_strided_slice %200 {offsets = [0, 128], sizes = [8, 128], strides = [1, 1]} : vector<8x512xf32> to vector<8x128xf32>
    %208 = arith.negf %207 : vector<8x128xf32>
    %209 = math.exp %208 : vector<8x128xf32>
    %cst_57 = arith.constant 1.000000e+00 : f32
    %210 = vector.broadcast %cst_57 : f32 to vector<8x128xf32>
    %211 = arith.addf %210, %209 : vector<8x128xf32>
    %212 = arith.divf %210, %211 : vector<8x128xf32>
    %213 = vector.extract_strided_slice %200 {offsets = [0, 256], sizes = [8, 128], strides = [1, 1]} : vector<8x512xf32> to vector<8x128xf32>
    %214 = math.tanh %213 : vector<8x128xf32>
    %215 = vector.extract_strided_slice %200 {offsets = [0, 384], sizes = [8, 128], strides = [1, 1]} : vector<8x512xf32> to vector<8x128xf32>
    %216 = arith.negf %215 : vector<8x128xf32>
    %217 = math.exp %216 : vector<8x128xf32>
    %cst_58 = arith.constant 1.000000e+00 : f32
    %218 = vector.broadcast %cst_58 : f32 to vector<8x128xf32>
    %219 = arith.addf %218, %217 : vector<8x128xf32>
    %220 = arith.divf %218, %219 : vector<8x128xf32>
    %221 = arith.mulf %212, %162 : vector<8x128xf32>
    %222 = arith.mulf %206, %214 : vector<8x128xf32>
    %223 = arith.addf %221, %222 : vector<8x128xf32>
    %224 = math.tanh %223 : vector<8x128xf32>
    %225 = arith.mulf %220, %224 : vector<8x128xf32>
    %226 = tpu.concatenate %225, %193 in 1 : vector<8x128xf32>, vector<8x128xf32> -> vector<8x256xf32>
    %c0_59 = arith.constant 0 : index
    %c0_60 = arith.constant 0 : index
    %227 = vector.load %arg4[%c0_59, %c0_60] : memref<256x512xf32, #tpu.memory_space<vmem>>, vector<256x512xf32>
    %cst_61 = arith.constant dense<0.000000e+00> : vector<8x512xf32>
    %228 = tpu.matmul %226, %227, %cst_61 {dimension_numbers = #tpu.dot_dimension_numbers<[1], [0], [0], [1], [0, 0, 1, 1], [], []>} : vector<8x256xf32>, vector<256x512xf32>, vector<8x512xf32> -> vector<8x512xf32>
    %229 = arith.addf %228, %9 : vector<8x512xf32>
    %230 = vector.extract_strided_slice %229 {offsets = [0, 0], sizes = [8, 128], strides = [1, 1]} : vector<8x512xf32> to vector<8x128xf32>
    %231 = arith.negf %230 : vector<8x128xf32>
    %232 = math.exp %231 : vector<8x128xf32>
    %cst_62 = arith.constant 1.000000e+00 : f32
    %233 = vector.broadcast %cst_62 : f32 to vector<8x128xf32>
    %234 = arith.addf %233, %232 : vector<8x128xf32>
    %235 = arith.divf %233, %234 : vector<8x128xf32>
    %236 = vector.extract_strided_slice %229 {offsets = [0, 128], sizes = [8, 128], strides = [1, 1]} : vector<8x512xf32> to vector<8x128xf32>
    %237 = arith.negf %236 : vector<8x128xf32>
    %238 = math.exp %237 : vector<8x128xf32>
    %cst_63 = arith.constant 1.000000e+00 : f32
    %239 = vector.broadcast %cst_63 : f32 to vector<8x128xf32>
    %240 = arith.addf %239, %238 : vector<8x128xf32>
    %241 = arith.divf %239, %240 : vector<8x128xf32>
    %242 = vector.extract_strided_slice %229 {offsets = [0, 256], sizes = [8, 128], strides = [1, 1]} : vector<8x512xf32> to vector<8x128xf32>
    %243 = math.tanh %242 : vector<8x128xf32>
    %244 = vector.extract_strided_slice %229 {offsets = [0, 384], sizes = [8, 128], strides = [1, 1]} : vector<8x512xf32> to vector<8x128xf32>
    %245 = arith.negf %244 : vector<8x128xf32>
    %246 = math.exp %245 : vector<8x128xf32>
    %cst_64 = arith.constant 1.000000e+00 : f32
    %247 = vector.broadcast %cst_64 : f32 to vector<8x128xf32>
    %248 = arith.addf %247, %246 : vector<8x128xf32>
    %249 = arith.divf %247, %248 : vector<8x128xf32>
    %250 = arith.mulf %241, %191 : vector<8x128xf32>
    %251 = arith.mulf %235, %243 : vector<8x128xf32>
    %252 = arith.addf %250, %251 : vector<8x128xf32>
    %253 = math.tanh %252 : vector<8x128xf32>
    %254 = arith.mulf %249, %253 : vector<8x128xf32>
    %c4_i32 = arith.constant 4 : i32
    %c8_i32_65 = arith.constant 8 : i32
    %255 = arith.muli %c4_i32, %c8_i32_65 : i32
    %256 = tpu.assume_multiple %255, 8 : i32
    %257 = arith.index_cast %256 : i32 to index
    %c0_66 = arith.constant 0 : index
    %258 = vector.load %arg9[%257, %c0_66] : memref<64x512xf32, #tpu.memory_space<vmem>>, vector<8x512xf32>
    %c0_67 = arith.constant 0 : index
    %c0_68 = arith.constant 0 : index
    %259 = vector.load %arg2[%c0_67, %c0_68] : memref<128x512xf32, #tpu.memory_space<vmem>>, vector<128x512xf32>
    %cst_69 = arith.constant dense<0.000000e+00> : vector<8x512xf32>
    %260 = tpu.matmul %225, %259, %cst_69 {dimension_numbers = #tpu.dot_dimension_numbers<[1], [0], [0], [1], [0, 0, 1, 1], [], []>} : vector<8x128xf32>, vector<128x512xf32>, vector<8x512xf32> -> vector<8x512xf32>
    %261 = arith.addf %258, %260 : vector<8x512xf32>
    %262 = vector.extract_strided_slice %261 {offsets = [0, 0], sizes = [8, 128], strides = [1, 1]} : vector<8x512xf32> to vector<8x128xf32>
    %263 = arith.negf %262 : vector<8x128xf32>
    %264 = math.exp %263 : vector<8x128xf32>
    %cst_70 = arith.constant 1.000000e+00 : f32
    %265 = vector.broadcast %cst_70 : f32 to vector<8x128xf32>
    %266 = arith.addf %265, %264 : vector<8x128xf32>
    %267 = arith.divf %265, %266 : vector<8x128xf32>
    %268 = vector.extract_strided_slice %261 {offsets = [0, 128], sizes = [8, 128], strides = [1, 1]} : vector<8x512xf32> to vector<8x128xf32>
    %269 = arith.negf %268 : vector<8x128xf32>
    %270 = math.exp %269 : vector<8x128xf32>
    %cst_71 = arith.constant 1.000000e+00 : f32
    %271 = vector.broadcast %cst_71 : f32 to vector<8x128xf32>
    %272 = arith.addf %271, %270 : vector<8x128xf32>
    %273 = arith.divf %271, %272 : vector<8x128xf32>
    %274 = vector.extract_strided_slice %261 {offsets = [0, 256], sizes = [8, 128], strides = [1, 1]} : vector<8x512xf32> to vector<8x128xf32>
    %275 = math.tanh %274 : vector<8x128xf32>
    %276 = vector.extract_strided_slice %261 {offsets = [0, 384], sizes = [8, 128], strides = [1, 1]} : vector<8x512xf32> to vector<8x128xf32>
    %277 = arith.negf %276 : vector<8x128xf32>
    %278 = math.exp %277 : vector<8x128xf32>
    %cst_72 = arith.constant 1.000000e+00 : f32
    %279 = vector.broadcast %cst_72 : f32 to vector<8x128xf32>
    %280 = arith.addf %279, %278 : vector<8x128xf32>
    %281 = arith.divf %279, %280 : vector<8x128xf32>
    %282 = arith.mulf %273, %223 : vector<8x128xf32>
    %283 = arith.mulf %267, %275 : vector<8x128xf32>
    %284 = arith.addf %282, %283 : vector<8x128xf32>
    %285 = math.tanh %284 : vector<8x128xf32>
    %286 = arith.mulf %281, %285 : vector<8x128xf32>
    %287 = tpu.concatenate %286, %254 in 1 : vector<8x128xf32>, vector<8x128xf32> -> vector<8x256xf32>
    %c0_73 = arith.constant 0 : index
    %c0_74 = arith.constant 0 : index
    %288 = vector.load %arg4[%c0_73, %c0_74] : memref<256x512xf32, #tpu.memory_space<vmem>>, vector<256x512xf32>
    %cst_75 = arith.constant dense<0.000000e+00> : vector<8x512xf32>
    %289 = tpu.matmul %287, %288, %cst_75 {dimension_numbers = #tpu.dot_dimension_numbers<[1], [0], [0], [1], [0, 0, 1, 1], [], []>} : vector<8x256xf32>, vector<256x512xf32>, vector<8x512xf32> -> vector<8x512xf32>
    %290 = arith.addf %289, %9 : vector<8x512xf32>
    %291 = vector.extract_strided_slice %290 {offsets = [0, 0], sizes = [8, 128], strides = [1, 1]} : vector<8x512xf32> to vector<8x128xf32>
    %292 = arith.negf %291 : vector<8x128xf32>
    %293 = math.exp %292 : vector<8x128xf32>
    %cst_76 = arith.constant 1.000000e+00 : f32
    %294 = vector.broadcast %cst_76 : f32 to vector<8x128xf32>
    %295 = arith.addf %294, %293 : vector<8x128xf32>
    %296 = arith.divf %294, %295 : vector<8x128xf32>
    %297 = vector.extract_strided_slice %290 {offsets = [0, 128], sizes = [8, 128], strides = [1, 1]} : vector<8x512xf32> to vector<8x128xf32>
    %298 = arith.negf %297 : vector<8x128xf32>
    %299 = math.exp %298 : vector<8x128xf32>
    %cst_77 = arith.constant 1.000000e+00 : f32
    %300 = vector.broadcast %cst_77 : f32 to vector<8x128xf32>
    %301 = arith.addf %300, %299 : vector<8x128xf32>
    %302 = arith.divf %300, %301 : vector<8x128xf32>
    %303 = vector.extract_strided_slice %290 {offsets = [0, 256], sizes = [8, 128], strides = [1, 1]} : vector<8x512xf32> to vector<8x128xf32>
    %304 = math.tanh %303 : vector<8x128xf32>
    %305 = vector.extract_strided_slice %290 {offsets = [0, 384], sizes = [8, 128], strides = [1, 1]} : vector<8x512xf32> to vector<8x128xf32>
    %306 = arith.negf %305 : vector<8x128xf32>
    %307 = math.exp %306 : vector<8x128xf32>
    %cst_78 = arith.constant 1.000000e+00 : f32
    %308 = vector.broadcast %cst_78 : f32 to vector<8x128xf32>
    %309 = arith.addf %308, %307 : vector<8x128xf32>
    %310 = arith.divf %308, %309 : vector<8x128xf32>
    %311 = arith.mulf %302, %252 : vector<8x128xf32>
    %312 = arith.mulf %296, %304 : vector<8x128xf32>
    %313 = arith.addf %311, %312 : vector<8x128xf32>
    %314 = math.tanh %313 : vector<8x128xf32>
    %315 = arith.mulf %310, %314 : vector<8x128xf32>
    %c5_i32 = arith.constant 5 : i32
    %c8_i32_79 = arith.constant 8 : i32
    %316 = arith.muli %c5_i32, %c8_i32_79 : i32
    %317 = tpu.assume_multiple %316, 8 : i32
    %318 = arith.index_cast %317 : i32 to index
    %c0_80 = arith.constant 0 : index
    %319 = vector.load %arg9[%318, %c0_80] : memref<64x512xf32, #tpu.memory_space<vmem>>, vector<8x512xf32>
    %c0_81 = arith.constant 0 : index
    %c0_82 = arith.constant 0 : index
    %320 = vector.load %arg2[%c0_81, %c0_82] : memref<128x512xf32, #tpu.memory_space<vmem>>, vector<128x512xf32>
    %cst_83 = arith.constant dense<0.000000e+00> : vector<8x512xf32>
    %321 = tpu.matmul %286, %320, %cst_83 {dimension_numbers = #tpu.dot_dimension_numbers<[1], [0], [0], [1], [0, 0, 1, 1], [], []>} : vector<8x128xf32>, vector<128x512xf32>, vector<8x512xf32> -> vector<8x512xf32>
    %322 = arith.addf %319, %321 : vector<8x512xf32>
    %323 = vector.extract_strided_slice %322 {offsets = [0, 0], sizes = [8, 128], strides = [1, 1]} : vector<8x512xf32> to vector<8x128xf32>
    %324 = arith.negf %323 : vector<8x128xf32>
    %325 = math.exp %324 : vector<8x128xf32>
    %cst_84 = arith.constant 1.000000e+00 : f32
    %326 = vector.broadcast %cst_84 : f32 to vector<8x128xf32>
    %327 = arith.addf %326, %325 : vector<8x128xf32>
    %328 = arith.divf %326, %327 : vector<8x128xf32>
    %329 = vector.extract_strided_slice %322 {offsets = [0, 128], sizes = [8, 128], strides = [1, 1]} : vector<8x512xf32> to vector<8x128xf32>
    %330 = arith.negf %329 : vector<8x128xf32>
    %331 = math.exp %330 : vector<8x128xf32>
    %cst_85 = arith.constant 1.000000e+00 : f32
    %332 = vector.broadcast %cst_85 : f32 to vector<8x128xf32>
    %333 = arith.addf %332, %331 : vector<8x128xf32>
    %334 = arith.divf %332, %333 : vector<8x128xf32>
    %335 = vector.extract_strided_slice %322 {offsets = [0, 256], sizes = [8, 128], strides = [1, 1]} : vector<8x512xf32> to vector<8x128xf32>
    %336 = math.tanh %335 : vector<8x128xf32>
    %337 = vector.extract_strided_slice %322 {offsets = [0, 384], sizes = [8, 128], strides = [1, 1]} : vector<8x512xf32> to vector<8x128xf32>
    %338 = arith.negf %337 : vector<8x128xf32>
    %339 = math.exp %338 : vector<8x128xf32>
    %cst_86 = arith.constant 1.000000e+00 : f32
    %340 = vector.broadcast %cst_86 : f32 to vector<8x128xf32>
    %341 = arith.addf %340, %339 : vector<8x128xf32>
    %342 = arith.divf %340, %341 : vector<8x128xf32>
    %343 = arith.mulf %334, %284 : vector<8x128xf32>
    %344 = arith.mulf %328, %336 : vector<8x128xf32>
    %345 = arith.addf %343, %344 : vector<8x128xf32>
    %346 = math.tanh %345 : vector<8x128xf32>
    %347 = arith.mulf %342, %346 : vector<8x128xf32>
    %348 = tpu.concatenate %347, %315 in 1 : vector<8x128xf32>, vector<8x128xf32> -> vector<8x256xf32>
    %c0_87 = arith.constant 0 : index
    %c0_88 = arith.constant 0 : index
    %349 = vector.load %arg4[%c0_87, %c0_88] : memref<256x512xf32, #tpu.memory_space<vmem>>, vector<256x512xf32>
    %cst_89 = arith.constant dense<0.000000e+00> : vector<8x512xf32>
    %350 = tpu.matmul %348, %349, %cst_89 {dimension_numbers = #tpu.dot_dimension_numbers<[1], [0], [0], [1], [0, 0, 1, 1], [], []>} : vector<8x256xf32>, vector<256x512xf32>, vector<8x512xf32> -> vector<8x512xf32>
    %351 = arith.addf %350, %9 : vector<8x512xf32>
    %352 = vector.extract_strided_slice %351 {offsets = [0, 0], sizes = [8, 128], strides = [1, 1]} : vector<8x512xf32> to vector<8x128xf32>
    %353 = arith.negf %352 : vector<8x128xf32>
    %354 = math.exp %353 : vector<8x128xf32>
    %cst_90 = arith.constant 1.000000e+00 : f32
    %355 = vector.broadcast %cst_90 : f32 to vector<8x128xf32>
    %356 = arith.addf %355, %354 : vector<8x128xf32>
    %357 = arith.divf %355, %356 : vector<8x128xf32>
    %358 = vector.extract_strided_slice %351 {offsets = [0, 128], sizes = [8, 128], strides = [1, 1]} : vector<8x512xf32> to vector<8x128xf32>
    %359 = arith.negf %358 : vector<8x128xf32>
    %360 = math.exp %359 : vector<8x128xf32>
    %cst_91 = arith.constant 1.000000e+00 : f32
    %361 = vector.broadcast %cst_91 : f32 to vector<8x128xf32>
    %362 = arith.addf %361, %360 : vector<8x128xf32>
    %363 = arith.divf %361, %362 : vector<8x128xf32>
    %364 = vector.extract_strided_slice %351 {offsets = [0, 256], sizes = [8, 128], strides = [1, 1]} : vector<8x512xf32> to vector<8x128xf32>
    %365 = math.tanh %364 : vector<8x128xf32>
    %366 = vector.extract_strided_slice %351 {offsets = [0, 384], sizes = [8, 128], strides = [1, 1]} : vector<8x512xf32> to vector<8x128xf32>
    %367 = arith.negf %366 : vector<8x128xf32>
    %368 = math.exp %367 : vector<8x128xf32>
    %cst_92 = arith.constant 1.000000e+00 : f32
    %369 = vector.broadcast %cst_92 : f32 to vector<8x128xf32>
    %370 = arith.addf %369, %368 : vector<8x128xf32>
    %371 = arith.divf %369, %370 : vector<8x128xf32>
    %372 = arith.mulf %363, %313 : vector<8x128xf32>
    %373 = arith.mulf %357, %365 : vector<8x128xf32>
    %374 = arith.addf %372, %373 : vector<8x128xf32>
    %375 = math.tanh %374 : vector<8x128xf32>
    %376 = arith.mulf %371, %375 : vector<8x128xf32>
    %c6_i32 = arith.constant 6 : i32
    %c8_i32_93 = arith.constant 8 : i32
    %377 = arith.muli %c6_i32, %c8_i32_93 : i32
    %378 = tpu.assume_multiple %377, 8 : i32
    %379 = arith.index_cast %378 : i32 to index
    %c0_94 = arith.constant 0 : index
    %380 = vector.load %arg9[%379, %c0_94] : memref<64x512xf32, #tpu.memory_space<vmem>>, vector<8x512xf32>
    %c0_95 = arith.constant 0 : index
    %c0_96 = arith.constant 0 : index
    %381 = vector.load %arg2[%c0_95, %c0_96] : memref<128x512xf32, #tpu.memory_space<vmem>>, vector<128x512xf32>
    %cst_97 = arith.constant dense<0.000000e+00> : vector<8x512xf32>
    %382 = tpu.matmul %347, %381, %cst_97 {dimension_numbers = #tpu.dot_dimension_numbers<[1], [0], [0], [1], [0, 0, 1, 1], [], []>} : vector<8x128xf32>, vector<128x512xf32>, vector<8x512xf32> -> vector<8x512xf32>
    %383 = arith.addf %380, %382 : vector<8x512xf32>
    %384 = vector.extract_strided_slice %383 {offsets = [0, 0], sizes = [8, 128], strides = [1, 1]} : vector<8x512xf32> to vector<8x128xf32>
    %385 = arith.negf %384 : vector<8x128xf32>
    %386 = math.exp %385 : vector<8x128xf32>
    %cst_98 = arith.constant 1.000000e+00 : f32
    %387 = vector.broadcast %cst_98 : f32 to vector<8x128xf32>
    %388 = arith.addf %387, %386 : vector<8x128xf32>
    %389 = arith.divf %387, %388 : vector<8x128xf32>
    %390 = vector.extract_strided_slice %383 {offsets = [0, 128], sizes = [8, 128], strides = [1, 1]} : vector<8x512xf32> to vector<8x128xf32>
    %391 = arith.negf %390 : vector<8x128xf32>
    %392 = math.exp %391 : vector<8x128xf32>
    %cst_99 = arith.constant 1.000000e+00 : f32
    %393 = vector.broadcast %cst_99 : f32 to vector<8x128xf32>
    %394 = arith.addf %393, %392 : vector<8x128xf32>
    %395 = arith.divf %393, %394 : vector<8x128xf32>
    %396 = vector.extract_strided_slice %383 {offsets = [0, 256], sizes = [8, 128], strides = [1, 1]} : vector<8x512xf32> to vector<8x128xf32>
    %397 = math.tanh %396 : vector<8x128xf32>
    %398 = vector.extract_strided_slice %383 {offsets = [0, 384], sizes = [8, 128], strides = [1, 1]} : vector<8x512xf32> to vector<8x128xf32>
    %399 = arith.negf %398 : vector<8x128xf32>
    %400 = math.exp %399 : vector<8x128xf32>
    %cst_100 = arith.constant 1.000000e+00 : f32
    %401 = vector.broadcast %cst_100 : f32 to vector<8x128xf32>
    %402 = arith.addf %401, %400 : vector<8x128xf32>
    %403 = arith.divf %401, %402 : vector<8x128xf32>
    %404 = arith.mulf %395, %345 : vector<8x128xf32>
    %405 = arith.mulf %389, %397 : vector<8x128xf32>
    %406 = arith.addf %404, %405 : vector<8x128xf32>
    %407 = math.tanh %406 : vector<8x128xf32>
    %408 = arith.mulf %403, %407 : vector<8x128xf32>
    %409 = tpu.concatenate %408, %376 in 1 : vector<8x128xf32>, vector<8x128xf32> -> vector<8x256xf32>
    %c0_101 = arith.constant 0 : index
    %c0_102 = arith.constant 0 : index
    %410 = vector.load %arg4[%c0_101, %c0_102] : memref<256x512xf32, #tpu.memory_space<vmem>>, vector<256x512xf32>
    %cst_103 = arith.constant dense<0.000000e+00> : vector<8x512xf32>
    %411 = tpu.matmul %409, %410, %cst_103 {dimension_numbers = #tpu.dot_dimension_numbers<[1], [0], [0], [1], [0, 0, 1, 1], [], []>} : vector<8x256xf32>, vector<256x512xf32>, vector<8x512xf32> -> vector<8x512xf32>
    %412 = arith.addf %411, %9 : vector<8x512xf32>
    %413 = vector.extract_strided_slice %412 {offsets = [0, 0], sizes = [8, 128], strides = [1, 1]} : vector<8x512xf32> to vector<8x128xf32>
    %414 = arith.negf %413 : vector<8x128xf32>
    %415 = math.exp %414 : vector<8x128xf32>
    %cst_104 = arith.constant 1.000000e+00 : f32
    %416 = vector.broadcast %cst_104 : f32 to vector<8x128xf32>
    %417 = arith.addf %416, %415 : vector<8x128xf32>
    %418 = arith.divf %416, %417 : vector<8x128xf32>
    %419 = vector.extract_strided_slice %412 {offsets = [0, 128], sizes = [8, 128], strides = [1, 1]} : vector<8x512xf32> to vector<8x128xf32>
    %420 = arith.negf %419 : vector<8x128xf32>
    %421 = math.exp %420 : vector<8x128xf32>
    %cst_105 = arith.constant 1.000000e+00 : f32
    %422 = vector.broadcast %cst_105 : f32 to vector<8x128xf32>
    %423 = arith.addf %422, %421 : vector<8x128xf32>
    %424 = arith.divf %422, %423 : vector<8x128xf32>
    %425 = vector.extract_strided_slice %412 {offsets = [0, 256], sizes = [8, 128], strides = [1, 1]} : vector<8x512xf32> to vector<8x128xf32>
    %426 = math.tanh %425 : vector<8x128xf32>
    %427 = vector.extract_strided_slice %412 {offsets = [0, 384], sizes = [8, 128], strides = [1, 1]} : vector<8x512xf32> to vector<8x128xf32>
    %428 = arith.negf %427 : vector<8x128xf32>
    %429 = math.exp %428 : vector<8x128xf32>
    %cst_106 = arith.constant 1.000000e+00 : f32
    %430 = vector.broadcast %cst_106 : f32 to vector<8x128xf32>
    %431 = arith.addf %430, %429 : vector<8x128xf32>
    %432 = arith.divf %430, %431 : vector<8x128xf32>
    %433 = arith.mulf %424, %374 : vector<8x128xf32>
    %434 = arith.mulf %418, %426 : vector<8x128xf32>
    %435 = arith.addf %433, %434 : vector<8x128xf32>
    %436 = math.tanh %435 : vector<8x128xf32>
    %437 = arith.mulf %432, %436 : vector<8x128xf32>
    %c7_i32 = arith.constant 7 : i32
    %c8_i32_107 = arith.constant 8 : i32
    %438 = arith.muli %c7_i32, %c8_i32_107 : i32
    %439 = tpu.assume_multiple %438, 8 : i32
    %440 = arith.index_cast %439 : i32 to index
    %c0_108 = arith.constant 0 : index
    %441 = vector.load %arg9[%440, %c0_108] : memref<64x512xf32, #tpu.memory_space<vmem>>, vector<8x512xf32>
    %c0_109 = arith.constant 0 : index
    %c0_110 = arith.constant 0 : index
    %442 = vector.load %arg2[%c0_109, %c0_110] : memref<128x512xf32, #tpu.memory_space<vmem>>, vector<128x512xf32>
    %cst_111 = arith.constant dense<0.000000e+00> : vector<8x512xf32>
    %443 = tpu.matmul %408, %442, %cst_111 {dimension_numbers = #tpu.dot_dimension_numbers<[1], [0], [0], [1], [0, 0, 1, 1], [], []>} : vector<8x128xf32>, vector<128x512xf32>, vector<8x512xf32> -> vector<8x512xf32>
    %444 = arith.addf %441, %443 : vector<8x512xf32>
    %445 = vector.extract_strided_slice %444 {offsets = [0, 0], sizes = [8, 128], strides = [1, 1]} : vector<8x512xf32> to vector<8x128xf32>
    %446 = arith.negf %445 : vector<8x128xf32>
    %447 = math.exp %446 : vector<8x128xf32>
    %cst_112 = arith.constant 1.000000e+00 : f32
    %448 = vector.broadcast %cst_112 : f32 to vector<8x128xf32>
    %449 = arith.addf %448, %447 : vector<8x128xf32>
    %450 = arith.divf %448, %449 : vector<8x128xf32>
    %451 = vector.extract_strided_slice %444 {offsets = [0, 128], sizes = [8, 128], strides = [1, 1]} : vector<8x512xf32> to vector<8x128xf32>
    %452 = arith.negf %451 : vector<8x128xf32>
    %453 = math.exp %452 : vector<8x128xf32>
    %cst_113 = arith.constant 1.000000e+00 : f32
    %454 = vector.broadcast %cst_113 : f32 to vector<8x128xf32>
    %455 = arith.addf %454, %453 : vector<8x128xf32>
    %456 = arith.divf %454, %455 : vector<8x128xf32>
    %457 = vector.extract_strided_slice %444 {offsets = [0, 256], sizes = [8, 128], strides = [1, 1]} : vector<8x512xf32> to vector<8x128xf32>
    %458 = math.tanh %457 : vector<8x128xf32>
    %459 = vector.extract_strided_slice %444 {offsets = [0, 384], sizes = [8, 128], strides = [1, 1]} : vector<8x512xf32> to vector<8x128xf32>
    %460 = arith.negf %459 : vector<8x128xf32>
    %461 = math.exp %460 : vector<8x128xf32>
    %cst_114 = arith.constant 1.000000e+00 : f32
    %462 = vector.broadcast %cst_114 : f32 to vector<8x128xf32>
    %463 = arith.addf %462, %461 : vector<8x128xf32>
    %464 = arith.divf %462, %463 : vector<8x128xf32>
    %465 = arith.mulf %456, %406 : vector<8x128xf32>
    %466 = arith.mulf %450, %458 : vector<8x128xf32>
    %467 = arith.addf %465, %466 : vector<8x128xf32>
    %468 = math.tanh %467 : vector<8x128xf32>
    %469 = arith.mulf %464, %468 : vector<8x128xf32>
    %470 = tpu.concatenate %469, %437 in 1 : vector<8x128xf32>, vector<8x128xf32> -> vector<8x256xf32>
    %c0_115 = arith.constant 0 : index
    %c0_116 = arith.constant 0 : index
    %471 = vector.load %arg4[%c0_115, %c0_116] : memref<256x512xf32, #tpu.memory_space<vmem>>, vector<256x512xf32>
    %cst_117 = arith.constant dense<0.000000e+00> : vector<8x512xf32>
    %472 = tpu.matmul %470, %471, %cst_117 {dimension_numbers = #tpu.dot_dimension_numbers<[1], [0], [0], [1], [0, 0, 1, 1], [], []>} : vector<8x256xf32>, vector<256x512xf32>, vector<8x512xf32> -> vector<8x512xf32>
    %473 = arith.addf %472, %9 : vector<8x512xf32>
    %474 = vector.extract_strided_slice %473 {offsets = [0, 0], sizes = [8, 128], strides = [1, 1]} : vector<8x512xf32> to vector<8x128xf32>
    %475 = arith.negf %474 : vector<8x128xf32>
    %476 = math.exp %475 : vector<8x128xf32>
    %cst_118 = arith.constant 1.000000e+00 : f32
    %477 = vector.broadcast %cst_118 : f32 to vector<8x128xf32>
    %478 = arith.addf %477, %476 : vector<8x128xf32>
    %479 = arith.divf %477, %478 : vector<8x128xf32>
    %480 = vector.extract_strided_slice %473 {offsets = [0, 128], sizes = [8, 128], strides = [1, 1]} : vector<8x512xf32> to vector<8x128xf32>
    %481 = arith.negf %480 : vector<8x128xf32>
    %482 = math.exp %481 : vector<8x128xf32>
    %cst_119 = arith.constant 1.000000e+00 : f32
    %483 = vector.broadcast %cst_119 : f32 to vector<8x128xf32>
    %484 = arith.addf %483, %482 : vector<8x128xf32>
    %485 = arith.divf %483, %484 : vector<8x128xf32>
    %486 = vector.extract_strided_slice %473 {offsets = [0, 256], sizes = [8, 128], strides = [1, 1]} : vector<8x512xf32> to vector<8x128xf32>
    %487 = math.tanh %486 : vector<8x128xf32>
    %488 = vector.extract_strided_slice %473 {offsets = [0, 384], sizes = [8, 128], strides = [1, 1]} : vector<8x512xf32> to vector<8x128xf32>
    %489 = arith.negf %488 : vector<8x128xf32>
    %490 = math.exp %489 : vector<8x128xf32>
    %cst_120 = arith.constant 1.000000e+00 : f32
    %491 = vector.broadcast %cst_120 : f32 to vector<8x128xf32>
    %492 = arith.addf %491, %490 : vector<8x128xf32>
    %493 = arith.divf %491, %492 : vector<8x128xf32>
    %494 = arith.mulf %485, %435 : vector<8x128xf32>
    %495 = arith.mulf %479, %487 : vector<8x128xf32>
    %496 = arith.addf %494, %495 : vector<8x128xf32>
    %497 = math.tanh %496 : vector<8x128xf32>
    %498 = arith.mulf %493, %497 : vector<8x128xf32>
    %c8_i32_121 = arith.constant 8 : i32
    %c0_122 = arith.constant 0 : index
    %c0_123 = arith.constant 0 : index
    %499 = vector.load %arg6[%c0_122, %c0_123] : memref<1x128xf32, #tpu.memory_space<vmem>>, vector<1x128xf32>
    %500 = vector.broadcast %499 : vector<1x128xf32> to vector<8x128xf32>
    %501 = arith.mulf %498, %500 : vector<8x128xf32>
    %cst_124 = arith.constant dense<0.000000e+00> : vector<8xf32>
    %502 = vector.multi_reduction <add>, %501, %cst_124 [1] : vector<8x128xf32> to vector<8xf32>
    %503 = vector.shape_cast %502 : vector<8xf32> to vector<8x1xf32>
    %c0_125 = arith.constant 0 : index
    %c0_126 = arith.constant 0 : index
    %504 = vector.load %arg7[%c0_125, %c0_126] : memref<1x1xf32, #tpu.memory_space<vmem>>, vector<1x1xf32>
    %505 = vector.broadcast %504 : vector<1x1xf32> to vector<8x1xf32>
    %506 = arith.addf %503, %505 : vector<8x1xf32>
    %c0_127 = arith.constant 0 : index
    %c0_128 = arith.constant 0 : index
    %507 = vector.load %arg8[%c0_127, %c0_128] : memref<8x1xf32, #tpu.memory_space<vmem>>, vector<8x1xf32>
    tpu.vector_store %arg8[%c0_127, %c0_128], %506 {strides = array<i32>} : memref<8x1xf32, #tpu.memory_space<vmem>>, vector<8x1xf32>,
    return
  }
}

</mosaic_0001>

<llo_original>
// kernel: tpu_custom_call.1
$region0: #{tpu_custom_call.1}
  #allocation0 [shape = 'u32[]', space=smem, size = 0x4, offset = 0x4, fixed_abs, tag = 'smem constant byte address 0x4 - core index']
  #allocation1 [shape = 'u32[144,128]{1,0:T(1,128)}', space=vmem, size = 0x12000, scoped, tag = 'internal scratch']
  #allocation2 [shape = 'f32[64,512]{1,0:T(8,128)}', space=vmem, size = 0x20000, scoped, tag = 'scratch operand']
  #allocation3 [shape = 'f32[1,1]{1,0:T(1,128)S(1)}', space=vmem, size = 0x200, scoped, tag = 'scoped memory for tpu_custom_call.1']
  %s0 = inlined_call_operand.vmem [shape: f32[64,32], index: 0, kind: input, shape index: {}]
  %s1 = inlined_call_operand.hbm [shape: f32[32,512], index: 1, kind: input, shape index: {}]
  %s2 = inlined_call_operand.hbm [shape: f32[128,512], index: 2, kind: input, shape index: {}]
  %s3 = inlined_call_operand.vmem [shape: f32[1,512], index: 3, kind: input, shape index: {}]
  %s4 = inlined_call_operand.hbm [shape: f32[256,512], index: 4, kind: input, shape index: {}]
  %s5 = inlined_call_operand.vmem [shape: f32[1,512], index: 5, kind: input, shape index: {}]
  %s6 = inlined_call_operand.vmem [shape: f32[1,128], index: 6, kind: input, shape index: {}]
  %s7 = inlined_call_operand.<no memory space> [shape: f32[1,1], index: 7, kind: input, shape index: {}]
  %s8 = inlined_call_operand.vmem [shape: f32[8,1], index: 8, kind: output, shape index: {}]
  %s9 = sld [smem:[#allocation0]]
  $region54: #{tpu_custom_call.1} parent=0
    _
  %s11 = ssub.s32 1, %s9
  %s12 = scalar_select 0, %s11, %s9
  %v13 = vstv %s7
  %14 = vst [vmem:[#allocation3] sm:$0x1] %v13
  $region1: #{tpu_custom_call.1} parent=0
    #allocation4 [shape = 'u8[65536]{0}', space=vmem, size = 0x10000, scoped, tag = 'input window, operand 1, single buffered']
    #allocation5 [shape = 's32[1]{0}', space=sflag, size = 0x4, scoped, tag = 'scoped memory for tpu_custom_call.1']
    #allocation6 [shape = 'u8[262144]{0}', space=vmem, size = 0x40000, scoped, tag = 'input window, operand 2, single buffered']
    #allocation7 [shape = 's32[1]{0}', space=sflag, size = 0x4, scoped, tag = 'scoped memory for tpu_custom_call.1']
    #allocation8 [shape = 'u8[524288]{0}', space=vmem, size = 0x80000, scoped, tag = 'input window, operand 4, single buffered']
    %15 = vsyncpa [#allocation5], 0
    %16 = vsyncpa [#allocation7], 0
    // Predicated region
    $region2: #{tpu_custom_call.1} parent=1 // pred_check
      _
    $region3: #{tpu_custom_call.1} parent=1 // pred_check_branch
      %18 = sbr.rel (0) target = $region5
    $region4: #{tpu_custom_call.1} parent=1 // pred_region
      _
    $region5: #{tpu_custom_call.1} parent=1 // pred_fallthru
      _
    // Predicated region
    $region6: #{tpu_custom_call.1} parent=1 // pred_check
      _
    $region7: #{tpu_custom_call.1} parent=1 // pred_check_branch
      %20 = sbr.rel (0) target = $region9
    $region8: #{tpu_custom_call.1} parent=1 // pred_region
      %s22 = ssub.s32 2048, 2048
      %23 = vsyncadd [#allocation5], %s22
      %s24 = sshll.u32 [#allocation4], 4
      %s25 = int_to_ptr.vmem [resolvable:$true] %s24
      %30 = dma.hbm_to_vmem [thread:$0]  %s1, 2048, %s25, [#allocation5], 512, 512, 32
    $region9: #{tpu_custom_call.1} parent=1 // pred_fallthru
      _
    // Predicated region
    $region10: #{tpu_custom_call.1} parent=1 // pred_check
      _
    $region11: #{tpu_custom_call.1} parent=1 // pred_check_branch
      %32 = sbr.rel (0) target = $region13
    $region12: #{tpu_custom_call.1} parent=1 // pred_region
      %s34 = ssub.s32 8192, 8192
      %35 = vsyncadd [#allocation7], %s34
      %s36 = sshll.u32 [#allocation6], 4
      %s37 = int_to_ptr.vmem [resolvable:$true] %s36
      %42 = dma.hbm_to_vmem [thread:$0]  %s2, 8192, %s37, [#allocation7], 512, 512, 32
    $region13: #{tpu_custom_call.1} parent=1 // pred_fallthru
      _
    // Predicated region
    $region14: #{tpu_custom_call.1} parent=1 // pred_check
      _
    $region15: #{tpu_custom_call.1} parent=1 // pred_check_branch
      %44 = sbr.rel (0) target = $region17
    $region16: #{tpu_custom_call.1} parent=1 // pred_region
      _
    $region17: #{tpu_custom_call.1} parent=1 // pred_fallthru
      _
    // Predicated region
    $region18: #{tpu_custom_call.1} parent=1 // pred_check
      _
    $region19: #{tpu_custom_call.1} parent=1 // pred_check_branch
      %46 = sbr.rel (0) target = $region21
    $region20: #{tpu_custom_call.1} parent=1 // pred_region
      %s48 = ssub.s32 16384, 16384
      %49 = vsyncadd [#allocation7], %s48
      %s50 = sshll.u32 [#allocation8], 4
      %s51 = int_to_ptr.vmem [resolvable:$true] %s50
      %56 = dma.hbm_to_vmem [thread:$0]  %s4, 16384, %s51, [#allocation7], 512, 512, 32
    $region21: #{tpu_custom_call.1} parent=1 // pred_fallthru
      _
    // Predicated region
    $region22: #{tpu_custom_call.1} parent=1 // pred_check
      _
    $region23: #{tpu_custom_call.1} parent=1 // pred_check_branch
      %58 = sbr.rel (0) target = $region25
    $region24: #{tpu_custom_call.1} parent=1 // pred_region
      _
    $region25: #{tpu_custom_call.1} parent=1 // pred_fallthru
      _
    // Predicated region
    $region26: #{tpu_custom_call.1} parent=1 // pred_check
      _
    $region27: #{tpu_custom_call.1} parent=1 // pred_check_branch
      %60 = sbr.rel (0) target = $region29
    $region28: #{tpu_custom_call.1} parent=1 // pred_region
      _
    $region29: #{tpu_custom_call.1} parent=1 // pred_fallthru
      _
    // Predicated region
    $region30: #{tpu_custom_call.1} parent=1 // pred_check
      _
    $region31: #{tpu_custom_call.1} parent=1 // pred_check_branch
      %62 = sbr.rel (0) target = $region33
    $region32: #{tpu_custom_call.1} parent=1 // pred_region
      _
    $region33: #{tpu_custom_call.1} parent=1 // pred_fallthru
      _
    // Predicated region
    $region34: #{tpu_custom_call.1} parent=1 // pred_check
      _
    $region35: #{tpu_custom_call.1} parent=1 // pred_check_branch
      %64 = sbr.rel (0) target = $region37
    $region36: #{tpu_custom_call.1} parent=1 // pred_region
      %65 = dma.done [#allocation5], 2048
    $region37: #{tpu_custom_call.1} parent=1 // pred_fallthru
      _
    // Predicated region
    $region38: #{tpu_custom_call.1} parent=1 // pred_check
      _
    $region39: #{tpu_custom_call.1} parent=1 // pred_check_branch
      %67 = sbr.rel (0) target = $region41
    $region40: #{tpu_custom_call.1} parent=1 // pred_region
      %68 = dma.done [#allocation7], 8192
    $region41: #{tpu_custom_call.1} parent=1 // pred_fallthru
      _
    // Predicated region
    $region42: #{tpu_custom_call.1} parent=1 // pred_check
      _
    $region43: #{tpu_custom_call.1} parent=1 // pred_check_branch
      %70 = sbr.rel (0) target = $region45
    $region44: #{tpu_custom_call.1} parent=1 // pred_region
      %71 = dma.done [#allocation7], 16384
    $region45: #{tpu_custom_call.1} parent=1 // pred_fallthru
      _
    %v72 = vld [vmem:[%s0] sm:$0xff]
    %v73 = vld [vmem:[%s0 + $0x8] sm:$0xff]
    %v74 = vld [vmem:[%s0 + $0x10] sm:$0xff]
    %v75 = vld [vmem:[%s0 + $0x18] sm:$0xff]
    %v76 = vld [vmem:[%s0 + $0x20] sm:$0xff]
    %v77 = vld [vmem:[%s0 + $0x28] sm:$0xff]
    %v78 = vld [vmem:[%s0 + $0x30] sm:$0xff]
    %v79 = vld [vmem:[%s0 + $0x38] sm:$0xff]
    %v80 = vld [vmem:[#allocation4] sm:$0xff]
    %v81 = vld [vmem:[#allocation4 + $0x8] sm:$0xff]
    %v82 = vld [vmem:[#allocation4 + $0x10] sm:$0xff]
    %v83 = vld [vmem:[#allocation4 + $0x18] sm:$0xff]
    %v84 = vld [vmem:[#allocation4 + $0x20] sm:$0xff]
    %v85 = vld [vmem:[#allocation4 + $0x28] sm:$0xff]
    %v86 = vld [vmem:[#allocation4 + $0x30] sm:$0xff]
    %v87 = vld [vmem:[#allocation4 + $0x38] sm:$0xff]
    %v88 = vld [vmem:[#allocation4 + $0x40] sm:$0xff]
    %v89 = vld [vmem:[#allocation4 + $0x48] sm:$0xff]
    %v90 = vld [vmem:[#allocation4 + $0x50] sm:$0xff]
    %v91 = vld [vmem:[#allocation4 + $0x58] sm:$0xff]
    %v92 = vld [vmem:[#allocation4 + $0x60] sm:$0xff]
    %v93 = vld [vmem:[#allocation4 + $0x68] sm:$0xff]
    %v94 = vld [vmem:[#allocation4 + $0x70] sm:$0xff]
    %v95 = vld [vmem:[#allocation4 + $0x78] sm:$0xff]
    %v96 = vld [vmem:[%s3] sm:$0xf]
    %v98 = vlaneseq
    %v99 = vshrl.u32 %v98, 7
    %v100 = vsub.s32 0, %v99
    %v101 = vrot.slane %v96, %v100
    %v102 = vlaneseq
    %v103 = vshrl.u32 %v102, 7
    %v104 = vsub.s32 1, %v103
    %v105 = vrot.slane %v96, %v104
    %v106 = vlaneseq
    %v107 = vshrl.u32 %v106, 7
    %v108 = vsub.s32 2, %v107
    %v109 = vrot.slane %v96, %v108
    %v110 = vlaneseq
    %v111 = vshrl.u32 %v110, 7
    %v112 = vsub.s32 3, %v111
    %v113 = vrot.slane %v96, %v112
    %vm118 = vcmask 261120
    %v120 = vsel %vm118, %v72, 0
    %v123 = vsel %vm118, %v73, 0
    %v126 = vsel %vm118, %v74, 0
    %v129 = vsel %vm118, %v75, 0
    %v132 = vsel %vm118, %v76, 0
    %v135 = vsel %vm118, %v77, 0
    %v138 = vsel %vm118, %v78, 0
    %v141 = vsel %vm118, %v79, 0
    %143 = vmatprep.subr.mxu0 0.0
    %144 = vmatpush1.msra.mxu0 0.0
    %145 = vmatprep.subr.mxu0 0.0
    %146 = vmatpush1.msra.mxu0 0.0
    %147 = vmatprep.subr.mxu0 0.0
    %148 = vmatpush1.msra.mxu0 0.0
    %149 = vmatprep.subr.mxu0 0.0
    %150 = vmatpush1.msra.mxu0 0.0
    %151 = vmatprep.subr.mxu0 0.0
    %152 = vmatpush1.msra.mxu0 0.0
    %153 = vmatprep.subr.mxu0 0.0
    %154 = vmatpush1.msra.mxu0 0.0
    %155 = vmatprep.subr.mxu0 0.0
    %156 = vmatpush1.msra.mxu0 0.0
    %157 = vmatprep.subr.mxu0 0.0
    %158 = vmatpush1.msra.mxu0 0.0
    %159 = vmatprep.subr.mxu0 0.0
    %160 = vmatpush1.msra.mxu0 0.0
    %161 = vmatprep.subr.mxu0 0.0
    %162 = vmatpush1.msra.mxu0 0.0
    %163 = vmatprep.subr.mxu0 0.0
    %164 = vmatpush1.msra.mxu0 0.0
    %165 = vmatprep.subr.mxu0 0.0
    %166 = vmatpush1.msra.mxu0 0.0
    %167 = vmatprep.subr.mxu0 %v93
    %168 = vmatpush1.msra.mxu0 %v92
    %169 = vmatprep.subr.mxu0 %v89
    %170 = vmatpush1.msra.mxu0 %v88
    %171 = vmatprep.subr.mxu0 %v85
    %172 = vmatpush1.msra.mxu0 %v84
    %173 = vmatprep.subr.mxu0 %v81
    %174 = vmatpush1.msra.mxu0 %v80
    %175 = vmatprep.subr.mxu0 0.0
    %176 = vmatpush2.msra.mxu0 0.0
    %177 = vmatprep.subr.mxu0 0.0
    %178 = vmatpush2.msra.mxu0 0.0
    %179 = vmatprep.subr.mxu0 0.0
    %180 = vmatpush2.msra.mxu0 0.0
    %181 = vmatprep.subr.mxu0 0.0
    %182 = vmatpush2.msra.mxu0 0.0
    %183 = vmatprep.subr.mxu0 0.0
    %184 = vmatpush2.msra.mxu0 0.0
    %185 = vmatprep.subr.mxu0 0.0
    %186 = vmatpush2.msra.mxu0 0.0
    %187 = vmatprep.subr.mxu0 0.0
    %188 = vmatpush2.msra.mxu0 0.0
    %189 = vmatprep.subr.mxu0 0.0
    %190 = vmatpush2.msra.mxu0 0.0
    %191 = vmatprep.subr.mxu0 0.0
    %192 = vmatpush2.msra.mxu0 0.0
    %193 = vmatprep.subr.mxu0 0.0
    %194 = vmatpush2.msra.mxu0 0.0
    %195 = vmatprep.subr.mxu0 0.0
    %196 = vmatpush2.msra.mxu0 0.0
    %197 = vmatprep.subr.mxu0 0.0
    %198 = vmatpush2.msra.mxu0 0.0
    %199 = vmatprep.subr.mxu0 0.0
    %200 = vmatpush2.msra.mxu0 0.0
    %201 = vmatprep.subr.mxu0 0.0
    %202 = vmatpush2.msra.mxu0 0.0
    %203 = vmatprep.subr.mxu0 0.0
    %204 = vmatpush2.msra.mxu0 0.0
    %205 = vmatprep.subr.mxu0 0.0
    %206 = vmatpush2.msra.mxu0 0.0
    %207 = vmatprep.mubr.f32.mxu0 0.0
    %208 = vmatmul.mubr.f32.gmra.mxu0 %v120
    %v209 = vpop.f32.mrf.mxu0
    %v210 = vadd.f32 %v101, %v209
    %v211 = vpop.f32.mrf.mxu0
    %v212 = vadd.f32 %v105, %v211
    %213 = vmatprep.mubr.f32.mxu0 0.0
    %214 = vmatmul.mubr.f32.gmra.mxu0 %v123
    %v215 = vpop.f32.mrf.mxu0
    %v216 = vadd.f32 %v101, %v215
    %v217 = vpop.f32.mrf.mxu0
    %v218 = vadd.f32 %v105, %v217
    %219 = vmatprep.mubr.f32.mxu0 0.0
    %220 = vmatmul.mubr.f32.gmra.mxu0 %v126
    %v221 = vpop.f32.mrf.mxu0
    %v222 = vadd.f32 %v101, %v221
    %v223 = vpop.f32.mrf.mxu0
    %v224 = vadd.f32 %v105, %v223
    %225 = vmatprep.mubr.f32.mxu0 0.0
    %226 = vmatmul.mubr.f32.gmra.mxu0 %v129
    %v227 = vpop.f32.mrf.mxu0
    %v228 = vadd.f32 %v101, %v227
    %v229 = vpop.f32.mrf.mxu0
    %v230 = vadd.f32 %v105, %v229
    %231 = vmatprep.mubr.f32.mxu0 0.0
    %232 = vmatmul.mubr.f32.gmra.mxu0 %v132
    %v233 = vpop.f32.mrf.mxu0
    %v234 = vadd.f32 %v101, %v233
    %v235 = vpop.f32.mrf.mxu0
    %v236 = vadd.f32 %v105, %v235
    %237 = vmatprep.mubr.f32.mxu0 0.0
    %238 = vmatmul.mubr.f32.gmra.mxu0 %v135
    %v239 = vpop.f32.mrf.mxu0
    %v240 = vadd.f32 %v101, %v239
    %v241 = vpop.f32.mrf.mxu0
    %v242 = vadd.f32 %v105, %v241
    %243 = vmatprep.mubr.f32.mxu0 0.0
    %244 = vmatmul.mubr.f32.gmra.mxu0 %v138
    %v245 = vpop.f32.mrf.mxu0
    %v246 = vadd.f32 %v101, %v245
    %v247 = vpop.f32.mrf.mxu0
    %v248 = vadd.f32 %v105, %v247
    %249 = vmatprep.mubr.f32.mxu0 0.0
    %250 = vmatmul.mubr.f32.gmra.mxu0 %v141
    %v251 = vpop.f32.mrf.mxu0
    %v252 = vadd.f32 %v101, %v251
    %v253 = vpop.f32.mrf.mxu0
    %v254 = vadd.f32 %v105, %v253
    %255 = vdwg.mxu0
    %256 = vmatprep.subr.mxu0 0.0
    %257 = vmatpush1.msra.mxu0 0.0
    %258 = vmatprep.subr.mxu0 0.0
    %259 = vmatpush1.msra.mxu0 0.0
    %260 = vmatprep.subr.mxu0 0.0
    %261 = vmatpush1.msra.mxu0 0.0
    %262 = vmatprep.subr.mxu0 0.0
    %263 = vmatpush1.msra.mxu0 0.0
    %264 = vmatprep.subr.mxu0 0.0
    %265 = vmatpush1.msra.mxu0 0.0
    %266 = vmatprep.subr.mxu0 0.0
    %267 = vmatpush1.msra.mxu0 0.0
    %268 = vmatprep.subr.mxu0 0.0
    %269 = vmatpush1.msra.mxu0 0.0
    %270 = vmatprep.subr.mxu0 0.0
    %271 = vmatpush1.msra.mxu0 0.0
    %272 = vmatprep.subr.mxu0 0.0
    %273 = vmatpush1.msra.mxu0 0.0
    %274 = vmatprep.subr.mxu0 0.0
    %275 = vmatpush1.msra.mxu0 0.0
    %276 = vmatprep.subr.mxu0 0.0
    %277 = vmatpush1.msra.mxu0 0.0
    %278 = vmatprep.subr.mxu0 0.0
    %279 = vmatpush1.msra.mxu0 0.0
    %280 = vmatprep.subr.mxu0 %v95
    %281 = vmatpush1.msra.mxu0 %v94
    %282 = vmatprep.subr.mxu0 %v91
    %283 = vmatpush1.msra.mxu0 %v90
    %284 = vmatprep.subr.mxu0 %v87
    %285 = vmatpush1.msra.mxu0 %v86
    %286 = vmatprep.subr.mxu0 %v83
    %287 = vmatpush1.msra.mxu0 %v82
    %288 = vmatprep.subr.mxu0 0.0
    %289 = vmatpush2.msra.mxu0 0.0
    %290 = vmatprep.subr.mxu0 0.0
    %291 = vmatpush2.msra.mxu0 0.0
    %292 = vmatprep.subr.mxu0 0.0
    %293 = vmatpush2.msra.mxu0 0.0
    %294 = vmatprep.subr.mxu0 0.0
    %295 = vmatpush2.msra.mxu0 0.0
    %296 = vmatprep.subr.mxu0 0.0
    %297 = vmatpush2.msra.mxu0 0.0
    %298 = vmatprep.subr.mxu0 0.0
    %299 = vmatpush2.msra.mxu0 0.0
    %300 = vmatprep.subr.mxu0 0.0
    %301 = vmatpush2.msra.mxu0 0.0
    %302 = vmatprep.subr.mxu0 0.0
    %303 = vmatpush2.msra.mxu0 0.0
    %304 = vmatprep.subr.mxu0 0.0
    %305 = vmatpush2.msra.mxu0 0.0
    %306 = vmatprep.subr.mxu0 0.0
    %307 = vmatpush2.msra.mxu0 0.0
    %308 = vmatprep.subr.mxu0 0.0
    %309 = vmatpush2.msra.mxu0 0.0
    %310 = vmatprep.subr.mxu0 0.0
    %311 = vmatpush2.msra.mxu0 0.0
    %312 = vmatprep.subr.mxu0 0.0
    %313 = vmatpush2.msra.mxu0 0.0
    %314 = vmatprep.subr.mxu0 0.0
    %315 = vmatpush2.msra.mxu0 0.0
    %316 = vmatprep.subr.mxu0 0.0
    %317 = vmatpush2.msra.mxu0 0.0
    %318 = vmatprep.subr.mxu0 0.0
    %319 = vmatpush2.msra.mxu0 0.0
    %320 = vmatprep.mubr.f32.mxu0 0.0
    %321 = vmatmul.mubr.f32.gmra.mxu0 %v120
    %v322 = vpop.f32.mrf.mxu0
    %v323 = vadd.f32 %v109, %v322
    %v324 = vpop.f32.mrf.mxu0
    %v325 = vadd.f32 %v113, %v324
    %326 = vmatprep.mubr.f32.mxu0 0.0
    %327 = vmatmul.mubr.f32.gmra.mxu0 %v123
    %v328 = vpop.f32.mrf.mxu0
    %v329 = vadd.f32 %v109, %v328
    %v330 = vpop.f32.mrf.mxu0
    %v331 = vadd.f32 %v113, %v330
    %332 = vmatprep.mubr.f32.mxu0 0.0
    %333 = vmatmul.mubr.f32.gmra.mxu0 %v126
    %v334 = vpop.f32.mrf.mxu0
    %v335 = vadd.f32 %v109, %v334
    %v336 = vpop.f32.mrf.mxu0
    %v337 = vadd.f32 %v113, %v336
    %338 = vmatprep.mubr.f32.mxu0 0.0
    %339 = vmatmul.mubr.f32.gmra.mxu0 %v129
    %v340 = vpop.f32.mrf.mxu0
    %v341 = vadd.f32 %v109, %v340
    %v342 = vpop.f32.mrf.mxu0
    %v343 = vadd.f32 %v113, %v342
    %344 = vmatprep.mubr.f32.mxu0 0.0
    %345 = vmatmul.mubr.f32.gmra.mxu0 %v132
    %v346 = vpop.f32.mrf.mxu0
    %v347 = vadd.f32 %v109, %v346
    %v348 = vpop.f32.mrf.mxu0
    %v349 = vadd.f32 %v113, %v348
    %350 = vmatprep.mubr.f32.mxu0 0.0
    %351 = vmatmul.mubr.f32.gmra.mxu0 %v135
    %v352 = vpop.f32.mrf.mxu0
    %v353 = vadd.f32 %v109, %v352
    %v354 = vpop.f32.mrf.mxu0
    %v355 = vadd.f32 %v113, %v354
    %356 = vmatprep.mubr.f32.mxu0 0.0
    %357 = vmatmul.mubr.f32.gmra.mxu0 %v138
    %v358 = vpop.f32.mrf.mxu0
    %v359 = vadd.f32 %v109, %v358
    %v360 = vpop.f32.mrf.mxu0
    %v361 = vadd.f32 %v113, %v360
    %362 = vmatprep.mubr.f32.mxu0 0.0
    %363 = vmatmul.mubr.f32.gmra.mxu0 %v141
    %v364 = vpop.f32.mrf.mxu0
    %v365 = vadd.f32 %v109, %v364
    %v366 = vpop.f32.mrf.mxu0
    %v367 = vadd.f32 %v113, %v366
    %368 = vdwg.mxu0
    %369 = vst [vmem:[#allocation2] sm:$0xff] %v210
    %370 = vst [vmem:[#allocation2 + $0x8] sm:$0xff] %v212
    %371 = vst [vmem:[#allocation2 + $0x10] sm:$0xff] %v323
    %372 = vst [vmem:[#allocation2 + $0x18] sm:$0xff] %v325
    %373 = vst [vmem:[#allocation2 + $0x20] sm:$0xff] %v216
    %374 = vst [vmem:[#allocation2 + $0x28] sm:$0xff] %v218
    %375 = vst [vmem:[#allocation2 + $0x30] sm:$0xff] %v329
    %376 = vst [vmem:[#allocation2 + $0x38] sm:$0xff] %v331
    %377 = vst [vmem:[#allocation2 + $0x40] sm:$0xff] %v222
    %378 = vst [vmem:[#allocation2 + $0x48] sm:$0xff] %v224
    %379 = vst [vmem:[#allocation2 + $0x50] sm:$0xff] %v335
    %380 = vst [vmem:[#allocation2 + $0x58] sm:$0xff] %v337
    %381 = vst [vmem:[#allocation2 + $0x60] sm:$0xff] %v228
    %382 = vst [vmem:[#allocation2 + $0x68] sm:$0xff] %v230
    %383 = vst [vmem:[#allocation2 + $0x70] sm:$0xff] %v341
    %384 = vst [vmem:[#allocation2 + $0x78] sm:$0xff] %v343
    %385 = vst [vmem:[#allocation2 + $0x80] sm:$0xff] %v234
    %386 = vst [vmem:[#allocation2 + $0x88] sm:$0xff] %v236
    %387 = vst [vmem:[#allocation2 + $0x90] sm:$0xff] %v347
    %388 = vst [vmem:[#allocation2 + $0x98] sm:$0xff] %v349
    %389 = vst [vmem:[#allocation2 + $0xa0] sm:$0xff] %v240
    %390 = vst [vmem:[#allocation2 + $0xa8] sm:$0xff] %v242
    %391 = vst [vmem:[#allocation2 + $0xb0] sm:$0xff] %v353
    %392 = vst [vmem:[#allocation2 + $0xb8] sm:$0xff] %v355
    %393 = vst [vmem:[#allocation2 + $0xc0] sm:$0xff] %v246
    %394 = vst [vmem:[#allocation2 + $0xc8] sm:$0xff] %v248
    %395 = vst [vmem:[#allocation2 + $0xd0] sm:$0xff] %v359
    %396 = vst [vmem:[#allocation2 + $0xd8] sm:$0xff] %v361
    %397 = vst [vmem:[#allocation2 + $0xe0] sm:$0xff] %v252
    %398 = vst [vmem:[#allocation2 + $0xe8] sm:$0xff] %v254
    %399 = vst [vmem:[#allocation2 + $0xf0] sm:$0xff] %v365
    %400 = vst [vmem:[#allocation2 + $0xf8] sm:$0xff] %v367
    %v401 = vld [vmem:[%s5] sm:$0xf]
    %v403 = vlaneseq
    %v404 = vshrl.u32 %v403, 7
    %v405 = vsub.s32 0, %v404
    %v406 = vrot.slane %v401, %v405
    %v407 = vlaneseq
    %v408 = vshrl.u32 %v407, 7
    %v409 = vsub.s32 1, %v408
    %v410 = vrot.slane %v401, %v409
    %v411 = vlaneseq
    %v412 = vshrl.u32 %v411, 7
    %v413 = vsub.s32 2, %v412
    %v414 = vrot.slane %v401, %v413
    %v415 = vlaneseq
    %v416 = vshrl.u32 %v415, 7
    %v417 = vsub.s32 3, %v416
    %v418 = vrot.slane %v401, %v417
    %s423 = smul.u32 0, 4
    %s424 = smul.addr %s423, 8
    %s425 = scalar_lea.vmem [#allocation2], %s424
    %v426 = vld [vmem:[%s425] sm:$0xff]
    %v427 = vld [vmem:[%s425 + $0x8] sm:$0xff]
    %v428 = vld [vmem:[%s425 + $0x10] sm:$0xff]
    %v429 = vld [vmem:[%s425 + $0x18] sm:$0xff]
    %v430 = vld [vmem:[#allocation6] sm:$0xff]
    %v431 = vld [vmem:[#allocation6 + $0x8] sm:$0xff]
    %v432 = vld [vmem:[#allocation6 + $0x10] sm:$0xff]
    %v433 = vld [vmem:[#allocation6 + $0x18] sm:$0xff]
    %v434 = vld [vmem:[#allocation6 + $0x20] sm:$0xff]
    %v435 = vld [vmem:[#allocation6 + $0x28] sm:$0xff]
    %v436 = vld [vmem:[#allocation6 + $0x30] sm:$0xff]
    %v437 = vld [vmem:[#allocation6 + $0x38] sm:$0xff]
    %v438 = vld [vmem:[#allocation6 + $0x40] sm:$0xff]
    %v439 = vld [vmem:[#allocation6 + $0x48] sm:$0xff]
    %v440 = vld [vmem:[#allocation6 + $0x50] sm:$0xff]
    %v441 = vld [vmem:[#allocation6 + $0x58] sm:$0xff]
    %v442 = vld [vmem:[#allocation6 + $0x60] sm:$0xff]
    %v443 = vld [vmem:[#allocation6 + $0x68] sm:$0xff]
    %v444 = vld [vmem:[#allocation6 + $0x70] sm:$0xff]
    %v445 = vld [vmem:[#allocation6 + $0x78] sm:$0xff]
    %v446 = vld [vmem:[#allocation6 + $0x80] sm:$0xff]
    %v447 = vld [vmem:[#allocation6 + $0x88] sm:$0xff]
    %v448 = vld [vmem:[#allocation6 + $0x90] sm:$0xff]
    %v449 = vld [vmem:[#allocation6 + $0x98] sm:$0xff]
    %v450 = vld [vmem:[#allocation6 + $0xa0] sm:$0xff]
    %v451 = vld [vmem:[#allocation6 + $0xa8] sm:$0xff]
    %v452 = vld [vmem:[#allocation6 + $0xb0] sm:$0xff]
    %v453 = vld [vmem:[#allocation6 + $0xb8] sm:$0xff]
    %v454 = vld [vmem:[#allocation6 + $0xc0] sm:$0xff]
    %v455 = vld [vmem:[#allocation6 + $0xc8] sm:$0xff]
    %v456 = vld [vmem:[#allocation6 + $0xd0] sm:$0xff]
    %v457 = vld [vmem:[#allocation6 + $0xd8] sm:$0xff]
    %v458 = vld [vmem:[#allocation6 + $0xe0] sm:$0xff]
    %v459 = vld [vmem:[#allocation6 + $0xe8] sm:$0xff]
    %v460 = vld [vmem:[#allocation6 + $0xf0] sm:$0xff]
    %v461 = vld [vmem:[#allocation6 + $0xf8] sm:$0xff]
    %v462 = vld [vmem:[#allocation6 + $0x100] sm:$0xff]
    %v463 = vld [vmem:[#allocation6 + $0x108] sm:$0xff]
    %v464 = vld [vmem:[#allocation6 + $0x110] sm:$0xff]
    %v465 = vld [vmem:[#allocation6 + $0x118] sm:$0xff]
    %v466 = vld [vmem:[#allocation6 + $0x120] sm:$0xff]
    %v467 = vld [vmem:[#allocation6 + $0x128] sm:$0xff]
    %v468 = vld [vmem:[#allocation6 + $0x130] sm:$0xff]
    %v469 = vld [vmem:[#allocation6 + $0x138] sm:$0xff]
    %v470 = vld [vmem:[#allocation6 + $0x140] sm:$0xff]
    %v471 = vld [vmem:[#allocation6 + $0x148] sm:$0xff]
    %v472 = vld [vmem:[#allocation6 + $0x150] sm:$0xff]
    %v473 = vld [vmem:[#allocation6 + $0x158] sm:$0xff]
    %v474 = vld [vmem:[#allocation6 + $0x160] sm:$0xff]
    %v475 = vld [vmem:[#allocation6 + $0x168] sm:$0xff]
    %v476 = vld [vmem:[#allocation6 + $0x170] sm:$0xff]
    %v477 = vld [vmem:[#allocation6 + $0x178] sm:$0xff]
    %v478 = vld [vmem:[#allocation6 + $0x180] sm:$0xff]
    %v479 = vld [vmem:[#allocation6 + $0x188] sm:$0xff]
    %v480 = vld [vmem:[#allocation6 + $0x190] sm:$0xff]
    %v481 = vld [vmem:[#allocation6 + $0x198] sm:$0xff]
    %v482 = vld [vmem:[#allocation6 + $0x1a0] sm:$0xff]
    %v483 = vld [vmem:[#allocation6 + $0x1a8] sm:$0xff]
    %v484 = vld [vmem:[#allocation6 + $0x1b0] sm:$0xff]
    %v485 = vld [vmem:[#allocation6 + $0x1b8] sm:$0xff]
    %v486 = vld [vmem:[#allocation6 + $0x1c0] sm:$0xff]
    %v487 = vld [vmem:[#allocation6 + $0x1c8] sm:$0xff]
    %v488 = vld [vmem:[#allocation6 + $0x1d0] sm:$0xff]
    %v489 = vld [vmem:[#allocation6 + $0x1d8] sm:$0xff]
    %v490 = vld [vmem:[#allocation6 + $0x1e0] sm:$0xff]
    %v491 = vld [vmem:[#allocation6 + $0x1e8] sm:$0xff]
    %v492 = vld [vmem:[#allocation6 + $0x1f0] sm:$0xff]
    %v493 = vld [vmem:[#allocation6 + $0x1f8] sm:$0xff]
    %494 = vmatprep.subr.mxu0 %v491
    %495 = vmatpush1.msra.mxu0 %v490
    %496 = vmatprep.subr.mxu0 %v487
    %497 = vmatpush1.msra.mxu0 %v486
    %498 = vmatprep.subr.mxu0 %v483
    %499 = vmatpush1.msra.mxu0 %v482
    %500 = vmatprep.subr.mxu0 %v479
    %501 = vmatpush1.msra.mxu0 %v478
    %502 = vmatprep.subr.mxu0 %v475
    %503 = vmatpush1.msra.mxu0 %v474
    %504 = vmatprep.subr.mxu0 %v471
    %505 = vmatpush1.msra.mxu0 %v470
    %506 = vmatprep.subr.mxu0 %v467
    %507 = vmatpush1.msra.mxu0 %v466
    %508 = vmatprep.subr.mxu0 %v463
    %509 = vmatpush1.msra.mxu0 %v462
    %510 = vmatprep.subr.mxu0 %v459
    %511 = vmatpush1.msra.mxu0 %v458
    %512 = vmatprep.subr.mxu0 %v455
    %513 = vmatpush1.msra.mxu0 %v454
    %514 = vmatprep.subr.mxu0 %v451
    %515 = vmatpush1.msra.mxu0 %v450
    %516 = vmatprep.subr.mxu0 %v447
    %517 = vmatpush1.msra.mxu0 %v446
    %518 = vmatprep.subr.mxu0 %v443
    %519 = vmatpush1.msra.mxu0 %v442
    %520 = vmatprep.subr.mxu0 %v439
    %521 = vmatpush1.msra.mxu0 %v438
    %522 = vmatprep.subr.mxu0 %v435
    %523 = vmatpush1.msra.mxu0 %v434
    %524 = vmatprep.subr.mxu0 %v431
    %525 = vmatpush1.msra.mxu0 %v430
    %526 = vmatprep.subr.mxu0 0.0
    %527 = vmatpush2.msra.mxu0 0.0
    %528 = vmatprep.subr.mxu0 0.0
    %529 = vmatpush2.msra.mxu0 0.0
    %530 = vmatprep.subr.mxu0 0.0
    %531 = vmatpush2.msra.mxu0 0.0
    %532 = vmatprep.subr.mxu0 0.0
    %533 = vmatpush2.msra.mxu0 0.0
    %534 = vmatprep.subr.mxu0 0.0
    %535 = vmatpush2.msra.mxu0 0.0
    %536 = vmatprep.subr.mxu0 0.0
    %537 = vmatpush2.msra.mxu0 0.0
    %538 = vmatprep.subr.mxu0 0.0
    %539 = vmatpush2.msra.mxu0 0.0
    %540 = vmatprep.subr.mxu0 0.0
    %541 = vmatpush2.msra.mxu0 0.0
    %542 = vmatprep.subr.mxu0 0.0
    %543 = vmatpush2.msra.mxu0 0.0
    %544 = vmatprep.subr.mxu0 0.0
    %545 = vmatpush2.msra.mxu0 0.0
    %546 = vmatprep.subr.mxu0 0.0
    %547 = vmatpush2.msra.mxu0 0.0
    %548 = vmatprep.subr.mxu0 0.0
    %549 = vmatpush2.msra.mxu0 0.0
    %550 = vmatprep.subr.mxu0 0.0
    %551 = vmatpush2.msra.mxu0 0.0
    %552 = vmatprep.subr.mxu0 0.0
    %553 = vmatpush2.msra.mxu0 0.0
    %554 = vmatprep.subr.mxu0 0.0
    %555 = vmatpush2.msra.mxu0 0.0
    %556 = vmatprep.subr.mxu0 0.0
    %557 = vmatpush2.msra.mxu0 0.0
    %558 = vmatprep.mubr.f32.mxu0 0.0
    %559 = vmatmul.mubr.f32.gmra.mxu0 0.0
    %v560 = vpop.f32.mrf.mxu0
    %v561 = vadd.f32 0.0, %v560
    %v562 = vpop.f32.mrf.mxu0
    %v563 = vadd.f32 0.0, %v562
    %564 = vdwg.mxu0
    %565 = vmatprep.subr.mxu0 %v493
    %566 = vmatpush1.msra.mxu0 %v492
    %567 = vmatprep.subr.mxu0 %v489
    %568 = vmatpush1.msra.mxu0 %v488
    %569 = vmatprep.subr.mxu0 %v485
    %570 = vmatpush1.msra.mxu0 %v484
    %571 = vmatprep.subr.mxu0 %v481
    %572 = vmatpush1.msra.mxu0 %v480
    %573 = vmatprep.subr.mxu0 %v477
    %574 = vmatpush1.msra.mxu0 %v476
    %575 = vmatprep.subr.mxu0 %v473
    %576 = vmatpush1.msra.mxu0 %v472
    %577 = vmatprep.subr.mxu0 %v469
    %578 = vmatpush1.msra.mxu0 %v468
    %579 = vmatprep.subr.mxu0 %v465
    %580 = vmatpush1.msra.mxu0 %v464
    %581 = vmatprep.subr.mxu0 %v461
    %582 = vmatpush1.msra.mxu0 %v460
    %583 = vmatprep.subr.mxu0 %v457
    %584 = vmatpush1.msra.mxu0 %v456
    %585 = vmatprep.subr.mxu0 %v453
    %586 = vmatpush1.msra.mxu0 %v452
    %587 = vmatprep.subr.mxu0 %v449
    %588 = vmatpush1.msra.mxu0 %v448
    %589 = vmatprep.subr.mxu0 %v445
    %590 = vmatpush1.msra.mxu0 %v444
    %591 = vmatprep.subr.mxu0 %v441
    %592 = vmatpush1.msra.mxu0 %v440
    %593 = vmatprep.subr.mxu0 %v437
    %594 = vmatpush1.msra.mxu0 %v436
    %595 = vmatprep.subr.mxu0 %v433
    %596 = vmatpush1.msra.mxu0 %v432
    %597 = vmatprep.subr.mxu0 0.0
    %598 = vmatpush2.msra.mxu0 0.0
    %599 = vmatprep.subr.mxu0 0.0
    %600 = vmatpush2.msra.mxu0 0.0
    %601 = vmatprep.subr.mxu0 0.0
    %602 = vmatpush2.msra.mxu0 0.0
    %603 = vmatprep.subr.mxu0 0.0
    %604 = vmatpush2.msra.mxu0 0.0
    %605 = vmatprep.subr.mxu0 0.0
    %606 = vmatpush2.msra.mxu0 0.0
    %607 = vmatprep.subr.mxu0 0.0
    %608 = vmatpush2.msra.mxu0 0.0
    %609 = vmatprep.subr.mxu0 0.0
    %610 = vmatpush2.msra.mxu0 0.0
    %611 = vmatprep.subr.mxu0 0.0
    %612 = vmatpush2.msra.mxu0 0.0
    %613 = vmatprep.subr.mxu0 0.0
    %614 = vmatpush2.msra.mxu0 0.0
    %615 = vmatprep.subr.mxu0 0.0
    %616 = vmatpush2.msra.mxu0 0.0
    %617 = vmatprep.subr.mxu0 0.0
    %618 = vmatpush2.msra.mxu0 0.0
    %619 = vmatprep.subr.mxu0 0.0
    %620 = vmatpush2.msra.mxu0 0.0
    %621 = vmatprep.subr.mxu0 0.0
    %622 = vmatpush2.msra.mxu0 0.0
    %623 = vmatprep.subr.mxu0 0.0
    %624 = vmatpush2.msra.mxu0 0.0
    %625 = vmatprep.subr.mxu0 0.0
    %626 = vmatpush2.msra.mxu0 0.0
    %627 = vmatprep.subr.mxu0 0.0
    %628 = vmatpush2.msra.mxu0 0.0
    %629 = vmatprep.mubr.f32.mxu0 0.0
    %630 = vmatmul.mubr.f32.gmra.mxu0 0.0
    %v631 = vpop.f32.mrf.mxu0
    %v632 = vadd.f32 0.0, %v631
    %v633 = vpop.f32.mrf.mxu0
    %v634 = vadd.f32 0.0, %v633
    %635 = vdwg.mxu0
    %v636 = vadd.f32 %v426, %v561
    %v637 = vadd.f32 %v427, %v563
    %v638 = vadd.f32 %v428, %v632
    %v639 = vadd.f32 %v429, %v634
    %v640 = vxor.u32 %v636, 2147483648
    %v641 = vmul.f32 %v640, 1.442695
    %v642 = vpow.pop %v641
    %v643 = vadd.f32 %v642, 1.0
    %v644 = vrcp.pop %v643
    %v645 = vmul.f32 1.0, %v644
    %v646 = vxor.u32 %v637, 2147483648
    %v647 = vmul.f32 %v646, 1.442695
    %v648 = vpow.pop %v647
    %v649 = vadd.f32 %v648, 1.0
    %v650 = vrcp.pop %v649
    %v651 = vmul.f32 1.0, %v650
    %v652 = vtanh.pop %v638
    %v653 = vxor.u32 %v639, 2147483648
    %v654 = vmul.f32 %v653, 1.442695
    %v655 = vpow.pop %v654
    %v656 = vadd.f32 %v655, 1.0
    %v657 = vrcp.pop %v656
    %v658 = vmul.f32 1.0, %v657
    %v659 = vmul.f32 %v651, 0.0
    %v660 = vmul.f32 %v645, %v652
    %v661 = vadd.f32 %v659, %v660
    %v662 = vtanh.pop %v661
    %v663 = vmul.f32 %v658, %v662
    %v664 = vld [vmem:[#allocation8] sm:$0xff]
    %v665 = vld [vmem:[#allocation8 + $0x8] sm:$0xff]
    %v666 = vld [vmem:[#allocation8 + $0x10] sm:$0xff]
    %v667 = vld [vmem:[#allocation8 + $0x18] sm:$0xff]
    %v668 = vld [vmem:[#allocation8 + $0x20] sm:$0xff]
    %v669 = vld [vmem:[#allocation8 + $0x28] sm:$0xff]
    %v670 = vld [vmem:[#allocation8 + $0x30] sm:$0xff]
    %v671 = vld [vmem:[#allocation8 + $0x38] sm:$0xff]
    %v672 = vld [vmem:[#allocation8 + $0x40] sm:$0xff]
    %v673 = vld [vmem:[#allocation8 + $0x48] sm:$0xff]
    %v674 = vld [vmem:[#allocation8 + $0x50] sm:$0xff]
    %v675 = vld [vmem:[#allocation8 + $0x58] sm:$0xff]
    %v676 = vld [vmem:[#allocation8 + $0x60] sm:$0xff]
    %v677 = vld [vmem:[#allocation8 + $0x68] sm:$0xff]
    %v678 = vld [vmem:[#allocation8 + $0x70] sm:$0xff]
    %v679 = vld [vmem:[#allocation8 + $0x78] sm:$0xff]
    %v680 = vld [vmem:[#allocation8 + $0x80] sm:$0xff]
    %v681 = vld [vmem:[#allocation8 + $0x88] sm:$0xff]
    %v682 = vld [vmem:[#allocation8 + $0x90] sm:$0xff]
    %v683 = vld [vmem:[#allocation8 + $0x98] sm:$0xff]
    %v684 = vld [vmem:[#allocation8 + $0xa0] sm:$0xff]
    %v685 = vld [vmem:[#allocation8 + $0xa8] sm:$0xff]
    %v686 = vld [vmem:[#allocation8 + $0xb0] sm:$0xff]
    %v687 = vld [vmem:[#allocation8 + $0xb8] sm:$0xff]
    %v688 = vld [vmem:[#allocation8 + $0xc0] sm:$0xff]
    %v689 = vld [vmem:[#allocation8 + $0xc8] sm:$0xff]
    %v690 = vld [vmem:[#allocation8 + $0xd0] sm:$0xff]
    %v691 = vld [vmem:[#allocation8 + $0xd8] sm:$0xff]
    %v692 = vld [vmem:[#allocation8 + $0xe0] sm:$0xff]
    %v693 = vld [vmem:[#allocation8 + $0xe8] sm:$0xff]
    %v694 = vld [vmem:[#allocation8 + $0xf0] sm:$0xff]
    %v695 = vld [vmem:[#allocation8 + $0xf8] sm:$0xff]
    %v696 = vld [vmem:[#allocation8 + $0x100] sm:$0xff]
    %v697 = vld [vmem:[#allocation8 + $0x108] sm:$0xff]
    %v698 = vld [vmem:[#allocation8 + $0x110] sm:$0xff]
    %v699 = vld [vmem:[#allocation8 + $0x118] sm:$0xff]
    %v700 = vld [vmem:[#allocation8 + $0x120] sm:$0xff]
    %v701 = vld [vmem:[#allocation8 + $0x128] sm:$0xff]
    %v702 = vld [vmem:[#allocation8 + $0x130] sm:$0xff]
    %v703 = vld [vmem:[#allocation8 + $0x138] sm:$0xff]
    %v704 = vld [vmem:[#allocation8 + $0x140] sm:$0xff]
    %v705 = vld [vmem:[#allocation8 + $0x148] sm:$0xff]
    %v706 = vld [vmem:[#allocation8 + $0x150] sm:$0xff]
    %v707 = vld [vmem:[#allocation8 + $0x158] sm:$0xff]
    %v708 = vld [vmem:[#allocation8 + $0x160] sm:$0xff]
    %v709 = vld [vmem:[#allocation8 + $0x168] sm:$0xff]
    %v710 = vld [vmem:[#allocation8 + $0x170] sm:$0xff]
    %v711 = vld [vmem:[#allocation8 + $0x178] sm:$0xff]
    %v712 = vld [vmem:[#allocation8 + $0x180] sm:$0xff]
    %v713 = vld [vmem:[#allocation8 + $0x188] sm:$0xff]
    %v714 = vld [vmem:[#allocation8 + $0x190] sm:$0xff]
    %v715 = vld [vmem:[#allocation8 + $0x198] sm:$0xff]
    %v716 = vld [vmem:[#allocation8 + $0x1a0] sm:$0xff]
    %v717 = vld [vmem:[#allocation8 + $0x1a8] sm:$0xff]
    %v718 = vld [vmem:[#allocation8 + $0x1b0] sm:$0xff]
    %v719 = vld [vmem:[#allocation8 + $0x1b8] sm:$0xff]
    %v720 = vld [vmem:[#allocation8 + $0x1c0] sm:$0xff]
    %v721 = vld [vmem:[#allocation8 + $0x1c8] sm:$0xff]
    %v722 = vld [vmem:[#allocation8 + $0x1d0] sm:$0xff]
    %v723 = vld [vmem:[#allocation8 + $0x1d8] sm:$0xff]
    %v724 = vld [vmem:[#allocation8 + $0x1e0] sm:$0xff]
    %v725 = vld [vmem:[#allocation8 + $0x1e8] sm:$0xff]
    %v726 = vld [vmem:[#allocation8 + $0x1f0] sm:$0xff]
    %v727 = vld [vmem:[#allocation8 + $0x1f8] sm:$0xff]
    %v728 = vld [vmem:[#allocation8 + $0x200] sm:$0xff]
    %v729 = vld [vmem:[#allocation8 + $0x208] sm:$0xff]
    %v730 = vld [vmem:[#allocation8 + $0x210] sm:$0xff]
    %v731 = vld [vmem:[#allocation8 + $0x218] sm:$0xff]
    %v732 = vld [vmem:[#allocation8 + $0x220] sm:$0xff]
    %v733 = vld [vmem:[#allocation8 + $0x228] sm:$0xff]
    %v734 = vld [vmem:[#allocation8 + $0x230] sm:$0xff]
    %v735 = vld [vmem:[#allocation8 + $0x238] sm:$0xff]
    %v736 = vld [vmem:[#allocation8 + $0x240] sm:$0xff]
    %v737 = vld [vmem:[#allocation8 + $0x248] sm:$0xff]
    %v738 = vld [vmem:[#allocation8 + $0x250] sm:$0xff]
    %v739 = vld [vmem:[#allocation8 + $0x258] sm:$0xff]
    %v740 = vld [vmem:[#allocation8 + $0x260] sm:$0xff]
    %v741 = vld [vmem:[#allocation8 + $0x268] sm:$0xff]
    %v742 = vld [vmem:[#allocation8 + $0x270] sm:$0xff]
    %v743 = vld [vmem:[#allocation8 + $0x278] sm:$0xff]
    %v744 = vld [vmem:[#allocation8 + $0x280] sm:$0xff]
    %v745 = vld [vmem:[#allocation8 + $0x288] sm:$0xff]
    %v746 = vld [vmem:[#allocation8 + $0x290] sm:$0xff]
    %v747 = vld [vmem:[#allocation8 + $0x298] sm:$0xff]
    %v748 = vld [vmem:[#allocation8 + $0x2a0] sm:$0xff]
    %v749 = vld [vmem:[#allocation8 + $0x2a8] sm:$0xff]
    %v750 = vld [vmem:[#allocation8 + $0x2b0] sm:$0xff]
    %v751 = vld [vmem:[#allocation8 + $0x2b8] sm:$0xff]
    %v752 = vld [vmem:[#allocation8 + $0x2c0] sm:$0xff]
    %v753 = vld [vmem:[#allocation8 + $0x2c8] sm:$0xff]
    %v754 = vld [vmem:[#allocation8 + $0x2d0] sm:$0xff]
    %v755 = vld [vmem:[#allocation8 + $0x2d8] sm:$0xff]
    %v756 = vld [vmem:[#allocation8 + $0x2e0] sm:$0xff]
    %v757 = vld [vmem:[#allocation8 + $0x2e8] sm:$0xff]
    %v758 = vld [vmem:[#allocation8 + $0x2f0] sm:$0xff]
    %v759 = vld [vmem:[#allocation8 + $0x2f8] sm:$0xff]
    %v760 = vld [vmem:[#allocation8 + $0x300] sm:$0xff]
    %v761 = vld [vmem:[#allocation8 + $0x308] sm:$0xff]
    %v762 = vld [vmem:[#allocation8 + $0x310] sm:$0xff]
    %v763 = vld [vmem:[#allocation8 + $0x318] sm:$0xff]
    %v764 = vld [vmem:[#allocation8 + $0x320] sm:$0xff]
    %v765 = vld [vmem:[#allocation8 + $0x328] sm:$0xff]
    %v766 = vld [vmem:[#allocation8 + $0x330] sm:$0xff]
    %v767 = vld [vmem:[#allocation8 + $0x338] sm:$0xff]
    %v768 = vld [vmem:[#allocation8 + $0x340] sm:$0xff]
    %v769 = vld [vmem:[#allocation8 + $0x348] sm:$0xff]
    %v770 = vld [vmem:[#allocation8 + $0x350] sm:$0xff]
    %v771 = vld [vmem:[#allocation8 + $0x358] sm:$0xff]
    %v772 = vld [vmem:[#allocation8 + $0x360] sm:$0xff]
    %v773 = vld [vmem:[#allocation8 + $0x368] sm:$0xff]
    %v774 = vld [vmem:[#allocation8 + $0x370] sm:$0xff]
    %v775 = vld [vmem:[#allocation8 + $0x378] sm:$0xff]
    %v776 = vld [vmem:[#allocation8 + $0x380] sm:$0xff]
    %v777 = vld [vmem:[#allocation8 + $0x388] sm:$0xff]
    %v778 = vld [vmem:[#allocation8 + $0x390] sm:$0xff]
    %v779 = vld [vmem:[#allocation8 + $0x398] sm:$0xff]
    %v780 = vld [vmem:[#allocation8 + $0x3a0] sm:$0xff]
    %v781 = vld [vmem:[#allocation8 + $0x3a8] sm:$0xff]
    %v782 = vld [vmem:[#allocation8 + $0x3b0] sm:$0xff]
    %v783 = vld [vmem:[#allocation8 + $0x3b8] sm:$0xff]
    %v784 = vld [vmem:[#allocation8 + $0x3c0] sm:$0xff]
    %v785 = vld [vmem:[#allocation8 + $0x3c8] sm:$0xff]
    %v786 = vld [vmem:[#allocation8 + $0x3d0] sm:$0xff]
    %v787 = vld [vmem:[#allocation8 + $0x3d8] sm:$0xff]
    %v788 = vld [vmem:[#allocation8 + $0x3e0] sm:$0xff]
    %v789 = vld [vmem:[#allocation8 + $0x3e8] sm:$0xff]
    %v790 = vld [vmem:[#allocation8 + $0x3f0] sm:$0xff]
    %v791 = vld [vmem:[#allocation8 + $0x3f8] sm:$0xff]
    %792 = vmatprep.subr.mxu0 %v725
    %793 = vmatpush1.msra.mxu0 %v724
    %794 = vmatprep.subr.mxu0 %v721
    %795 = vmatpush1.msra.mxu0 %v720
    %796 = vmatprep.subr.mxu0 %v717
    %797 = vmatpush1.msra.mxu0 %v716
    %798 = vmatprep.subr.mxu0 %v713
    %799 = vmatpush1.msra.mxu0 %v712
    %800 = vmatprep.subr.mxu0 %v709
    %801 = vmatpush1.msra.mxu0 %v708
    %802 = vmatprep.subr.mxu0 %v705
    %803 = vmatpush1.msra.mxu0 %v704
    %804 = vmatprep.subr.mxu0 %v701
    %805 = vmatpush1.msra.mxu0 %v700
    %806 = vmatprep.subr.mxu0 %v697
    %807 = vmatpush1.msra.mxu0 %v696
    %808 = vmatprep.subr.mxu0 %v693
    %809 = vmatpush1.msra.mxu0 %v692
    %810 = vmatprep.subr.mxu0 %v689
    %811 = vmatpush1.msra.mxu0 %v688
    %812 = vmatprep.subr.mxu0 %v685
    %813 = vmatpush1.msra.mxu0 %v684
    %814 = vmatprep.subr.mxu0 %v681
    %815 = vmatpush1.msra.mxu0 %v680
    %816 = vmatprep.subr.mxu0 %v677
    %817 = vmatpush1.msra.mxu0 %v676
    %818 = vmatprep.subr.mxu0 %v673
    %819 = vmatpush1.msra.mxu0 %v672
    %820 = vmatprep.subr.mxu0 %v669
    %821 = vmatpush1.msra.mxu0 %v668
    %822 = vmatprep.subr.mxu0 %v665
    %823 = vmatpush1.msra.mxu0 %v664
    %824 = vmatprep.subr.mxu0 %v789
    %825 = vmatpush2.msra.mxu0 %v788
    %826 = vmatprep.subr.mxu0 %v785
    %827 = vmatpush2.msra.mxu0 %v784
    %828 = vmatprep.subr.mxu0 %v781
    %829 = vmatpush2.msra.mxu0 %v780
    %830 = vmatprep.subr.mxu0 %v777
    %831 = vmatpush2.msra.mxu0 %v776
    %832 = vmatprep.subr.mxu0 %v773
    %833 = vmatpush2.msra.mxu0 %v772
    %834 = vmatprep.subr.mxu0 %v769
    %835 = vmatpush2.msra.mxu0 %v768
    %836 = vmatprep.subr.mxu0 %v765
    %837 = vmatpush2.msra.mxu0 %v764
    %838 = vmatprep.subr.mxu0 %v761
    %839 = vmatpush2.msra.mxu0 %v760
    %840 = vmatprep.subr.mxu0 %v757
    %841 = vmatpush2.msra.mxu0 %v756
    %842 = vmatprep.subr.mxu0 %v753
    %843 = vmatpush2.msra.mxu0 %v752
    %844 = vmatprep.subr.mxu0 %v749
    %845 = vmatpush2.msra.mxu0 %v748
    %846 = vmatprep.subr.mxu0 %v745
    %847 = vmatpush2.msra.mxu0 %v744
    %848 = vmatprep.subr.mxu0 %v741
    %849 = vmatpush2.msra.mxu0 %v740
    %850 = vmatprep.subr.mxu0 %v737
    %851 = vmatpush2.msra.mxu0 %v736
    %852 = vmatprep.subr.mxu0 %v733
    %853 = vmatpush2.msra.mxu0 %v732
    %854 = vmatprep.subr.mxu0 %v729
    %855 = vmatpush2.msra.mxu0 %v728
    %856 = vmatprep.mubr.f32.mxu0 0.0
    %857 = vmatmul.mubr.f32.gmra.mxu0 %v663
    %v858 = vpop.f32.mrf.mxu0
    %v859 = vadd.f32 %v406, %v858
    %v860 = vpop.f32.mrf.mxu0
    %v861 = vadd.f32 %v410, %v860
    %862 = vdwg.mxu0
    %863 = vmatprep.subr.mxu0 %v727
    %864 = vmatpush1.msra.mxu0 %v726
    %865 = vmatprep.subr.mxu0 %v723
    %866 = vmatpush1.msra.mxu0 %v722
    %867 = vmatprep.subr.mxu0 %v719
    %868 = vmatpush1.msra.mxu0 %v718
    %869 = vmatprep.subr.mxu0 %v715
    %870 = vmatpush1.msra.mxu0 %v714
    %871 = vmatprep.subr.mxu0 %v711
    %872 = vmatpush1.msra.mxu0 %v710
    %873 = vmatprep.subr.mxu0 %v707
    %874 = vmatpush1.msra.mxu0 %v706
    %875 = vmatprep.subr.mxu0 %v703
    %876 = vmatpush1.msra.mxu0 %v702
    %877 = vmatprep.subr.mxu0 %v699
    %878 = vmatpush1.msra.mxu0 %v698
    %879 = vmatprep.subr.mxu0 %v695
    %880 = vmatpush1.msra.mxu0 %v694
    %881 = vmatprep.subr.mxu0 %v691
    %882 = vmatpush1.msra.mxu0 %v690
    %883 = vmatprep.subr.mxu0 %v687
    %884 = vmatpush1.msra.mxu0 %v686
    %885 = vmatprep.subr.mxu0 %v683
    %886 = vmatpush1.msra.mxu0 %v682
    %887 = vmatprep.subr.mxu0 %v679
    %888 = vmatpush1.msra.mxu0 %v678
    %889 = vmatprep.subr.mxu0 %v675
    %890 = vmatpush1.msra.mxu0 %v674
    %891 = vmatprep.subr.mxu0 %v671
    %892 = vmatpush1.msra.mxu0 %v670
    %893 = vmatprep.subr.mxu0 %v667
    %894 = vmatpush1.msra.mxu0 %v666
    %895 = vmatprep.subr.mxu0 %v791
    %896 = vmatpush2.msra.mxu0 %v790
    %897 = vmatprep.subr.mxu0 %v787
    %898 = vmatpush2.msra.mxu0 %v786
    %899 = vmatprep.subr.mxu0 %v783
    %900 = vmatpush2.msra.mxu0 %v782
    %901 = vmatprep.subr.mxu0 %v779
    %902 = vmatpush2.msra.mxu0 %v778
    %903 = vmatprep.subr.mxu0 %v775
    %904 = vmatpush2.msra.mxu0 %v774
    %905 = vmatprep.subr.mxu0 %v771
    %906 = vmatpush2.msra.mxu0 %v770
    %907 = vmatprep.subr.mxu0 %v767
    %908 = vmatpush2.msra.mxu0 %v766
    %909 = vmatprep.subr.mxu0 %v763
    %910 = vmatpush2.msra.mxu0 %v762
    %911 = vmatprep.subr.mxu0 %v759
    %912 = vmatpush2.msra.mxu0 %v758
    %913 = vmatprep.subr.mxu0 %v755
    %914 = vmatpush2.msra.mxu0 %v754
    %915 = vmatprep.subr.mxu0 %v751
    %916 = vmatpush2.msra.mxu0 %v750
    %917 = vmatprep.subr.mxu0 %v747
    %918 = vmatpush2.msra.mxu0 %v746
    %919 = vmatprep.subr.mxu0 %v743
    %920 = vmatpush2.msra.mxu0 %v742
    %921 = vmatprep.subr.mxu0 %v739
    %922 = vmatpush2.msra.mxu0 %v738
    %923 = vmatprep.subr.mxu0 %v735
    %924 = vmatpush2.msra.mxu0 %v734
    %925 = vmatprep.subr.mxu0 %v731
    %926 = vmatpush2.msra.mxu0 %v730
    %927 = vmatprep.mubr.f32.mxu0 0.0
    %928 = vmatmul.mubr.f32.gmra.mxu0 %v663
    %v929 = vpop.f32.mrf.mxu0
    %v930 = vadd.f32 %v414, %v929
    %v931 = vpop.f32.mrf.mxu0
    %v932 = vadd.f32 %v418, %v931
    %933 = vdwg.mxu0
    %v934 = vxor.u32 %v859, 2147483648
    %v935 = vmul.f32 %v934, 1.442695
    %v936 = vpow.pop %v935
    %v937 = vadd.f32 %v936, 1.0
    %v938 = vrcp.pop %v937
    %v939 = vmul.f32 1.0, %v938
    %v940 = vxor.u32 %v861, 2147483648
    %v941 = vmul.f32 %v940, 1.442695
    %v942 = vpow.pop %v941
    %v943 = vadd.f32 %v942, 1.0
    %v944 = vrcp.pop %v943
    %v945 = vmul.f32 1.0, %v944
    %v946 = vtanh.pop %v930
    %v947 = vxor.u32 %v932, 2147483648
    %v948 = vmul.f32 %v947, 1.442695
    %v949 = vpow.pop %v948
    %v950 = vadd.f32 %v949, 1.0
    %v951 = vrcp.pop %v950
    %v952 = vmul.f32 1.0, %v951
    %v953 = vmul.f32 %v945, 0.0
    %v954 = vmul.f32 %v939, %v946
    %v955 = vadd.f32 %v953, %v954
    %v956 = vtanh.pop %v955
    %v957 = vmul.f32 %v952, %v956
    %s958 = smul.u32 1, 4
    %s959 = smul.addr %s958, 8
    %s960 = scalar_lea.vmem [#allocation2], %s959
    %v961 = vld [vmem:[%s960] sm:$0xff]
    %v962 = vld [vmem:[%s960 + $0x8] sm:$0xff]
    %v963 = vld [vmem:[%s960 + $0x10] sm:$0xff]
    %v964 = vld [vmem:[%s960 + $0x18] sm:$0xff]
    %965 = vmatprep.subr.mxu0 %v491
    %966 = vmatpush1.msra.mxu0 %v490
    %967 = vmatprep.subr.mxu0 %v487
    %968 = vmatpush1.msra.mxu0 %v486
    %969 = vmatprep.subr.mxu0 %v483
    %970 = vmatpush1.msra.mxu0 %v482
    %971 = vmatprep.subr.mxu0 %v479
    %972 = vmatpush1.msra.mxu0 %v478
    %973 = vmatprep.subr.mxu0 %v475
    %974 = vmatpush1.msra.mxu0 %v474
    %975 = vmatprep.subr.mxu0 %v471
    %976 = vmatpush1.msra.mxu0 %v470
    %977 = vmatprep.subr.mxu0 %v467
    %978 = vmatpush1.msra.mxu0 %v466
    %979 = vmatprep.subr.mxu0 %v463
    %980 = vmatpush1.msra.mxu0 %v462
    %981 = vmatprep.subr.mxu0 %v459
    %982 = vmatpush1.msra.mxu0 %v458
    %983 = vmatprep.subr.mxu0 %v455
    %984 = vmatpush1.msra.mxu0 %v454
    %985 = vmatprep.subr.mxu0 %v451
    %986 = vmatpush1.msra.mxu0 %v450
    %987 = vmatprep.subr.mxu0 %v447
    %988 = vmatpush1.msra.mxu0 %v446
    %989 = vmatprep.subr.mxu0 %v443
    %990 = vmatpush1.msra.mxu0 %v442
    %991 = vmatprep.subr.mxu0 %v439
    %992 = vmatpush1.msra.mxu0 %v438
    %993 = vmatprep.subr.mxu0 %v435
    %994 = vmatpush1.msra.mxu0 %v434
    %995 = vmatprep.subr.mxu0 %v431
    %996 = vmatpush1.msra.mxu0 %v430
    %997 = vmatprep.subr.mxu0 0.0
    %998 = vmatpush2.msra.mxu0 0.0
    %999 = vmatprep.subr.mxu0 0.0
    %1000 = vmatpush2.msra.mxu0 0.0
    %1001 = vmatprep.subr.mxu0 0.0
    %1002 = vmatpush2.msra.mxu0 0.0
    %1003 = vmatprep.subr.mxu0 0.0
    %1004 = vmatpush2.msra.mxu0 0.0
    %1005 = vmatprep.subr.mxu0 0.0
    %1006 = vmatpush2.msra.mxu0 0.0
    %1007 = vmatprep.subr.mxu0 0.0
    %1008 = vmatpush2.msra.mxu0 0.0
    %1009 = vmatprep.subr.mxu0 0.0
    %1010 = vmatpush2.msra.mxu0 0.0
    %1011 = vmatprep.subr.mxu0 0.0
    %1012 = vmatpush2.msra.mxu0 0.0
    %1013 = vmatprep.subr.mxu0 0.0
    %1014 = vmatpush2.msra.mxu0 0.0
    %1015 = vmatprep.subr.mxu0 0.0
    %1016 = vmatpush2.msra.mxu0 0.0
    %1017 = vmatprep.subr.mxu0 0.0
    %1018 = vmatpush2.msra.mxu0 0.0
    %1019 = vmatprep.subr.mxu0 0.0
    %1020 = vmatpush2.msra.mxu0 0.0
    %1021 = vmatprep.subr.mxu0 0.0
    %1022 = vmatpush2.msra.mxu0 0.0
    %1023 = vmatprep.subr.mxu0 0.0
    %1024 = vmatpush2.msra.mxu0 0.0
    %1025 = vmatprep.subr.mxu0 0.0
    %1026 = vmatpush2.msra.mxu0 0.0
    %1027 = vmatprep.subr.mxu0 0.0
    %1028 = vmatpush2.msra.mxu0 0.0
    %1029 = vmatprep.mubr.f32.mxu0 0.0
    %1030 = vmatmul.mubr.f32.gmra.mxu0 %v663
    %v1031 = vpop.f32.mrf.mxu0
    %v1032 = vadd.f32 0.0, %v1031
    %v1033 = vpop.f32.mrf.mxu0
    %v1034 = vadd.f32 0.0, %v1033
    %1035 = vdwg.mxu0
    %1036 = vmatprep.subr.mxu0 %v493
    %1037 = vmatpush1.msra.mxu0 %v492
    %1038 = vmatprep.subr.mxu0 %v489
    %1039 = vmatpush1.msra.mxu0 %v488
    %1040 = vmatprep.subr.mxu0 %v485
    %1041 = vmatpush1.msra.mxu0 %v484
    %1042 = vmatprep.subr.mxu0 %v481
    %1043 = vmatpush1.msra.mxu0 %v480
    %1044 = vmatprep.subr.mxu0 %v477
    %1045 = vmatpush1.msra.mxu0 %v476
    %1046 = vmatprep.subr.mxu0 %v473
    %1047 = vmatpush1.msra.mxu0 %v472
    %1048 = vmatprep.subr.mxu0 %v469
    %1049 = vmatpush1.msra.mxu0 %v468
    %1050 = vmatprep.subr.mxu0 %v465
    %1051 = vmatpush1.msra.mxu0 %v464
    %1052 = vmatprep.subr.mxu0 %v461
    %1053 = vmatpush1.msra.mxu0 %v460
    %1054 = vmatprep.subr.mxu0 %v457
    %1055 = vmatpush1.msra.mxu0 %v456
    %1056 = vmatprep.subr.mxu0 %v453
    %1057 = vmatpush1.msra.mxu0 %v452
    %1058 = vmatprep.subr.mxu0 %v449
    %1059 = vmatpush1.msra.mxu0 %v448
    %1060 = vmatprep.subr.mxu0 %v445
    %1061 = vmatpush1.msra.mxu0 %v444
    %1062 = vmatprep.subr.mxu0 %v441
    %1063 = vmatpush1.msra.mxu0 %v440
    %1064 = vmatprep.subr.mxu0 %v437
    %1065 = vmatpush1.msra.mxu0 %v436
    %1066 = vmatprep.subr.mxu0 %v433
    %1067 = vmatpush1.msra.mxu0 %v432
    %1068 = vmatprep.subr.mxu0 0.0
    %1069 = vmatpush2.msra.mxu0 0.0
    %1070 = vmatprep.subr.mxu0 0.0
    %1071 = vmatpush2.msra.mxu0 0.0
    %1072 = vmatprep.subr.mxu0 0.0
    %1073 = vmatpush2.msra.mxu0 0.0
    %1074 = vmatprep.subr.mxu0 0.0
    %1075 = vmatpush2.msra.mxu0 0.0
    %1076 = vmatprep.subr.mxu0 0.0
    %1077 = vmatpush2.msra.mxu0 0.0
    %1078 = vmatprep.subr.mxu0 0.0
    %1079 = vmatpush2.msra.mxu0 0.0
    %1080 = vmatprep.subr.mxu0 0.0
    %1081 = vmatpush2.msra.mxu0 0.0
    %1082 = vmatprep.subr.mxu0 0.0
    %1083 = vmatpush2.msra.mxu0 0.0
    %1084 = vmatprep.subr.mxu0 0.0
    %1085 = vmatpush2.msra.mxu0 0.0
    %1086 = vmatprep.subr.mxu0 0.0
    %1087 = vmatpush2.msra.mxu0 0.0
    %1088 = vmatprep.subr.mxu0 0.0
    %1089 = vmatpush2.msra.mxu0 0.0
    %1090 = vmatprep.subr.mxu0 0.0
    %1091 = vmatpush2.msra.mxu0 0.0
    %1092 = vmatprep.subr.mxu0 0.0
    %1093 = vmatpush2.msra.mxu0 0.0
    %1094 = vmatprep.subr.mxu0 0.0
    %1095 = vmatpush2.msra.mxu0 0.0
    %1096 = vmatprep.subr.mxu0 0.0
    %1097 = vmatpush2.msra.mxu0 0.0
    %1098 = vmatprep.subr.mxu0 0.0
    %1099 = vmatpush2.msra.mxu0 0.0
    %1100 = vmatprep.mubr.f32.mxu0 0.0
    %1101 = vmatmul.mubr.f32.gmra.mxu0 %v663
    %v1102 = vpop.f32.mrf.mxu0
    %v1103 = vadd.f32 0.0, %v1102
    %v1104 = vpop.f32.mrf.mxu0
    %v1105 = vadd.f32 0.0, %v1104
    %1106 = vdwg.mxu0
    %v1107 = vadd.f32 %v961, %v1032
    %v1108 = vadd.f32 %v962, %v1034
    %v1109 = vadd.f32 %v963, %v1103
    %v1110 = vadd.f32 %v964, %v1105
    %v1111 = vxor.u32 %v1107, 2147483648
    %v1112 = vmul.f32 %v1111, 1.442695
    %v1113 = vpow.pop %v1112
    %v1114 = vadd.f32 %v1113, 1.0
    %v1115 = vrcp.pop %v1114
    %v1116 = vmul.f32 1.0, %v1115
    %v1117 = vxor.u32 %v1108, 2147483648
    %v1118 = vmul.f32 %v1117, 1.442695
    %v1119 = vpow.pop %v1118
    %v1120 = vadd.f32 %v1119, 1.0
    %v1121 = vrcp.pop %v1120
    %v1122 = vmul.f32 1.0, %v1121
    %v1123 = vtanh.pop %v1109
    %v1124 = vxor.u32 %v1110, 2147483648
    %v1125 = vmul.f32 %v1124, 1.442695
    %v1126 = vpow.pop %v1125
    %v1127 = vadd.f32 %v1126, 1.0
    %v1128 = vrcp.pop %v1127
    %v1129 = vmul.f32 1.0, %v1128
    %v1130 = vmul.f32 %v1122, %v661
    %v1131 = vmul.f32 %v1116, %v1123
    %v1132 = vadd.f32 %v1130, %v1131
    %v1133 = vtanh.pop %v1132
    %v1134 = vmul.f32 %v1129, %v1133
    %1135 = vmatprep.subr.mxu0 %v725
    %1136 = vmatpush1.msra.mxu0 %v724
    %1137 = vmatprep.subr.mxu0 %v721
    %1138 = vmatpush1.msra.mxu0 %v720
    %1139 = vmatprep.subr.mxu0 %v717
    %1140 = vmatpush1.msra.mxu0 %v716
    %1141 = vmatprep.subr.mxu0 %v713
    %1142 = vmatpush1.msra.mxu0 %v712
    %1143 = vmatprep.subr.mxu0 %v709
    %1144 = vmatpush1.msra.mxu0 %v708
    %1145 = vmatprep.subr.mxu0 %v705
    %1146 = vmatpush1.msra.mxu0 %v704
    %1147 = vmatprep.subr.mxu0 %v701
    %1148 = vmatpush1.msra.mxu0 %v700
    %1149 = vmatprep.subr.mxu0 %v697
    %1150 = vmatpush1.msra.mxu0 %v696
    %1151 = vmatprep.subr.mxu0 %v693
    %1152 = vmatpush1.msra.mxu0 %v692
    %1153 = vmatprep.subr.mxu0 %v689
    %1154 = vmatpush1.msra.mxu0 %v688
    %1155 = vmatprep.subr.mxu0 %v685
    %1156 = vmatpush1.msra.mxu0 %v684
    %1157 = vmatprep.subr.mxu0 %v681
    %1158 = vmatpush1.msra.mxu0 %v680
    %1159 = vmatprep.subr.mxu0 %v677
    %1160 = vmatpush1.msra.mxu0 %v676
    %1161 = vmatprep.subr.mxu0 %v673
    %1162 = vmatpush1.msra.mxu0 %v672
    %1163 = vmatprep.subr.mxu0 %v669
    %1164 = vmatpush1.msra.mxu0 %v668
    %1165 = vmatprep.subr.mxu0 %v665
    %1166 = vmatpush1.msra.mxu0 %v664
    %1167 = vmatprep.subr.mxu0 %v789
    %1168 = vmatpush2.msra.mxu0 %v788
    %1169 = vmatprep.subr.mxu0 %v785
    %1170 = vmatpush2.msra.mxu0 %v784
    %1171 = vmatprep.subr.mxu0 %v781
    %1172 = vmatpush2.msra.mxu0 %v780
    %1173 = vmatprep.subr.mxu0 %v777
    %1174 = vmatpush2.msra.mxu0 %v776
    %1175 = vmatprep.subr.mxu0 %v773
    %1176 = vmatpush2.msra.mxu0 %v772
    %1177 = vmatprep.subr.mxu0 %v769
    %1178 = vmatpush2.msra.mxu0 %v768
    %1179 = vmatprep.subr.mxu0 %v765
    %1180 = vmatpush2.msra.mxu0 %v764
    %1181 = vmatprep.subr.mxu0 %v761
    %1182 = vmatpush2.msra.mxu0 %v760
    %1183 = vmatprep.subr.mxu0 %v757
    %1184 = vmatpush2.msra.mxu0 %v756
    %1185 = vmatprep.subr.mxu0 %v753
    %1186 = vmatpush2.msra.mxu0 %v752
    %1187 = vmatprep.subr.mxu0 %v749
    %1188 = vmatpush2.msra.mxu0 %v748
    %1189 = vmatprep.subr.mxu0 %v745
    %1190 = vmatpush2.msra.mxu0 %v744
    %1191 = vmatprep.subr.mxu0 %v741
    %1192 = vmatpush2.msra.mxu0 %v740
    %1193 = vmatprep.subr.mxu0 %v737
    %1194 = vmatpush2.msra.mxu0 %v736
    %1195 = vmatprep.subr.mxu0 %v733
    %1196 = vmatpush2.msra.mxu0 %v732
    %1197 = vmatprep.subr.mxu0 %v729
    %1198 = vmatpush2.msra.mxu0 %v728
    %1199 = vmatprep.mubr.f32.mxu0 %v957
    %1200 = vmatmul.mubr.f32.gmra.mxu0 %v1134
    %v1201 = vpop.f32.mrf.mxu0
    %v1202 = vadd.f32 %v406, %v1201
    %v1203 = vpop.f32.mrf.mxu0
    %v1204 = vadd.f32 %v410, %v1203
    %1205 = vdwg.mxu0
    %1206 = vmatprep.subr.mxu0 %v727
    %1207 = vmatpush1.msra.mxu0 %v726
    %1208 = vmatprep.subr.mxu0 %v723
    %1209 = vmatpush1.msra.mxu0 %v722
    %1210 = vmatprep.subr.mxu0 %v719
    %1211 = vmatpush1.msra.mxu0 %v718
    %1212 = vmatprep.subr.mxu0 %v715
    %1213 = vmatpush1.msra.mxu0 %v714
    %1214 = vmatprep.subr.mxu0 %v711
    %1215 = vmatpush1.msra.mxu0 %v710
    %1216 = vmatprep.subr.mxu0 %v707
    %1217 = vmatpush1.msra.mxu0 %v706
    %1218 = vmatprep.subr.mxu0 %v703
    %1219 = vmatpush1.msra.mxu0 %v702
    %1220 = vmatprep.subr.mxu0 %v699
    %1221 = vmatpush1.msra.mxu0 %v698
    %1222 = vmatprep.subr.mxu0 %v695
    %1223 = vmatpush1.msra.mxu0 %v694
    %1224 = vmatprep.subr.mxu0 %v691
    %1225 = vmatpush1.msra.mxu0 %v690
    %1226 = vmatprep.subr.mxu0 %v687
    %1227 = vmatpush1.msra.mxu0 %v686
    %1228 = vmatprep.subr.mxu0 %v683
    %1229 = vmatpush1.msra.mxu0 %v682
    %1230 = vmatprep.subr.mxu0 %v679
    %1231 = vmatpush1.msra.mxu0 %v678
    %1232 = vmatprep.subr.mxu0 %v675
    %1233 = vmatpush1.msra.mxu0 %v674
    %1234 = vmatprep.subr.mxu0 %v671
    %1235 = vmatpush1.msra.mxu0 %v670
    %1236 = vmatprep.subr.mxu0 %v667
    %1237 = vmatpush1.msra.mxu0 %v666
    %1238 = vmatprep.subr.mxu0 %v791
    %1239 = vmatpush2.msra.mxu0 %v790
    %1240 = vmatprep.subr.mxu0 %v787
    %1241 = vmatpush2.msra.mxu0 %v786
    %1242 = vmatprep.subr.mxu0 %v783
    %1243 = vmatpush2.msra.mxu0 %v782
    %1244 = vmatprep.subr.mxu0 %v779
    %1245 = vmatpush2.msra.mxu0 %v778
    %1246 = vmatprep.subr.mxu0 %v775
    %1247 = vmatpush2.msra.mxu0 %v774
    %1248 = vmatprep.subr.mxu0 %v771
    %1249 = vmatpush2.msra.mxu0 %v770
    %1250 = vmatprep.subr.mxu0 %v767
    %1251 = vmatpush2.msra.mxu0 %v766
    %1252 = vmatprep.subr.mxu0 %v763
    %1253 = vmatpush2.msra.mxu0 %v762
    %1254 = vmatprep.subr.mxu0 %v759
    %1255 = vmatpush2.msra.mxu0 %v758
    %1256 = vmatprep.subr.mxu0 %v755
    %1257 = vmatpush2.msra.mxu0 %v754
    %1258 = vmatprep.subr.mxu0 %v751
    %1259 = vmatpush2.msra.mxu0 %v750
    %1260 = vmatprep.subr.mxu0 %v747
    %1261 = vmatpush2.msra.mxu0 %v746
    %1262 = vmatprep.subr.mxu0 %v743
    %1263 = vmatpush2.msra.mxu0 %v742
    %1264 = vmatprep.subr.mxu0 %v739
    %1265 = vmatpush2.msra.mxu0 %v738
    %1266 = vmatprep.subr.mxu0 %v735
    %1267 = vmatpush2.msra.mxu0 %v734
    %1268 = vmatprep.subr.mxu0 %v731
    %1269 = vmatpush2.msra.mxu0 %v730
    %1270 = vmatprep.mubr.f32.mxu0 %v957
    %1271 = vmatmul.mubr.f32.gmra.mxu0 %v1134
    %v1272 = vpop.f32.mrf.mxu0
    %v1273 = vadd.f32 %v414, %v1272
    %v1274 = vpop.f32.mrf.mxu0
    %v1275 = vadd.f32 %v418, %v1274
    %1276 = vdwg.mxu0
    %v1277 = vxor.u32 %v1202, 2147483648
    %v1278 = vmul.f32 %v1277, 1.442695
    %v1279 = vpow.pop %v1278
    %v1280 = vadd.f32 %v1279, 1.0
    %v1281 = vrcp.pop %v1280
    %v1282 = vmul.f32 1.0, %v1281
    %v1283 = vxor.u32 %v1204, 2147483648
    %v1284 = vmul.f32 %v1283, 1.442695
    %v1285 = vpow.pop %v1284
    %v1286 = vadd.f32 %v1285, 1.0
    %v1287 = vrcp.pop %v1286
    %v1288 = vmul.f32 1.0, %v1287
    %v1289 = vtanh.pop %v1273
    %v1290 = vxor.u32 %v1275, 2147483648
    %v1291 = vmul.f32 %v1290, 1.442695
    %v1292 = vpow.pop %v1291
    %v1293 = vadd.f32 %v1292, 1.0
    %v1294 = vrcp.pop %v1293
    %v1295 = vmul.f32 1.0, %v1294
    %v1296 = vmul.f32 %v1288, %v955
    %v1297 = vmul.f32 %v1282, %v1289
    %v1298 = vadd.f32 %v1296, %v1297
    %v1299 = vtanh.pop %v1298
    %v1300 = vmul.f32 %v1295, %v1299
    %s1301 = smul.u32 2, 4
    %s1302 = smul.addr %s1301, 8
    %s1303 = scalar_lea.vmem [#allocation2], %s1302
    %v1304 = vld [vmem:[%s1303] sm:$0xff]
    %v1305 = vld [vmem:[%s1303 + $0x8] sm:$0xff]
    %v1306 = vld [vmem:[%s1303 + $0x10] sm:$0xff]
    %v1307 = vld [vmem:[%s1303 + $0x18] sm:$0xff]
    %1308 = vmatprep.subr.mxu0 %v491
    %1309 = vmatpush1.msra.mxu0 %v490
    %1310 = vmatprep.subr.mxu0 %v487
    %1311 = vmatpush1.msra.mxu0 %v486
    %1312 = vmatprep.subr.mxu0 %v483
    %1313 = vmatpush1.msra.mxu0 %v482
    %1314 = vmatprep.subr.mxu0 %v479
    %1315 = vmatpush1.msra.mxu0 %v478
    %1316 = vmatprep.subr.mxu0 %v475
    %1317 = vmatpush1.msra.mxu0 %v474
    %1318 = vmatprep.subr.mxu0 %v471
    %1319 = vmatpush1.msra.mxu0 %v470
    %1320 = vmatprep.subr.mxu0 %v467
    %1321 = vmatpush1.msra.mxu0 %v466
    %1322 = vmatprep.subr.mxu0 %v463
    %1323 = vmatpush1.msra.mxu0 %v462
    %1324 = vmatprep.subr.mxu0 %v459
    %1325 = vmatpush1.msra.mxu0 %v458
    %1326 = vmatprep.subr.mxu0 %v455
    %1327 = vmatpush1.msra.mxu0 %v454
    %1328 = vmatprep.subr.mxu0 %v451
    %1329 = vmatpush1.msra.mxu0 %v450
    %1330 = vmatprep.subr.mxu0 %v447
    %1331 = vmatpush1.msra.mxu0 %v446
    %1332 = vmatprep.subr.mxu0 %v443
    %1333 = vmatpush1.msra.mxu0 %v442
    %1334 = vmatprep.subr.mxu0 %v439
    %1335 = vmatpush1.msra.mxu0 %v438
    %1336 = vmatprep.subr.mxu0 %v435
    %1337 = vmatpush1.msra.mxu0 %v434
    %1338 = vmatprep.subr.mxu0 %v431
    %1339 = vmatpush1.msra.mxu0 %v430
    %1340 = vmatprep.subr.mxu0 0.0
    %1341 = vmatpush2.msra.mxu0 0.0
    %1342 = vmatprep.subr.mxu0 0.0
    %1343 = vmatpush2.msra.mxu0 0.0
    %1344 = vmatprep.subr.mxu0 0.0
    %1345 = vmatpush2.msra.mxu0 0.0
    %1346 = vmatprep.subr.mxu0 0.0
    %1347 = vmatpush2.msra.mxu0 0.0
    %1348 = vmatprep.subr.mxu0 0.0
    %1349 = vmatpush2.msra.mxu0 0.0
    %1350 = vmatprep.subr.mxu0 0.0
    %1351 = vmatpush2.msra.mxu0 0.0
    %1352 = vmatprep.subr.mxu0 0.0
    %1353 = vmatpush2.msra.mxu0 0.0
    %1354 = vmatprep.subr.mxu0 0.0
    %1355 = vmatpush2.msra.mxu0 0.0
    %1356 = vmatprep.subr.mxu0 0.0
    %1357 = vmatpush2.msra.mxu0 0.0
    %1358 = vmatprep.subr.mxu0 0.0
    %1359 = vmatpush2.msra.mxu0 0.0
    %1360 = vmatprep.subr.mxu0 0.0
    %1361 = vmatpush2.msra.mxu0 0.0
    %1362 = vmatprep.subr.mxu0 0.0
    %1363 = vmatpush2.msra.mxu0 0.0
    %1364 = vmatprep.subr.mxu0 0.0
    %1365 = vmatpush2.msra.mxu0 0.0
    %1366 = vmatprep.subr.mxu0 0.0
    %1367 = vmatpush2.msra.mxu0 0.0
    %1368 = vmatprep.subr.mxu0 0.0
    %1369 = vmatpush2.msra.mxu0 0.0
    %1370 = vmatprep.subr.mxu0 0.0
    %1371 = vmatpush2.msra.mxu0 0.0
    %1372 = vmatprep.mubr.f32.mxu0 0.0
    %1373 = vmatmul.mubr.f32.gmra.mxu0 %v1134
    %v1374 = vpop.f32.mrf.mxu0
    %v1375 = vadd.f32 0.0, %v1374
    %v1376 = vpop.f32.mrf.mxu0
    %v1377 = vadd.f32 0.0, %v1376
    %1378 = vdwg.mxu0
    %1379 = vmatprep.subr.mxu0 %v493
    %1380 = vmatpush1.msra.mxu0 %v492
    %1381 = vmatprep.subr.mxu0 %v489
    %1382 = vmatpush1.msra.mxu0 %v488
    %1383 = vmatprep.subr.mxu0 %v485
    %1384 = vmatpush1.msra.mxu0 %v484
    %1385 = vmatprep.subr.mxu0 %v481
    %1386 = vmatpush1.msra.mxu0 %v480
    %1387 = vmatprep.subr.mxu0 %v477
    %1388 = vmatpush1.msra.mxu0 %v476
    %1389 = vmatprep.subr.mxu0 %v473
    %1390 = vmatpush1.msra.mxu0 %v472
    %1391 = vmatprep.subr.mxu0 %v469
    %1392 = vmatpush1.msra.mxu0 %v468
    %1393 = vmatprep.subr.mxu0 %v465
    %1394 = vmatpush1.msra.mxu0 %v464
    %1395 = vmatprep.subr.mxu0 %v461
    %1396 = vmatpush1.msra.mxu0 %v460
    %1397 = vmatprep.subr.mxu0 %v457
    %1398 = vmatpush1.msra.mxu0 %v456
    %1399 = vmatprep.subr.mxu0 %v453
    %1400 = vmatpush1.msra.mxu0 %v452
    %1401 = vmatprep.subr.mxu0 %v449
    %1402 = vmatpush1.msra.mxu0 %v448
    %1403 = vmatprep.subr.mxu0 %v445
    %1404 = vmatpush1.msra.mxu0 %v444
    %1405 = vmatprep.subr.mxu0 %v441
    %1406 = vmatpush1.msra.mxu0 %v440
    %1407 = vmatprep.subr.mxu0 %v437
    %1408 = vmatpush1.msra.mxu0 %v436
    %1409 = vmatprep.subr.mxu0 %v433
    %1410 = vmatpush1.msra.mxu0 %v432
    %1411 = vmatprep.subr.mxu0 0.0
    %1412 = vmatpush2.msra.mxu0 0.0
    %1413 = vmatprep.subr.mxu0 0.0
    %1414 = vmatpush2.msra.mxu0 0.0
    %1415 = vmatprep.subr.mxu0 0.0
    %1416 = vmatpush2.msra.mxu0 0.0
    %1417 = vmatprep.subr.mxu0 0.0
    %1418 = vmatpush2.msra.mxu0 0.0
    %1419 = vmatprep.subr.mxu0 0.0
    %1420 = vmatpush2.msra.mxu0 0.0
    %1421 = vmatprep.subr.mxu0 0.0
    %1422 = vmatpush2.msra.mxu0 0.0
    %1423 = vmatprep.subr.mxu0 0.0
    %1424 = vmatpush2.msra.mxu0 0.0
    %1425 = vmatprep.subr.mxu0 0.0
    %1426 = vmatpush2.msra.mxu0 0.0
    %1427 = vmatprep.subr.mxu0 0.0
    %1428 = vmatpush2.msra.mxu0 0.0
    %1429 = vmatprep.subr.mxu0 0.0
    %1430 = vmatpush2.msra.mxu0 0.0
    %1431 = vmatprep.subr.mxu0 0.0
    %1432 = vmatpush2.msra.mxu0 0.0
    %1433 = vmatprep.subr.mxu0 0.0
    %1434 = vmatpush2.msra.mxu0 0.0
    %1435 = vmatprep.subr.mxu0 0.0
    %1436 = vmatpush2.msra.mxu0 0.0
    %1437 = vmatprep.subr.mxu0 0.0
    %1438 = vmatpush2.msra.mxu0 0.0
    %1439 = vmatprep.subr.mxu0 0.0
    %1440 = vmatpush2.msra.mxu0 0.0
    %1441 = vmatprep.subr.mxu0 0.0
    %1442 = vmatpush2.msra.mxu0 0.0
    %1443 = vmatprep.mubr.f32.mxu0 0.0
    %1444 = vmatmul.mubr.f32.gmra.mxu0 %v1134
    %v1445 = vpop.f32.mrf.mxu0
    %v1446 = vadd.f32 0.0, %v1445
    %v1447 = vpop.f32.mrf.mxu0
    %v1448 = vadd.f32 0.0, %v1447
    %1449 = vdwg.mxu0
    %v1450 = vadd.f32 %v1304, %v1375
    %v1451 = vadd.f32 %v1305, %v1377
    %v1452 = vadd.f32 %v1306, %v1446
    %v1453 = vadd.f32 %v1307, %v1448
    %v1454 = vxor.u32 %v1450, 2147483648
    %v1455 = vmul.f32 %v1454, 1.442695
    %v1456 = vpow.pop %v1455
    %v1457 = vadd.f32 %v1456, 1.0
    %v1458 = vrcp.pop %v1457
    %v1459 = vmul.f32 1.0, %v1458
    %v1460 = vxor.u32 %v1451, 2147483648
    %v1461 = vmul.f32 %v1460, 1.442695
    %v1462 = vpow.pop %v1461
    %v1463 = vadd.f32 %v1462, 1.0
    %v1464 = vrcp.pop %v1463
    %v1465 = vmul.f32 1.0, %v1464
    %v1466 = vtanh.pop %v1452
    %v1467 = vxor.u32 %v1453, 2147483648
    %v1468 = vmul.f32 %v1467, 1.442695
    %v1469 = vpow.pop %v1468
    %v1470 = vadd.f32 %v1469, 1.0
    %v1471 = vrcp.pop %v1470
    %v1472 = vmul.f32 1.0, %v1471
    %v1473 = vmul.f32 %v1465, %v1132
    %v1474 = vmul.f32 %v1459, %v1466
    %v1475 = vadd.f32 %v1473, %v1474
    %v1476 = vtanh.pop %v1475
    %v1477 = vmul.f32 %v1472, %v1476
    %1478 = vmatprep.subr.mxu0 %v725
    %1479 = vmatpush1.msra.mxu0 %v724
    %1480 = vmatprep.subr.mxu0 %v721
    %1481 = vmatpush1.msra.mxu0 %v720
    %1482 = vmatprep.subr.mxu0 %v717
    %1483 = vmatpush1.msra.mxu0 %v716
    %1484 = vmatprep.subr.mxu0 %v713
    %1485 = vmatpush1.msra.mxu0 %v712
    %1486 = vmatprep.subr.mxu0 %v709
    %1487 = vmatpush1.msra.mxu0 %v708
    %1488 = vmatprep.subr.mxu0 %v705
    %1489 = vmatpush1.msra.mxu0 %v704
    %1490 = vmatprep.subr.mxu0 %v701
    %1491 = vmatpush1.msra.mxu0 %v700
    %1492 = vmatprep.subr.mxu0 %v697
    %1493 = vmatpush1.msra.mxu0 %v696
    %1494 = vmatprep.subr.mxu0 %v693
    %1495 = vmatpush1.msra.mxu0 %v692
    %1496 = vmatprep.subr.mxu0 %v689
    %1497 = vmatpush1.msra.mxu0 %v688
    %1498 = vmatprep.subr.mxu0 %v685
    %1499 = vmatpush1.msra.mxu0 %v684
    %1500 = vmatprep.subr.mxu0 %v681
    %1501 = vmatpush1.msra.mxu0 %v680
    %1502 = vmatprep.subr.mxu0 %v677
    %1503 = vmatpush1.msra.mxu0 %v676
    %1504 = vmatprep.subr.mxu0 %v673
    %1505 = vmatpush1.msra.mxu0 %v672
    %1506 = vmatprep.subr.mxu0 %v669
    %1507 = vmatpush1.msra.mxu0 %v668
    %1508 = vmatprep.subr.mxu0 %v665
    %1509 = vmatpush1.msra.mxu0 %v664
    %1510 = vmatprep.subr.mxu0 %v789
    %1511 = vmatpush2.msra.mxu0 %v788
    %1512 = vmatprep.subr.mxu0 %v785
    %1513 = vmatpush2.msra.mxu0 %v784
    %1514 = vmatprep.subr.mxu0 %v781
    %1515 = vmatpush2.msra.mxu0 %v780
    %1516 = vmatprep.subr.mxu0 %v777
    %1517 = vmatpush2.msra.mxu0 %v776
    %1518 = vmatprep.subr.mxu0 %v773
    %1519 = vmatpush2.msra.mxu0 %v772
    %1520 = vmatprep.subr.mxu0 %v769
    %1521 = vmatpush2.msra.mxu0 %v768
    %1522 = vmatprep.subr.mxu0 %v765
    %1523 = vmatpush2.msra.mxu0 %v764
    %1524 = vmatprep.subr.mxu0 %v761
    %1525 = vmatpush2.msra.mxu0 %v760
    %1526 = vmatprep.subr.mxu0 %v757
    %1527 = vmatpush2.msra.mxu0 %v756
    %1528 = vmatprep.subr.mxu0 %v753
    %1529 = vmatpush2.msra.mxu0 %v752
    %1530 = vmatprep.subr.mxu0 %v749
    %1531 = vmatpush2.msra.mxu0 %v748
    %1532 = vmatprep.subr.mxu0 %v745
    %1533 = vmatpush2.msra.mxu0 %v744
    %1534 = vmatprep.subr.mxu0 %v741
    %1535 = vmatpush2.msra.mxu0 %v740
    %1536 = vmatprep.subr.mxu0 %v737
    %1537 = vmatpush2.msra.mxu0 %v736
    %1538 = vmatprep.subr.mxu0 %v733
    %1539 = vmatpush2.msra.mxu0 %v732
    %1540 = vmatprep.subr.mxu0 %v729
    %1541 = vmatpush2.msra.mxu0 %v728
    %1542 = vmatprep.mubr.f32.mxu0 %v1300
    %1543 = vmatmul.mubr.f32.gmra.mxu0 %v1477
    %v1544 = vpop.f32.mrf.mxu0
    %v1545 = vadd.f32 %v406, %v1544
    %v1546 = vpop.f32.mrf.mxu0
    %v1547 = vadd.f32 %v410, %v1546
    %1548 = vdwg.mxu0
    %1549 = vmatprep.subr.mxu0 %v727
    %1550 = vmatpush1.msra.mxu0 %v726
    %1551 = vmatprep.subr.mxu0 %v723
    %1552 = vmatpush1.msra.mxu0 %v722
    %1553 = vmatprep.subr.mxu0 %v719
    %1554 = vmatpush1.msra.mxu0 %v718
    %1555 = vmatprep.subr.mxu0 %v715
    %1556 = vmatpush1.msra.mxu0 %v714
    %1557 = vmatprep.subr.mxu0 %v711
    %1558 = vmatpush1.msra.mxu0 %v710
    %1559 = vmatprep.subr.mxu0 %v707
    %1560 = vmatpush1.msra.mxu0 %v706
    %1561 = vmatprep.subr.mxu0 %v703
    %1562 = vmatpush1.msra.mxu0 %v702
    %1563 = vmatprep.subr.mxu0 %v699
    %1564 = vmatpush1.msra.mxu0 %v698
    %1565 = vmatprep.subr.mxu0 %v695
    %1566 = vmatpush1.msra.mxu0 %v694
    %1567 = vmatprep.subr.mxu0 %v691
    %1568 = vmatpush1.msra.mxu0 %v690
    %1569 = vmatprep.subr.mxu0 %v687
    %1570 = vmatpush1.msra.mxu0 %v686
    %1571 = vmatprep.subr.mxu0 %v683
    %1572 = vmatpush1.msra.mxu0 %v682
    %1573 = vmatprep.subr.mxu0 %v679
    %1574 = vmatpush1.msra.mxu0 %v678
    %1575 = vmatprep.subr.mxu0 %v675
    %1576 = vmatpush1.msra.mxu0 %v674
    %1577 = vmatprep.subr.mxu0 %v671
    %1578 = vmatpush1.msra.mxu0 %v670
    %1579 = vmatprep.subr.mxu0 %v667
    %1580 = vmatpush1.msra.mxu0 %v666
    %1581 = vmatprep.subr.mxu0 %v791
    %1582 = vmatpush2.msra.mxu0 %v790
    %1583 = vmatprep.subr.mxu0 %v787
    %1584 = vmatpush2.msra.mxu0 %v786
    %1585 = vmatprep.subr.mxu0 %v783
    %1586 = vmatpush2.msra.mxu0 %v782
    %1587 = vmatprep.subr.mxu0 %v779
    %1588 = vmatpush2.msra.mxu0 %v778
    %1589 = vmatprep.subr.mxu0 %v775
    %1590 = vmatpush2.msra.mxu0 %v774
    %1591 = vmatprep.subr.mxu0 %v771
    %1592 = vmatpush2.msra.mxu0 %v770
    %1593 = vmatprep.subr.mxu0 %v767
    %1594 = vmatpush2.msra.mxu0 %v766
    %1595 = vmatprep.subr.mxu0 %v763
    %1596 = vmatpush2.msra.mxu0 %v762
    %1597 = vmatprep.subr.mxu0 %v759
    %1598 = vmatpush2.msra.mxu0 %v758
    %1599 = vmatprep.subr.mxu0 %v755
    %1600 = vmatpush2.msra.mxu0 %v754
    %1601 = vmatprep.subr.mxu0 %v751
    %1602 = vmatpush2.msra.mxu0 %v750
    %1603 = vmatprep.subr.mxu0 %v747
    %1604 = vmatpush2.msra.mxu0 %v746
    %1605 = vmatprep.subr.mxu0 %v743
    %1606 = vmatpush2.msra.mxu0 %v742
    %1607 = vmatprep.subr.mxu0 %v739
    %1608 = vmatpush2.msra.mxu0 %v738
    %1609 = vmatprep.subr.mxu0 %v735
    %1610 = vmatpush2.msra.mxu0 %v734
    %1611 = vmatprep.subr.mxu0 %v731
    %1612 = vmatpush2.msra.mxu0 %v730
    %1613 = vmatprep.mubr.f32.mxu0 %v1300
    %1614 = vmatmul.mubr.f32.gmra.mxu0 %v1477
    %v1615 = vpop.f32.mrf.mxu0
    %v1616 = vadd.f32 %v414, %v1615
    %v1617 = vpop.f32.mrf.mxu0
    %v1618 = vadd.f32 %v418, %v1617
    %1619 = vdwg.mxu0
    %v1620 = vxor.u32 %v1545, 2147483648
    %v1621 = vmul.f32 %v1620, 1.442695
    %v1622 = vpow.pop %v1621
    %v1623 = vadd.f32 %v1622, 1.0
    %v1624 = vrcp.pop %v1623
    %v1625 = vmul.f32 1.0, %v1624
    %v1626 = vxor.u32 %v1547, 2147483648
    %v1627 = vmul.f32 %v1626, 1.442695
    %v1628 = vpow.pop %v1627
    %v1629 = vadd.f32 %v1628, 1.0
    %v1630 = vrcp.pop %v1629
    %v1631 = vmul.f32 1.0, %v1630
    %v1632 = vtanh.pop %v1616
    %v1633 = vxor.u32 %v1618, 2147483648
    %v1634 = vmul.f32 %v1633, 1.442695
    %v1635 = vpow.pop %v1634
    %v1636 = vadd.f32 %v1635, 1.0
    %v1637 = vrcp.pop %v1636
    %v1638 = vmul.f32 1.0, %v1637
    %v1639 = vmul.f32 %v1631, %v1298
    %v1640 = vmul.f32 %v1625, %v1632
    %v1641 = vadd.f32 %v1639, %v1640
    %v1642 = vtanh.pop %v1641
    %v1643 = vmul.f32 %v1638, %v1642
    %s1644 = smul.u32 3, 4
    %s1645 = smul.addr %s1644, 8
    %s1646 = scalar_lea.vmem [#allocation2], %s1645
    %v1647 = vld [vmem:[%s1646] sm:$0xff]
    %v1648 = vld [vmem:[%s1646 + $0x8] sm:$0xff]
    %v1649 = vld [vmem:[%s1646 + $0x10] sm:$0xff]
    %v1650 = vld [vmem:[%s1646 + $0x18] sm:$0xff]
    %1651 = vmatprep.subr.mxu0 %v491
    %1652 = vmatpush1.msra.mxu0 %v490
    %1653 = vmatprep.subr.mxu0 %v487
    %1654 = vmatpush1.msra.mxu0 %v486
    %1655 = vmatprep.subr.mxu0 %v483
    %1656 = vmatpush1.msra.mxu0 %v482
    %1657 = vmatprep.subr.mxu0 %v479
    %1658 = vmatpush1.msra.mxu0 %v478
    %1659 = vmatprep.subr.mxu0 %v475
    %1660 = vmatpush1.msra.mxu0 %v474
    %1661 = vmatprep.subr.mxu0 %v471
    %1662 = vmatpush1.msra.mxu0 %v470
    %1663 = vmatprep.subr.mxu0 %v467
    %1664 = vmatpush1.msra.mxu0 %v466
    %1665 = vmatprep.subr.mxu0 %v463
    %1666 = vmatpush1.msra.mxu0 %v462
    %1667 = vmatprep.subr.mxu0 %v459
    %1668 = vmatpush1.msra.mxu0 %v458
    %1669 = vmatprep.subr.mxu0 %v455
    %1670 = vmatpush1.msra.mxu0 %v454
    %1671 = vmatprep.subr.mxu0 %v451
    %1672 = vmatpush1.msra.mxu0 %v450
    %1673 = vmatprep.subr.mxu0 %v447
    %1674 = vmatpush1.msra.mxu0 %v446
    %1675 = vmatprep.subr.mxu0 %v443
    %1676 = vmatpush1.msra.mxu0 %v442
    %1677 = vmatprep.subr.mxu0 %v439
    %1678 = vmatpush1.msra.mxu0 %v438
    %1679 = vmatprep.subr.mxu0 %v435
    %1680 = vmatpush1.msra.mxu0 %v434
    %1681 = vmatprep.subr.mxu0 %v431
    %1682 = vmatpush1.msra.mxu0 %v430
    %1683 = vmatprep.subr.mxu0 0.0
    %1684 = vmatpush2.msra.mxu0 0.0
    %1685 = vmatprep.subr.mxu0 0.0
    %1686 = vmatpush2.msra.mxu0 0.0
    %1687 = vmatprep.subr.mxu0 0.0
    %1688 = vmatpush2.msra.mxu0 0.0
    %1689 = vmatprep.subr.mxu0 0.0
    %1690 = vmatpush2.msra.mxu0 0.0
    %1691 = vmatprep.subr.mxu0 0.0
    %1692 = vmatpush2.msra.mxu0 0.0
    %1693 = vmatprep.subr.mxu0 0.0
    %1694 = vmatpush2.msra.mxu0 0.0
    %1695 = vmatprep.subr.mxu0 0.0
    %1696 = vmatpush2.msra.mxu0 0.0
    %1697 = vmatprep.subr.mxu0 0.0
    %1698 = vmatpush2.msra.mxu0 0.0
    %1699 = vmatprep.subr.mxu0 0.0
    %1700 = vmatpush2.msra.mxu0 0.0
    %1701 = vmatprep.subr.mxu0 0.0
    %1702 = vmatpush2.msra.mxu0 0.0
    %1703 = vmatprep.subr.mxu0 0.0
    %1704 = vmatpush2.msra.mxu0 0.0
    %1705 = vmatprep.subr.mxu0 0.0
    %1706 = vmatpush2.msra.mxu0 0.0
    %1707 = vmatprep.subr.mxu0 0.0
    %1708 = vmatpush2.msra.mxu0 0.0
    %1709 = vmatprep.subr.mxu0 0.0
    %1710 = vmatpush2.msra.mxu0 0.0
    %1711 = vmatprep.subr.mxu0 0.0
    %1712 = vmatpush2.msra.mxu0 0.0
    %1713 = vmatprep.subr.mxu0 0.0
    %1714 = vmatpush2.msra.mxu0 0.0
    %1715 = vmatprep.mubr.f32.mxu0 0.0
    %1716 = vmatmul.mubr.f32.gmra.mxu0 %v1477
    %v1717 = vpop.f32.mrf.mxu0
    %v1718 = vadd.f32 0.0, %v1717
    %v1719 = vpop.f32.mrf.mxu0
    %v1720 = vadd.f32 0.0, %v1719
    %1721 = vdwg.mxu0
    %1722 = vmatprep.subr.mxu0 %v493
    %1723 = vmatpush1.msra.mxu0 %v492
    %1724 = vmatprep.subr.mxu0 %v489
    %1725 = vmatpush1.msra.mxu0 %v488
    %1726 = vmatprep.subr.mxu0 %v485
    %1727 = vmatpush1.msra.mxu0 %v484
    %1728 = vmatprep.subr.mxu0 %v481
    %1729 = vmatpush1.msra.mxu0 %v480
    %1730 = vmatprep.subr.mxu0 %v477
    %1731 = vmatpush1.msra.mxu0 %v476
    %1732 = vmatprep.subr.mxu0 %v473
    %1733 = vmatpush1.msra.mxu0 %v472
    %1734 = vmatprep.subr.mxu0 %v469
    %1735 = vmatpush1.msra.mxu0 %v468
    %1736 = vmatprep.subr.mxu0 %v465
    %1737 = vmatpush1.msra.mxu0 %v464
    %1738 = vmatprep.subr.mxu0 %v461
    %1739 = vmatpush1.msra.mxu0 %v460
    %1740 = vmatprep.subr.mxu0 %v457
    %1741 = vmatpush1.msra.mxu0 %v456
    %1742 = vmatprep.subr.mxu0 %v453
    %1743 = vmatpush1.msra.mxu0 %v452
    %1744 = vmatprep.subr.mxu0 %v449
    %1745 = vmatpush1.msra.mxu0 %v448
    %1746 = vmatprep.subr.mxu0 %v445
    %1747 = vmatpush1.msra.mxu0 %v444
    %1748 = vmatprep.subr.mxu0 %v441
    %1749 = vmatpush1.msra.mxu0 %v440
    %1750 = vmatprep.subr.mxu0 %v437
    %1751 = vmatpush1.msra.mxu0 %v436
    %1752 = vmatprep.subr.mxu0 %v433
    %1753 = vmatpush1.msra.mxu0 %v432
    %1754 = vmatprep.subr.mxu0 0.0
    %1755 = vmatpush2.msra.mxu0 0.0
    %1756 = vmatprep.subr.mxu0 0.0
    %1757 = vmatpush2.msra.mxu0 0.0
    %1758 = vmatprep.subr.mxu0 0.0
    %1759 = vmatpush2.msra.mxu0 0.0
    %1760 = vmatprep.subr.mxu0 0.0
    %1761 = vmatpush2.msra.mxu0 0.0
    %1762 = vmatprep.subr.mxu0 0.0
    %1763 = vmatpush2.msra.mxu0 0.0
    %1764 = vmatprep.subr.mxu0 0.0
    %1765 = vmatpush2.msra.mxu0 0.0
    %1766 = vmatprep.subr.mxu0 0.0
    %1767 = vmatpush2.msra.mxu0 0.0
    %1768 = vmatprep.subr.mxu0 0.0
    %1769 = vmatpush2.msra.mxu0 0.0
    %1770 = vmatprep.subr.mxu0 0.0
    %1771 = vmatpush2.msra.mxu0 0.0
    %1772 = vmatprep.subr.mxu0 0.0
    %1773 = vmatpush2.msra.mxu0 0.0
    %1774 = vmatprep.subr.mxu0 0.0
    %1775 = vmatpush2.msra.mxu0 0.0
    %1776 = vmatprep.subr.mxu0 0.0
    %1777 = vmatpush2.msra.mxu0 0.0
    %1778 = vmatprep.subr.mxu0 0.0
    %1779 = vmatpush2.msra.mxu0 0.0
    %1780 = vmatprep.subr.mxu0 0.0
    %1781 = vmatpush2.msra.mxu0 0.0
    %1782 = vmatprep.subr.mxu0 0.0
    %1783 = vmatpush2.msra.mxu0 0.0
    %1784 = vmatprep.subr.mxu0 0.0
    %1785 = vmatpush2.msra.mxu0 0.0
    %1786 = vmatprep.mubr.f32.mxu0 0.0
    %1787 = vmatmul.mubr.f32.gmra.mxu0 %v1477
    %v1788 = vpop.f32.mrf.mxu0
    %v1789 = vadd.f32 0.0, %v1788
    %v1790 = vpop.f32.mrf.mxu0
    %v1791 = vadd.f32 0.0, %v1790
    %1792 = vdwg.mxu0
    %v1793 = vadd.f32 %v1647, %v1718
    %v1794 = vadd.f32 %v1648, %v1720
    %v1795 = vadd.f32 %v1649, %v1789
    %v1796 = vadd.f32 %v1650, %v1791
    %v1797 = vxor.u32 %v1793, 2147483648
    %v1798 = vmul.f32 %v1797, 1.442695
    %v1799 = vpow.pop %v1798
    %v1800 = vadd.f32 %v1799, 1.0
    %v1801 = vrcp.pop %v1800
    %v1802 = vmul.f32 1.0, %v1801
    %v1803 = vxor.u32 %v1794, 2147483648
    %v1804 = vmul.f32 %v1803, 1.442695
    %v1805 = vpow.pop %v1804
    %v1806 = vadd.f32 %v1805, 1.0
    %v1807 = vrcp.pop %v1806
    %v1808 = vmul.f32 1.0, %v1807
    %v1809 = vtanh.pop %v1795
    %v1810 = vxor.u32 %v1796, 2147483648
    %v1811 = vmul.f32 %v1810, 1.442695
    %v1812 = vpow.pop %v1811
    %v1813 = vadd.f32 %v1812, 1.0
    %v1814 = vrcp.pop %v1813
    %v1815 = vmul.f32 1.0, %v1814
    %v1816 = vmul.f32 %v1808, %v1475
    %v1817 = vmul.f32 %v1802, %v1809
    %v1818 = vadd.f32 %v1816, %v1817
    %v1819 = vtanh.pop %v1818
    %v1820 = vmul.f32 %v1815, %v1819
    %1821 = vmatprep.subr.mxu0 %v725
    %1822 = vmatpush1.msra.mxu0 %v724
    %1823 = vmatprep.subr.mxu0 %v721
    %1824 = vmatpush1.msra.mxu0 %v720
    %1825 = vmatprep.subr.mxu0 %v717
    %1826 = vmatpush1.msra.mxu0 %v716
    %1827 = vmatprep.subr.mxu0 %v713
    %1828 = vmatpush1.msra.mxu0 %v712
    %1829 = vmatprep.subr.mxu0 %v709
    %1830 = vmatpush1.msra.mxu0 %v708
    %1831 = vmatprep.subr.mxu0 %v705
    %1832 = vmatpush1.msra.mxu0 %v704
    %1833 = vmatprep.subr.mxu0 %v701
    %1834 = vmatpush1.msra.mxu0 %v700
    %1835 = vmatprep.subr.mxu0 %v697
    %1836 = vmatpush1.msra.mxu0 %v696
    %1837 = vmatprep.subr.mxu0 %v693
    %1838 = vmatpush1.msra.mxu0 %v692
    %1839 = vmatprep.subr.mxu0 %v689
    %1840 = vmatpush1.msra.mxu0 %v688
    %1841 = vmatprep.subr.mxu0 %v685
    %1842 = vmatpush1.msra.mxu0 %v684
    %1843 = vmatprep.subr.mxu0 %v681
    %1844 = vmatpush1.msra.mxu0 %v680
    %1845 = vmatprep.subr.mxu0 %v677
    %1846 = vmatpush1.msra.mxu0 %v676
    %1847 = vmatprep.subr.mxu0 %v673
    %1848 = vmatpush1.msra.mxu0 %v672
    %1849 = vmatprep.subr.mxu0 %v669
    %1850 = vmatpush1.msra.mxu0 %v668
    %1851 = vmatprep.subr.mxu0 %v665
    %1852 = vmatpush1.msra.mxu0 %v664
    %1853 = vmatprep.subr.mxu0 %v789
    %1854 = vmatpush2.msra.mxu0 %v788
    %1855 = vmatprep.subr.mxu0 %v785
    %1856 = vmatpush2.msra.mxu0 %v784
    %1857 = vmatprep.subr.mxu0 %v781
    %1858 = vmatpush2.msra.mxu0 %v780
    %1859 = vmatprep.subr.mxu0 %v777
    %1860 = vmatpush2.msra.mxu0 %v776
    %1861 = vmatprep.subr.mxu0 %v773
    %1862 = vmatpush2.msra.mxu0 %v772
    %1863 = vmatprep.subr.mxu0 %v769
    %1864 = vmatpush2.msra.mxu0 %v768
    %1865 = vmatprep.subr.mxu0 %v765
    %1866 = vmatpush2.msra.mxu0 %v764
    %1867 = vmatprep.subr.mxu0 %v761
    %1868 = vmatpush2.msra.mxu0 %v760
    %1869 = vmatprep.subr.mxu0 %v757
    %1870 = vmatpush2.msra.mxu0 %v756
    %1871 = vmatprep.subr.mxu0 %v753
    %1872 = vmatpush2.msra.mxu0 %v752
    %1873 = vmatprep.subr.mxu0 %v749
    %1874 = vmatpush2.msra.mxu0 %v748
    %1875 = vmatprep.subr.mxu0 %v745
    %1876 = vmatpush2.msra.mxu0 %v744
    %1877 = vmatprep.subr.mxu0 %v741
    %1878 = vmatpush2.msra.mxu0 %v740
    %1879 = vmatprep.subr.mxu0 %v737
    %1880 = vmatpush2.msra.mxu0 %v736
    %1881 = vmatprep.subr.mxu0 %v733
    %1882 = vmatpush2.msra.mxu0 %v732
    %1883 = vmatprep.subr.mxu0 %v729
    %1884 = vmatpush2.msra.mxu0 %v728
    %1885 = vmatprep.mubr.f32.mxu0 %v1643
    %1886 = vmatmul.mubr.f32.gmra.mxu0 %v1820
    %v1887 = vpop.f32.mrf.mxu0
    %v1888 = vadd.f32 %v406, %v1887
    %v1889 = vpop.f32.mrf.mxu0
    %v1890 = vadd.f32 %v410, %v1889
    %1891 = vdwg.mxu0
    %1892 = vmatprep.subr.mxu0 %v727
    %1893 = vmatpush1.msra.mxu0 %v726
    %1894 = vmatprep.subr.mxu0 %v723
    %1895 = vmatpush1.msra.mxu0 %v722
    %1896 = vmatprep.subr.mxu0 %v719
    %1897 = vmatpush1.msra.mxu0 %v718
    %1898 = vmatprep.subr.mxu0 %v715
    %1899 = vmatpush1.msra.mxu0 %v714
    %1900 = vmatprep.subr.mxu0 %v711
    %1901 = vmatpush1.msra.mxu0 %v710
    %1902 = vmatprep.subr.mxu0 %v707
    %1903 = vmatpush1.msra.mxu0 %v706
    %1904 = vmatprep.subr.mxu0 %v703
    %1905 = vmatpush1.msra.mxu0 %v702
    %1906 = vmatprep.subr.mxu0 %v699
    %1907 = vmatpush1.msra.mxu0 %v698
    %1908 = vmatprep.subr.mxu0 %v695
    %1909 = vmatpush1.msra.mxu0 %v694
    %1910 = vmatprep.subr.mxu0 %v691
    %1911 = vmatpush1.msra.mxu0 %v690
    %1912 = vmatprep.subr.mxu0 %v687
    %1913 = vmatpush1.msra.mxu0 %v686
    %1914 = vmatprep.subr.mxu0 %v683
    %1915 = vmatpush1.msra.mxu0 %v682
    %1916 = vmatprep.subr.mxu0 %v679
    %1917 = vmatpush1.msra.mxu0 %v678
    %1918 = vmatprep.subr.mxu0 %v675
    %1919 = vmatpush1.msra.mxu0 %v674
    %1920 = vmatprep.subr.mxu0 %v671
    %1921 = vmatpush1.msra.mxu0 %v670
    %1922 = vmatprep.subr.mxu0 %v667
    %1923 = vmatpush1.msra.mxu0 %v666
    %1924 = vmatprep.subr.mxu0 %v791
    %1925 = vmatpush2.msra.mxu0 %v790
    %1926 = vmatprep.subr.mxu0 %v787
    %1927 = vmatpush2.msra.mxu0 %v786
    %1928 = vmatprep.subr.mxu0 %v783
    %1929 = vmatpush2.msra.mxu0 %v782
    %1930 = vmatprep.subr.mxu0 %v779
    %1931 = vmatpush2.msra.mxu0 %v778
    %1932 = vmatprep.subr.mxu0 %v775
    %1933 = vmatpush2.msra.mxu0 %v774
    %1934 = vmatprep.subr.mxu0 %v771
    %1935 = vmatpush2.msra.mxu0 %v770
    %1936 = vmatprep.subr.mxu0 %v767
    %1937 = vmatpush2.msra.mxu0 %v766
    %1938 = vmatprep.subr.mxu0 %v763
    %1939 = vmatpush2.msra.mxu0 %v762
    %1940 = vmatprep.subr.mxu0 %v759
    %1941 = vmatpush2.msra.mxu0 %v758
    %1942 = vmatprep.subr.mxu0 %v755
    %1943 = vmatpush2.msra.mxu0 %v754
    %1944 = vmatprep.subr.mxu0 %v751
    %1945 = vmatpush2.msra.mxu0 %v750
    %1946 = vmatprep.subr.mxu0 %v747
    %1947 = vmatpush2.msra.mxu0 %v746
    %1948 = vmatprep.subr.mxu0 %v743
    %1949 = vmatpush2.msra.mxu0 %v742
    %1950 = vmatprep.subr.mxu0 %v739
    %1951 = vmatpush2.msra.mxu0 %v738
    %1952 = vmatprep.subr.mxu0 %v735
    %1953 = vmatpush2.msra.mxu0 %v734
    %1954 = vmatprep.subr.mxu0 %v731
    %1955 = vmatpush2.msra.mxu0 %v730
    %1956 = vmatprep.mubr.f32.mxu0 %v1643
    %1957 = vmatmul.mubr.f32.gmra.mxu0 %v1820
    %v1958 = vpop.f32.mrf.mxu0
    %v1959 = vadd.f32 %v414, %v1958
    %v1960 = vpop.f32.mrf.mxu0
    %v1961 = vadd.f32 %v418, %v1960
    %1962 = vdwg.mxu0
    %v1963 = vxor.u32 %v1888, 2147483648
    %v1964 = vmul.f32 %v1963, 1.442695
    %v1965 = vpow.pop %v1964
    %v1966 = vadd.f32 %v1965, 1.0
    %v1967 = vrcp.pop %v1966
    %v1968 = vmul.f32 1.0, %v1967
    %v1969 = vxor.u32 %v1890, 2147483648
    %v1970 = vmul.f32 %v1969, 1.442695
    %v1971 = vpow.pop %v1970
    %v1972 = vadd.f32 %v1971, 1.0
    %v1973 = vrcp.pop %v1972
    %v1974 = vmul.f32 1.0, %v1973
    %v1975 = vtanh.pop %v1959
    %v1976 = vxor.u32 %v1961, 2147483648
    %v1977 = vmul.f32 %v1976, 1.442695
    %v1978 = vpow.pop %v1977
    %v1979 = vadd.f32 %v1978, 1.0
    %v1980 = vrcp.pop %v1979
    %v1981 = vmul.f32 1.0, %v1980
    %v1982 = vmul.f32 %v1974, %v1641
    %v1983 = vmul.f32 %v1968, %v1975
    %v1984 = vadd.f32 %v1982, %v1983
    %v1985 = vtanh.pop %v1984
    %v1986 = vmul.f32 %v1981, %v1985
    %s1987 = smul.u32 4, 4
    %s1988 = smul.addr %s1987, 8
    %s1989 = scalar_lea.vmem [#allocation2], %s1988
    %v1990 = vld [vmem:[%s1989] sm:$0xff]
    %v1991 = vld [vmem:[%s1989 + $0x8] sm:$0xff]
    %v1992 = vld [vmem:[%s1989 + $0x10] sm:$0xff]
    %v1993 = vld [vmem:[%s1989 + $0x18] sm:$0xff]
    %1994 = vmatprep.subr.mxu0 %v491
    %1995 = vmatpush1.msra.mxu0 %v490
    %1996 = vmatprep.subr.mxu0 %v487
    %1997 = vmatpush1.msra.mxu0 %v486
    %1998 = vmatprep.subr.mxu0 %v483
    %1999 = vmatpush1.msra.mxu0 %v482
    %2000 = vmatprep.subr.mxu0 %v479
    %2001 = vmatpush1.msra.mxu0 %v478
    %2002 = vmatprep.subr.mxu0 %v475
    %2003 = vmatpush1.msra.mxu0 %v474
    %2004 = vmatprep.subr.mxu0 %v471
    %2005 = vmatpush1.msra.mxu0 %v470
    %2006 = vmatprep.subr.mxu0 %v467
    %2007 = vmatpush1.msra.mxu0 %v466
    %2008 = vmatprep.subr.mxu0 %v463
    %2009 = vmatpush1.msra.mxu0 %v462
    %2010 = vmatprep.subr.mxu0 %v459
    %2011 = vmatpush1.msra.mxu0 %v458
    %2012 = vmatprep.subr.mxu0 %v455
    %2013 = vmatpush1.msra.mxu0 %v454
    %2014 = vmatprep.subr.mxu0 %v451
    %2015 = vmatpush1.msra.mxu0 %v450
    %2016 = vmatprep.subr.mxu0 %v447
    %2017 = vmatpush1.msra.mxu0 %v446
    %2018 = vmatprep.subr.mxu0 %v443
    %2019 = vmatpush1.msra.mxu0 %v442
    %2020 = vmatprep.subr.mxu0 %v439
    %2021 = vmatpush1.msra.mxu0 %v438
    %2022 = vmatprep.subr.mxu0 %v435
    %2023 = vmatpush1.msra.mxu0 %v434
    %2024 = vmatprep.subr.mxu0 %v431
    %2025 = vmatpush1.msra.mxu0 %v430
    %2026 = vmatprep.subr.mxu0 0.0
    %2027 = vmatpush2.msra.mxu0 0.0
    %2028 = vmatprep.subr.mxu0 0.0
    %2029 = vmatpush2.msra.mxu0 0.0
    %2030 = vmatprep.subr.mxu0 0.0
    %2031 = vmatpush2.msra.mxu0 0.0
    %2032 = vmatprep.subr.mxu0 0.0
    %2033 = vmatpush2.msra.mxu0 0.0
    %2034 = vmatprep.subr.mxu0 0.0
    %2035 = vmatpush2.msra.mxu0 0.0
    %2036 = vmatprep.subr.mxu0 0.0
    %2037 = vmatpush2.msra.mxu0 0.0
    %2038 = vmatprep.subr.mxu0 0.0
    %2039 = vmatpush2.msra.mxu0 0.0
    %2040 = vmatprep.subr.mxu0 0.0
    %2041 = vmatpush2.msra.mxu0 0.0
    %2042 = vmatprep.subr.mxu0 0.0
    %2043 = vmatpush2.msra.mxu0 0.0
    %2044 = vmatprep.subr.mxu0 0.0
    %2045 = vmatpush2.msra.mxu0 0.0
    %2046 = vmatprep.subr.mxu0 0.0
    %2047 = vmatpush2.msra.mxu0 0.0
    %2048 = vmatprep.subr.mxu0 0.0
    %2049 = vmatpush2.msra.mxu0 0.0
    %2050 = vmatprep.subr.mxu0 0.0
    %2051 = vmatpush2.msra.mxu0 0.0
    %2052 = vmatprep.subr.mxu0 0.0
    %2053 = vmatpush2.msra.mxu0 0.0
    %2054 = vmatprep.subr.mxu0 0.0
    %2055 = vmatpush2.msra.mxu0 0.0
    %2056 = vmatprep.subr.mxu0 0.0
    %2057 = vmatpush2.msra.mxu0 0.0
    %2058 = vmatprep.mubr.f32.mxu0 0.0
    %2059 = vmatmul.mubr.f32.gmra.mxu0 %v1820
    %v2060 = vpop.f32.mrf.mxu0
    %v2061 = vadd.f32 0.0, %v2060
    %v2062 = vpop.f32.mrf.mxu0
    %v2063 = vadd.f32 0.0, %v2062
    %2064 = vdwg.mxu0
    %2065 = vmatprep.subr.mxu0 %v493
    %2066 = vmatpush1.msra.mxu0 %v492
    %2067 = vmatprep.subr.mxu0 %v489
    %2068 = vmatpush1.msra.mxu0 %v488
    %2069 = vmatprep.subr.mxu0 %v485
    %2070 = vmatpush1.msra.mxu0 %v484
    %2071 = vmatprep.subr.mxu0 %v481
    %2072 = vmatpush1.msra.mxu0 %v480
    %2073 = vmatprep.subr.mxu0 %v477
    %2074 = vmatpush1.msra.mxu0 %v476
    %2075 = vmatprep.subr.mxu0 %v473
    %2076 = vmatpush1.msra.mxu0 %v472
    %2077 = vmatprep.subr.mxu0 %v469
    %2078 = vmatpush1.msra.mxu0 %v468
    %2079 = vmatprep.subr.mxu0 %v465
    %2080 = vmatpush1.msra.mxu0 %v464
    %2081 = vmatprep.subr.mxu0 %v461
    %2082 = vmatpush1.msra.mxu0 %v460
    %2083 = vmatprep.subr.mxu0 %v457
    %2084 = vmatpush1.msra.mxu0 %v456
    %2085 = vmatprep.subr.mxu0 %v453
    %2086 = vmatpush1.msra.mxu0 %v452
    %2087 = vmatprep.subr.mxu0 %v449
    %2088 = vmatpush1.msra.mxu0 %v448
    %2089 = vmatprep.subr.mxu0 %v445
    %2090 = vmatpush1.msra.mxu0 %v444
    %2091 = vmatprep.subr.mxu0 %v441
    %2092 = vmatpush1.msra.mxu0 %v440
    %2093 = vmatprep.subr.mxu0 %v437
    %2094 = vmatpush1.msra.mxu0 %v436
    %2095 = vmatprep.subr.mxu0 %v433
    %2096 = vmatpush1.msra.mxu0 %v432
    %2097 = vmatprep.subr.mxu0 0.0
    %2098 = vmatpush2.msra.mxu0 0.0
    %2099 = vmatprep.subr.mxu0 0.0
    %2100 = vmatpush2.msra.mxu0 0.0
    %2101 = vmatprep.subr.mxu0 0.0
    %2102 = vmatpush2.msra.mxu0 0.0
    %2103 = vmatprep.subr.mxu0 0.0
    %2104 = vmatpush2.msra.mxu0 0.0
    %2105 = vmatprep.subr.mxu0 0.0
    %2106 = vmatpush2.msra.mxu0 0.0
    %2107 = vmatprep.subr.mxu0 0.0
    %2108 = vmatpush2.msra.mxu0 0.0
    %2109 = vmatprep.subr.mxu0 0.0
    %2110 = vmatpush2.msra.mxu0 0.0
    %2111 = vmatprep.subr.mxu0 0.0
    %2112 = vmatpush2.msra.mxu0 0.0
    %2113 = vmatprep.subr.mxu0 0.0
    %2114 = vmatpush2.msra.mxu0 0.0
    %2115 = vmatprep.subr.mxu0 0.0
    %2116 = vmatpush2.msra.mxu0 0.0
    %2117 = vmatprep.subr.mxu0 0.0
    %2118 = vmatpush2.msra.mxu0 0.0
    %2119 = vmatprep.subr.mxu0 0.0
    %2120 = vmatpush2.msra.mxu0 0.0
    %2121 = vmatprep.subr.mxu0 0.0
    %2122 = vmatpush2.msra.mxu0 0.0
    %2123 = vmatprep.subr.mxu0 0.0
    %2124 = vmatpush2.msra.mxu0 0.0
    %2125 = vmatprep.subr.mxu0 0.0
    %2126 = vmatpush2.msra.mxu0 0.0
    %2127 = vmatprep.subr.mxu0 0.0
    %2128 = vmatpush2.msra.mxu0 0.0
    %2129 = vmatprep.mubr.f32.mxu0 0.0
    %2130 = vmatmul.mubr.f32.gmra.mxu0 %v1820
    %v2131 = vpop.f32.mrf.mxu0
    %v2132 = vadd.f32 0.0, %v2131
    %v2133 = vpop.f32.mrf.mxu0
    %v2134 = vadd.f32 0.0, %v2133
    %2135 = vdwg.mxu0
    %v2136 = vadd.f32 %v1990, %v2061
    %v2137 = vadd.f32 %v1991, %v2063
    %v2138 = vadd.f32 %v1992, %v2132
    %v2139 = vadd.f32 %v1993, %v2134
    %v2140 = vxor.u32 %v2136, 2147483648
    %v2141 = vmul.f32 %v2140, 1.442695
    %v2142 = vpow.pop %v2141
    %v2143 = vadd.f32 %v2142, 1.0
    %v2144 = vrcp.pop %v2143
    %v2145 = vmul.f32 1.0, %v2144
    %v2146 = vxor.u32 %v2137, 2147483648
    %v2147 = vmul.f32 %v2146, 1.442695
    %v2148 = vpow.pop %v2147
    %v2149 = vadd.f32 %v2148, 1.0
    %v2150 = vrcp.pop %v2149
    %v2151 = vmul.f32 1.0, %v2150
    %v2152 = vtanh.pop %v2138
    %v2153 = vxor.u32 %v2139, 2147483648
    %v2154 = vmul.f32 %v2153, 1.442695
    %v2155 = vpow.pop %v2154
    %v2156 = vadd.f32 %v2155, 1.0
    %v2157 = vrcp.pop %v2156
    %v2158 = vmul.f32 1.0, %v2157
    %v2159 = vmul.f32 %v2151, %v1818
    %v2160 = vmul.f32 %v2145, %v2152
    %v2161 = vadd.f32 %v2159, %v2160
    %v2162 = vtanh.pop %v2161
    %v2163 = vmul.f32 %v2158, %v2162
    %2164 = vmatprep.subr.mxu0 %v725
    %2165 = vmatpush1.msra.mxu0 %v724
    %2166 = vmatprep.subr.mxu0 %v721
    %2167 = vmatpush1.msra.mxu0 %v720
    %2168 = vmatprep.subr.mxu0 %v717
    %2169 = vmatpush1.msra.mxu0 %v716
    %2170 = vmatprep.subr.mxu0 %v713
    %2171 = vmatpush1.msra.mxu0 %v712
    %2172 = vmatprep.subr.mxu0 %v709
    %2173 = vmatpush1.msra.mxu0 %v708
    %2174 = vmatprep.subr.mxu0 %v705
    %2175 = vmatpush1.msra.mxu0 %v704
    %2176 = vmatprep.subr.mxu0 %v701
    %2177 = vmatpush1.msra.mxu0 %v700
    %2178 = vmatprep.subr.mxu0 %v697
    %2179 = vmatpush1.msra.mxu0 %v696
    %2180 = vmatprep.subr.mxu0 %v693
    %2181 = vmatpush1.msra.mxu0 %v692
    %2182 = vmatprep.subr.mxu0 %v689
    %2183 = vmatpush1.msra.mxu0 %v688
    %2184 = vmatprep.subr.mxu0 %v685
    %2185 = vmatpush1.msra.mxu0 %v684
    %2186 = vmatprep.subr.mxu0 %v681
    %2187 = vmatpush1.msra.mxu0 %v680
    %2188 = vmatprep.subr.mxu0 %v677
    %2189 = vmatpush1.msra.mxu0 %v676
    %2190 = vmatprep.subr.mxu0 %v673
    %2191 = vmatpush1.msra.mxu0 %v672
    %2192 = vmatprep.subr.mxu0 %v669
    %2193 = vmatpush1.msra.mxu0 %v668
    %2194 = vmatprep.subr.mxu0 %v665
    %2195 = vmatpush1.msra.mxu0 %v664
    %2196 = vmatprep.subr.mxu0 %v789
    %2197 = vmatpush2.msra.mxu0 %v788
    %2198 = vmatprep.subr.mxu0 %v785
    %2199 = vmatpush2.msra.mxu0 %v784
    %2200 = vmatprep.subr.mxu0 %v781
    %2201 = vmatpush2.msra.mxu0 %v780
    %2202 = vmatprep.subr.mxu0 %v777
    %2203 = vmatpush2.msra.mxu0 %v776
    %2204 = vmatprep.subr.mxu0 %v773
    %2205 = vmatpush2.msra.mxu0 %v772
    %2206 = vmatprep.subr.mxu0 %v769
    %2207 = vmatpush2.msra.mxu0 %v768
    %2208 = vmatprep.subr.mxu0 %v765
    %2209 = vmatpush2.msra.mxu0 %v764
    %2210 = vmatprep.subr.mxu0 %v761
    %2211 = vmatpush2.msra.mxu0 %v760
    %2212 = vmatprep.subr.mxu0 %v757
    %2213 = vmatpush2.msra.mxu0 %v756
    %2214 = vmatprep.subr.mxu0 %v753
    %2215 = vmatpush2.msra.mxu0 %v752
    %2216 = vmatprep.subr.mxu0 %v749
    %2217 = vmatpush2.msra.mxu0 %v748
    %2218 = vmatprep.subr.mxu0 %v745
    %2219 = vmatpush2.msra.mxu0 %v744
    %2220 = vmatprep.subr.mxu0 %v741
    %2221 = vmatpush2.msra.mxu0 %v740
    %2222 = vmatprep.subr.mxu0 %v737
    %2223 = vmatpush2.msra.mxu0 %v736
    %2224 = vmatprep.subr.mxu0 %v733
    %2225 = vmatpush2.msra.mxu0 %v732
    %2226 = vmatprep.subr.mxu0 %v729
    %2227 = vmatpush2.msra.mxu0 %v728
    %2228 = vmatprep.mubr.f32.mxu0 %v1986
    %2229 = vmatmul.mubr.f32.gmra.mxu0 %v2163
    %v2230 = vpop.f32.mrf.mxu0
    %v2231 = vadd.f32 %v406, %v2230
    %v2232 = vpop.f32.mrf.mxu0
    %v2233 = vadd.f32 %v410, %v2232
    %2234 = vdwg.mxu0
    %2235 = vmatprep.subr.mxu0 %v727
    %2236 = vmatpush1.msra.mxu0 %v726
    %2237 = vmatprep.subr.mxu0 %v723
    %2238 = vmatpush1.msra.mxu0 %v722
    %2239 = vmatprep.subr.mxu0 %v719
    %2240 = vmatpush1.msra.mxu0 %v718
    %2241 = vmatprep.subr.mxu0 %v715
    %2242 = vmatpush1.msra.mxu0 %v714
    %2243 = vmatprep.subr.mxu0 %v711
    %2244 = vmatpush1.msra.mxu0 %v710
    %2245 = vmatprep.subr.mxu0 %v707
    %2246 = vmatpush1.msra.mxu0 %v706
    %2247 = vmatprep.subr.mxu0 %v703
    %2248 = vmatpush1.msra.mxu0 %v702
    %2249 = vmatprep.subr.mxu0 %v699
    %2250 = vmatpush1.msra.mxu0 %v698
    %2251 = vmatprep.subr.mxu0 %v695
    %2252 = vmatpush1.msra.mxu0 %v694
    %2253 = vmatprep.subr.mxu0 %v691
    %2254 = vmatpush1.msra.mxu0 %v690
    %2255 = vmatprep.subr.mxu0 %v687
    %2256 = vmatpush1.msra.mxu0 %v686
    %2257 = vmatprep.subr.mxu0 %v683
    %2258 = vmatpush1.msra.mxu0 %v682
    %2259 = vmatprep.subr.mxu0 %v679
    %2260 = vmatpush1.msra.mxu0 %v678
    %2261 = vmatprep.subr.mxu0 %v675
    %2262 = vmatpush1.msra.mxu0 %v674
    %2263 = vmatprep.subr.mxu0 %v671
    %2264 = vmatpush1.msra.mxu0 %v670
    %2265 = vmatprep.subr.mxu0 %v667
    %2266 = vmatpush1.msra.mxu0 %v666
    %2267 = vmatprep.subr.mxu0 %v791
    %2268 = vmatpush2.msra.mxu0 %v790
    %2269 = vmatprep.subr.mxu0 %v787
    %2270 = vmatpush2.msra.mxu0 %v786
    %2271 = vmatprep.subr.mxu0 %v783
    %2272 = vmatpush2.msra.mxu0 %v782
    %2273 = vmatprep.subr.mxu0 %v779
    %2274 = vmatpush2.msra.mxu0 %v778
    %2275 = vmatprep.subr.mxu0 %v775
    %2276 = vmatpush2.msra.mxu0 %v774
    %2277 = vmatprep.subr.mxu0 %v771
    %2278 = vmatpush2.msra.mxu0 %v770
    %2279 = vmatprep.subr.mxu0 %v767
    %2280 = vmatpush2.msra.mxu0 %v766
    %2281 = vmatprep.subr.mxu0 %v763
    %2282 = vmatpush2.msra.mxu0 %v762
    %2283 = vmatprep.subr.mxu0 %v759
    %2284 = vmatpush2.msra.mxu0 %v758
    %2285 = vmatprep.subr.mxu0 %v755
    %2286 = vmatpush2.msra.mxu0 %v754
    %2287 = vmatprep.subr.mxu0 %v751
    %2288 = vmatpush2.msra.mxu0 %v750
    %2289 = vmatprep.subr.mxu0 %v747
    %2290 = vmatpush2.msra.mxu0 %v746
    %2291 = vmatprep.subr.mxu0 %v743
    %2292 = vmatpush2.msra.mxu0 %v742
    %2293 = vmatprep.subr.mxu0 %v739
    %2294 = vmatpush2.msra.mxu0 %v738
    %2295 = vmatprep.subr.mxu0 %v735
    %2296 = vmatpush2.msra.mxu0 %v734
    %2297 = vmatprep.subr.mxu0 %v731
    %2298 = vmatpush2.msra.mxu0 %v730
    %2299 = vmatprep.mubr.f32.mxu0 %v1986
    %2300 = vmatmul.mubr.f32.gmra.mxu0 %v2163
    %v2301 = vpop.f32.mrf.mxu0
    %v2302 = vadd.f32 %v414, %v2301
    %v2303 = vpop.f32.mrf.mxu0
    %v2304 = vadd.f32 %v418, %v2303
    %2305 = vdwg.mxu0
    %v2306 = vxor.u32 %v2231, 2147483648
    %v2307 = vmul.f32 %v2306, 1.442695
    %v2308 = vpow.pop %v2307
    %v2309 = vadd.f32 %v2308, 1.0
    %v2310 = vrcp.pop %v2309
    %v2311 = vmul.f32 1.0, %v2310
    %v2312 = vxor.u32 %v2233, 2147483648
    %v2313 = vmul.f32 %v2312, 1.442695
    %v2314 = vpow.pop %v2313
    %v2315 = vadd.f32 %v2314, 1.0
    %v2316 = vrcp.pop %v2315
    %v2317 = vmul.f32 1.0, %v2316
    %v2318 = vtanh.pop %v2302
    %v2319 = vxor.u32 %v2304, 2147483648
    %v2320 = vmul.f32 %v2319, 1.442695
    %v2321 = vpow.pop %v2320
    %v2322 = vadd.f32 %v2321, 1.0
    %v2323 = vrcp.pop %v2322
    %v2324 = vmul.f32 1.0, %v2323
    %v2325 = vmul.f32 %v2317, %v1984
    %v2326 = vmul.f32 %v2311, %v2318
    %v2327 = vadd.f32 %v2325, %v2326
    %v2328 = vtanh.pop %v2327
    %v2329 = vmul.f32 %v2324, %v2328
    %s2330 = smul.u32 5, 4
    %s2331 = smul.addr %s2330, 8
    %s2332 = scalar_lea.vmem [#allocation2], %s2331
    %v2333 = vld [vmem:[%s2332] sm:$0xff]
    %v2334 = vld [vmem:[%s2332 + $0x8] sm:$0xff]
    %v2335 = vld [vmem:[%s2332 + $0x10] sm:$0xff]
    %v2336 = vld [vmem:[%s2332 + $0x18] sm:$0xff]
    %2337 = vmatprep.subr.mxu0 %v491
    %2338 = vmatpush1.msra.mxu0 %v490
    %2339 = vmatprep.subr.mxu0 %v487
    %2340 = vmatpush1.msra.mxu0 %v486
    %2341 = vmatprep.subr.mxu0 %v483
    %2342 = vmatpush1.msra.mxu0 %v482
    %2343 = vmatprep.subr.mxu0 %v479
    %2344 = vmatpush1.msra.mxu0 %v478
    %2345 = vmatprep.subr.mxu0 %v475
    %2346 = vmatpush1.msra.mxu0 %v474
    %2347 = vmatprep.subr.mxu0 %v471
    %2348 = vmatpush1.msra.mxu0 %v470
    %2349 = vmatprep.subr.mxu0 %v467
    %2350 = vmatpush1.msra.mxu0 %v466
    %2351 = vmatprep.subr.mxu0 %v463
    %2352 = vmatpush1.msra.mxu0 %v462
    %2353 = vmatprep.subr.mxu0 %v459
    %2354 = vmatpush1.msra.mxu0 %v458
    %2355 = vmatprep.subr.mxu0 %v455
    %2356 = vmatpush1.msra.mxu0 %v454
    %2357 = vmatprep.subr.mxu0 %v451
    %2358 = vmatpush1.msra.mxu0 %v450
    %2359 = vmatprep.subr.mxu0 %v447
    %2360 = vmatpush1.msra.mxu0 %v446
    %2361 = vmatprep.subr.mxu0 %v443
    %2362 = vmatpush1.msra.mxu0 %v442
    %2363 = vmatprep.subr.mxu0 %v439
    %2364 = vmatpush1.msra.mxu0 %v438
    %2365 = vmatprep.subr.mxu0 %v435
    %2366 = vmatpush1.msra.mxu0 %v434
    %2367 = vmatprep.subr.mxu0 %v431
    %2368 = vmatpush1.msra.mxu0 %v430
    %2369 = vmatprep.subr.mxu0 0.0
    %2370 = vmatpush2.msra.mxu0 0.0
    %2371 = vmatprep.subr.mxu0 0.0
    %2372 = vmatpush2.msra.mxu0 0.0
    %2373 = vmatprep.subr.mxu0 0.0
    %2374 = vmatpush2.msra.mxu0 0.0
    %2375 = vmatprep.subr.mxu0 0.0
    %2376 = vmatpush2.msra.mxu0 0.0
    %2377 = vmatprep.subr.mxu0 0.0
    %2378 = vmatpush2.msra.mxu0 0.0
    %2379 = vmatprep.subr.mxu0 0.0
    %2380 = vmatpush2.msra.mxu0 0.0
    %2381 = vmatprep.subr.mxu0 0.0
    %2382 = vmatpush2.msra.mxu0 0.0
    %2383 = vmatprep.subr.mxu0 0.0
    %2384 = vmatpush2.msra.mxu0 0.0
    %2385 = vmatprep.subr.mxu0 0.0
    %2386 = vmatpush2.msra.mxu0 0.0
    %2387 = vmatprep.subr.mxu0 0.0
    %2388 = vmatpush2.msra.mxu0 0.0
    %2389 = vmatprep.subr.mxu0 0.0
    %2390 = vmatpush2.msra.mxu0 0.0
    %2391 = vmatprep.subr.mxu0 0.0
    %2392 = vmatpush2.msra.mxu0 0.0
    %2393 = vmatprep.subr.mxu0 0.0
    %2394 = vmatpush2.msra.mxu0 0.0
    %2395 = vmatprep.subr.mxu0 0.0
    %2396 = vmatpush2.msra.mxu0 0.0
    %2397 = vmatprep.subr.mxu0 0.0
    %2398 = vmatpush2.msra.mxu0 0.0
    %2399 = vmatprep.subr.mxu0 0.0
    %2400 = vmatpush2.msra.mxu0 0.0
    %2401 = vmatprep.mubr.f32.mxu0 0.0
    %2402 = vmatmul.mubr.f32.gmra.mxu0 %v2163
    %v2403 = vpop.f32.mrf.mxu0
    %v2404 = vadd.f32 0.0, %v2403
    %v2405 = vpop.f32.mrf.mxu0
    %v2406 = vadd.f32 0.0, %v2405
    %2407 = vdwg.mxu0
    %2408 = vmatprep.subr.mxu0 %v493
    %2409 = vmatpush1.msra.mxu0 %v492
    %2410 = vmatprep.subr.mxu0 %v489
    %2411 = vmatpush1.msra.mxu0 %v488
    %2412 = vmatprep.subr.mxu0 %v485
    %2413 = vmatpush1.msra.mxu0 %v484
    %2414 = vmatprep.subr.mxu0 %v481
    %2415 = vmatpush1.msra.mxu0 %v480
    %2416 = vmatprep.subr.mxu0 %v477
    %2417 = vmatpush1.msra.mxu0 %v476
    %2418 = vmatprep.subr.mxu0 %v473
    %2419 = vmatpush1.msra.mxu0 %v472
    %2420 = vmatprep.subr.mxu0 %v469
    %2421 = vmatpush1.msra.mxu0 %v468
    %2422 = vmatprep.subr.mxu0 %v465
    %2423 = vmatpush1.msra.mxu0 %v464
    %2424 = vmatprep.subr.mxu0 %v461
    %2425 = vmatpush1.msra.mxu0 %v460
    %2426 = vmatprep.subr.mxu0 %v457
    %2427 = vmatpush1.msra.mxu0 %v456
    %2428 = vmatprep.subr.mxu0 %v453
    %2429 = vmatpush1.msra.mxu0 %v452
    %2430 = vmatprep.subr.mxu0 %v449
    %2431 = vmatpush1.msra.mxu0 %v448
    %2432 = vmatprep.subr.mxu0 %v445
    %2433 = vmatpush1.msra.mxu0 %v444
    %2434 = vmatprep.subr.mxu0 %v441
    %2435 = vmatpush1.msra.mxu0 %v440
    %2436 = vmatprep.subr.mxu0 %v437
    %2437 = vmatpush1.msra.mxu0 %v436
    %2438 = vmatprep.subr.mxu0 %v433
    %2439 = vmatpush1.msra.mxu0 %v432
    %2440 = vmatprep.subr.mxu0 0.0
    %2441 = vmatpush2.msra.mxu0 0.0
    %2442 = vmatprep.subr.mxu0 0.0
    %2443 = vmatpush2.msra.mxu0 0.0
    %2444 = vmatprep.subr.mxu0 0.0
    %2445 = vmatpush2.msra.mxu0 0.0
    %2446 = vmatprep.subr.mxu0 0.0
    %2447 = vmatpush2.msra.mxu0 0.0
    %2448 = vmatprep.subr.mxu0 0.0
    %2449 = vmatpush2.msra.mxu0 0.0
    %2450 = vmatprep.subr.mxu0 0.0
    %2451 = vmatpush2.msra.mxu0 0.0
    %2452 = vmatprep.subr.mxu0 0.0
    %2453 = vmatpush2.msra.mxu0 0.0
    %2454 = vmatprep.subr.mxu0 0.0
    %2455 = vmatpush2.msra.mxu0 0.0
    %2456 = vmatprep.subr.mxu0 0.0
    %2457 = vmatpush2.msra.mxu0 0.0
    %2458 = vmatprep.subr.mxu0 0.0
    %2459 = vmatpush2.msra.mxu0 0.0
    %2460 = vmatprep.subr.mxu0 0.0
    %2461 = vmatpush2.msra.mxu0 0.0
    %2462 = vmatprep.subr.mxu0 0.0
    %2463 = vmatpush2.msra.mxu0 0.0
    %2464 = vmatprep.subr.mxu0 0.0
    %2465 = vmatpush2.msra.mxu0 0.0
    %2466 = vmatprep.subr.mxu0 0.0
    %2467 = vmatpush2.msra.mxu0 0.0
    %2468 = vmatprep.subr.mxu0 0.0
    %2469 = vmatpush2.msra.mxu0 0.0
    %2470 = vmatprep.subr.mxu0 0.0
    %2471 = vmatpush2.msra.mxu0 0.0
    %2472 = vmatprep.mubr.f32.mxu0 0.0
    %2473 = vmatmul.mubr.f32.gmra.mxu0 %v2163
    %v2474 = vpop.f32.mrf.mxu0
    %v2475 = vadd.f32 0.0, %v2474
    %v2476 = vpop.f32.mrf.mxu0
    %v2477 = vadd.f32 0.0, %v2476
    %2478 = vdwg.mxu0
    %v2479 = vadd.f32 %v2333, %v2404
    %v2480 = vadd.f32 %v2334, %v2406
    %v2481 = vadd.f32 %v2335, %v2475
    %v2482 = vadd.f32 %v2336, %v2477
    %v2483 = vxor.u32 %v2479, 2147483648
    %v2484 = vmul.f32 %v2483, 1.442695
    %v2485 = vpow.pop %v2484
    %v2486 = vadd.f32 %v2485, 1.0
    %v2487 = vrcp.pop %v2486
    %v2488 = vmul.f32 1.0, %v2487
    %v2489 = vxor.u32 %v2480, 2147483648
    %v2490 = vmul.f32 %v2489, 1.442695
    %v2491 = vpow.pop %v2490
    %v2492 = vadd.f32 %v2491, 1.0
    %v2493 = vrcp.pop %v2492
    %v2494 = vmul.f32 1.0, %v2493
    %v2495 = vtanh.pop %v2481
    %v2496 = vxor.u32 %v2482, 2147483648
    %v2497 = vmul.f32 %v2496, 1.442695
    %v2498 = vpow.pop %v2497
    %v2499 = vadd.f32 %v2498, 1.0
    %v2500 = vrcp.pop %v2499
    %v2501 = vmul.f32 1.0, %v2500
    %v2502 = vmul.f32 %v2494, %v2161
    %v2503 = vmul.f32 %v2488, %v2495
    %v2504 = vadd.f32 %v2502, %v2503
    %v2505 = vtanh.pop %v2504
    %v2506 = vmul.f32 %v2501, %v2505
    %2507 = vmatprep.subr.mxu0 %v725
    %2508 = vmatpush1.msra.mxu0 %v724
    %2509 = vmatprep.subr.mxu0 %v721
    %2510 = vmatpush1.msra.mxu0 %v720
    %2511 = vmatprep.subr.mxu0 %v717
    %2512 = vmatpush1.msra.mxu0 %v716
    %2513 = vmatprep.subr.mxu0 %v713
    %2514 = vmatpush1.msra.mxu0 %v712
    %2515 = vmatprep.subr.mxu0 %v709
    %2516 = vmatpush1.msra.mxu0 %v708
    %2517 = vmatprep.subr.mxu0 %v705
    %2518 = vmatpush1.msra.mxu0 %v704
    %2519 = vmatprep.subr.mxu0 %v701
    %2520 = vmatpush1.msra.mxu0 %v700
    %2521 = vmatprep.subr.mxu0 %v697
    %2522 = vmatpush1.msra.mxu0 %v696
    %2523 = vmatprep.subr.mxu0 %v693
    %2524 = vmatpush1.msra.mxu0 %v692
    %2525 = vmatprep.subr.mxu0 %v689
    %2526 = vmatpush1.msra.mxu0 %v688
    %2527 = vmatprep.subr.mxu0 %v685
    %2528 = vmatpush1.msra.mxu0 %v684
    %2529 = vmatprep.subr.mxu0 %v681
    %2530 = vmatpush1.msra.mxu0 %v680
    %2531 = vmatprep.subr.mxu0 %v677
    %2532 = vmatpush1.msra.mxu0 %v676
    %2533 = vmatprep.subr.mxu0 %v673
    %2534 = vmatpush1.msra.mxu0 %v672
    %2535 = vmatprep.subr.mxu0 %v669
    %2536 = vmatpush1.msra.mxu0 %v668
    %2537 = vmatprep.subr.mxu0 %v665
    %2538 = vmatpush1.msra.mxu0 %v664
    %2539 = vmatprep.subr.mxu0 %v789
    %2540 = vmatpush2.msra.mxu0 %v788
    %2541 = vmatprep.subr.mxu0 %v785
    %2542 = vmatpush2.msra.mxu0 %v784
    %2543 = vmatprep.subr.mxu0 %v781
    %2544 = vmatpush2.msra.mxu0 %v780
    %2545 = vmatprep.subr.mxu0 %v777
    %2546 = vmatpush2.msra.mxu0 %v776
    %2547 = vmatprep.subr.mxu0 %v773
    %2548 = vmatpush2.msra.mxu0 %v772
    %2549 = vmatprep.subr.mxu0 %v769
    %2550 = vmatpush2.msra.mxu0 %v768
    %2551 = vmatprep.subr.mxu0 %v765
    %2552 = vmatpush2.msra.mxu0 %v764
    %2553 = vmatprep.subr.mxu0 %v761
    %2554 = vmatpush2.msra.mxu0 %v760
    %2555 = vmatprep.subr.mxu0 %v757
    %2556 = vmatpush2.msra.mxu0 %v756
    %2557 = vmatprep.subr.mxu0 %v753
    %2558 = vmatpush2.msra.mxu0 %v752
    %2559 = vmatprep.subr.mxu0 %v749
    %2560 = vmatpush2.msra.mxu0 %v748
    %2561 = vmatprep.subr.mxu0 %v745
    %2562 = vmatpush2.msra.mxu0 %v744
    %2563 = vmatprep.subr.mxu0 %v741
    %2564 = vmatpush2.msra.mxu0 %v740
    %2565 = vmatprep.subr.mxu0 %v737
    %2566 = vmatpush2.msra.mxu0 %v736
    %2567 = vmatprep.subr.mxu0 %v733
    %2568 = vmatpush2.msra.mxu0 %v732
    %2569 = vmatprep.subr.mxu0 %v729
    %2570 = vmatpush2.msra.mxu0 %v728
    %2571 = vmatprep.mubr.f32.mxu0 %v2329
    %2572 = vmatmul.mubr.f32.gmra.mxu0 %v2506
    %v2573 = vpop.f32.mrf.mxu0
    %v2574 = vadd.f32 %v406, %v2573
    %v2575 = vpop.f32.mrf.mxu0
    %v2576 = vadd.f32 %v410, %v2575
    %2577 = vdwg.mxu0
    %2578 = vmatprep.subr.mxu0 %v727
    %2579 = vmatpush1.msra.mxu0 %v726
    %2580 = vmatprep.subr.mxu0 %v723
    %2581 = vmatpush1.msra.mxu0 %v722
    %2582 = vmatprep.subr.mxu0 %v719
    %2583 = vmatpush1.msra.mxu0 %v718
    %2584 = vmatprep.subr.mxu0 %v715
    %2585 = vmatpush1.msra.mxu0 %v714
    %2586 = vmatprep.subr.mxu0 %v711
    %2587 = vmatpush1.msra.mxu0 %v710
    %2588 = vmatprep.subr.mxu0 %v707
    %2589 = vmatpush1.msra.mxu0 %v706
    %2590 = vmatprep.subr.mxu0 %v703
    %2591 = vmatpush1.msra.mxu0 %v702
    %2592 = vmatprep.subr.mxu0 %v699
    %2593 = vmatpush1.msra.mxu0 %v698
    %2594 = vmatprep.subr.mxu0 %v695
    %2595 = vmatpush1.msra.mxu0 %v694
    %2596 = vmatprep.subr.mxu0 %v691
    %2597 = vmatpush1.msra.mxu0 %v690
    %2598 = vmatprep.subr.mxu0 %v687
    %2599 = vmatpush1.msra.mxu0 %v686
    %2600 = vmatprep.subr.mxu0 %v683
    %2601 = vmatpush1.msra.mxu0 %v682
    %2602 = vmatprep.subr.mxu0 %v679
    %2603 = vmatpush1.msra.mxu0 %v678
    %2604 = vmatprep.subr.mxu0 %v675
    %2605 = vmatpush1.msra.mxu0 %v674
    %2606 = vmatprep.subr.mxu0 %v671
    %2607 = vmatpush1.msra.mxu0 %v670
    %2608 = vmatprep.subr.mxu0 %v667
    %2609 = vmatpush1.msra.mxu0 %v666
    %2610 = vmatprep.subr.mxu0 %v791
    %2611 = vmatpush2.msra.mxu0 %v790
    %2612 = vmatprep.subr.mxu0 %v787
    %2613 = vmatpush2.msra.mxu0 %v786
    %2614 = vmatprep.subr.mxu0 %v783
    %2615 = vmatpush2.msra.mxu0 %v782
    %2616 = vmatprep.subr.mxu0 %v779
    %2617 = vmatpush2.msra.mxu0 %v778
    %2618 = vmatprep.subr.mxu0 %v775
    %2619 = vmatpush2.msra.mxu0 %v774
    %2620 = vmatprep.subr.mxu0 %v771
    %2621 = vmatpush2.msra.mxu0 %v770
    %2622 = vmatprep.subr.mxu0 %v767
    %2623 = vmatpush2.msra.mxu0 %v766
    %2624 = vmatprep.subr.mxu0 %v763
    %2625 = vmatpush2.msra.mxu0 %v762
    %2626 = vmatprep.subr.mxu0 %v759
    %2627 = vmatpush2.msra.mxu0 %v758
    %2628 = vmatprep.subr.mxu0 %v755
    %2629 = vmatpush2.msra.mxu0 %v754
    %2630 = vmatprep.subr.mxu0 %v751
    %2631 = vmatpush2.msra.mxu0 %v750
    %2632 = vmatprep.subr.mxu0 %v747
    %2633 = vmatpush2.msra.mxu0 %v746
    %2634 = vmatprep.subr.mxu0 %v743
    %2635 = vmatpush2.msra.mxu0 %v742
    %2636 = vmatprep.subr.mxu0 %v739
    %2637 = vmatpush2.msra.mxu0 %v738
    %2638 = vmatprep.subr.mxu0 %v735
    %2639 = vmatpush2.msra.mxu0 %v734
    %2640 = vmatprep.subr.mxu0 %v731
    %2641 = vmatpush2.msra.mxu0 %v730
    %2642 = vmatprep.mubr.f32.mxu0 %v2329
    %2643 = vmatmul.mubr.f32.gmra.mxu0 %v2506
    %v2644 = vpop.f32.mrf.mxu0
    %v2645 = vadd.f32 %v414, %v2644
    %v2646 = vpop.f32.mrf.mxu0
    %v2647 = vadd.f32 %v418, %v2646
    %2648 = vdwg.mxu0
    %v2649 = vxor.u32 %v2574, 2147483648
    %v2650 = vmul.f32 %v2649, 1.442695
    %v2651 = vpow.pop %v2650
    %v2652 = vadd.f32 %v2651, 1.0
    %v2653 = vrcp.pop %v2652
    %v2654 = vmul.f32 1.0, %v2653
    %v2655 = vxor.u32 %v2576, 2147483648
    %v2656 = vmul.f32 %v2655, 1.442695
    %v2657 = vpow.pop %v2656
    %v2658 = vadd.f32 %v2657, 1.0
    %v2659 = vrcp.pop %v2658
    %v2660 = vmul.f32 1.0, %v2659
    %v2661 = vtanh.pop %v2645
    %v2662 = vxor.u32 %v2647, 2147483648
    %v2663 = vmul.f32 %v2662, 1.442695
    %v2664 = vpow.pop %v2663
    %v2665 = vadd.f32 %v2664, 1.0
    %v2666 = vrcp.pop %v2665
    %v2667 = vmul.f32 1.0, %v2666
    %v2668 = vmul.f32 %v2660, %v2327
    %v2669 = vmul.f32 %v2654, %v2661
    %v2670 = vadd.f32 %v2668, %v2669
    %v2671 = vtanh.pop %v2670
    %v2672 = vmul.f32 %v2667, %v2671
    %s2673 = smul.u32 6, 4
    %s2674 = smul.addr %s2673, 8
    %s2675 = scalar_lea.vmem [#allocation2], %s2674
    %v2676 = vld [vmem:[%s2675] sm:$0xff]
    %v2677 = vld [vmem:[%s2675 + $0x8] sm:$0xff]
    %v2678 = vld [vmem:[%s2675 + $0x10] sm:$0xff]
    %v2679 = vld [vmem:[%s2675 + $0x18] sm:$0xff]
    %2680 = vmatprep.subr.mxu0 %v491
    %2681 = vmatpush1.msra.mxu0 %v490
    %2682 = vmatprep.subr.mxu0 %v487
    %2683 = vmatpush1.msra.mxu0 %v486
    %2684 = vmatprep.subr.mxu0 %v483
    %2685 = vmatpush1.msra.mxu0 %v482
    %2686 = vmatprep.subr.mxu0 %v479
    %2687 = vmatpush1.msra.mxu0 %v478
    %2688 = vmatprep.subr.mxu0 %v475
    %2689 = vmatpush1.msra.mxu0 %v474
    %2690 = vmatprep.subr.mxu0 %v471
    %2691 = vmatpush1.msra.mxu0 %v470
    %2692 = vmatprep.subr.mxu0 %v467
    %2693 = vmatpush1.msra.mxu0 %v466
    %2694 = vmatprep.subr.mxu0 %v463
    %2695 = vmatpush1.msra.mxu0 %v462
    %2696 = vmatprep.subr.mxu0 %v459
    %2697 = vmatpush1.msra.mxu0 %v458
    %2698 = vmatprep.subr.mxu0 %v455
    %2699 = vmatpush1.msra.mxu0 %v454
    %2700 = vmatprep.subr.mxu0 %v451
    %2701 = vmatpush1.msra.mxu0 %v450
    %2702 = vmatprep.subr.mxu0 %v447
    %2703 = vmatpush1.msra.mxu0 %v446
    %2704 = vmatprep.subr.mxu0 %v443
    %2705 = vmatpush1.msra.mxu0 %v442
    %2706 = vmatprep.subr.mxu0 %v439
    %2707 = vmatpush1.msra.mxu0 %v438
    %2708 = vmatprep.subr.mxu0 %v435
    %2709 = vmatpush1.msra.mxu0 %v434
    %2710 = vmatprep.subr.mxu0 %v431
    %2711 = vmatpush1.msra.mxu0 %v430
    %2712 = vmatprep.subr.mxu0 0.0
    %2713 = vmatpush2.msra.mxu0 0.0
    %2714 = vmatprep.subr.mxu0 0.0
    %2715 = vmatpush2.msra.mxu0 0.0
    %2716 = vmatprep.subr.mxu0 0.0
    %2717 = vmatpush2.msra.mxu0 0.0
    %2718 = vmatprep.subr.mxu0 0.0
    %2719 = vmatpush2.msra.mxu0 0.0
    %2720 = vmatprep.subr.mxu0 0.0
    %2721 = vmatpush2.msra.mxu0 0.0
    %2722 = vmatprep.subr.mxu0 0.0
    %2723 = vmatpush2.msra.mxu0 0.0
    %2724 = vmatprep.subr.mxu0 0.0
    %2725 = vmatpush2.msra.mxu0 0.0
    %2726 = vmatprep.subr.mxu0 0.0
    %2727 = vmatpush2.msra.mxu0 0.0
    %2728 = vmatprep.subr.mxu0 0.0
    %2729 = vmatpush2.msra.mxu0 0.0
    %2730 = vmatprep.subr.mxu0 0.0
    %2731 = vmatpush2.msra.mxu0 0.0
    %2732 = vmatprep.subr.mxu0 0.0
    %2733 = vmatpush2.msra.mxu0 0.0
    %2734 = vmatprep.subr.mxu0 0.0
    %2735 = vmatpush2.msra.mxu0 0.0
    %2736 = vmatprep.subr.mxu0 0.0
    %2737 = vmatpush2.msra.mxu0 0.0
    %2738 = vmatprep.subr.mxu0 0.0
    %2739 = vmatpush2.msra.mxu0 0.0
    %2740 = vmatprep.subr.mxu0 0.0
    %2741 = vmatpush2.msra.mxu0 0.0
    %2742 = vmatprep.subr.mxu0 0.0
    %2743 = vmatpush2.msra.mxu0 0.0
    %2744 = vmatprep.mubr.f32.mxu0 0.0
    %2745 = vmatmul.mubr.f32.gmra.mxu0 %v2506
    %v2746 = vpop.f32.mrf.mxu0
    %v2747 = vadd.f32 0.0, %v2746
    %v2748 = vpop.f32.mrf.mxu0
    %v2749 = vadd.f32 0.0, %v2748
    %2750 = vdwg.mxu0
    %2751 = vmatprep.subr.mxu0 %v493
    %2752 = vmatpush1.msra.mxu0 %v492
    %2753 = vmatprep.subr.mxu0 %v489
    %2754 = vmatpush1.msra.mxu0 %v488
    %2755 = vmatprep.subr.mxu0 %v485
    %2756 = vmatpush1.msra.mxu0 %v484
    %2757 = vmatprep.subr.mxu0 %v481
    %2758 = vmatpush1.msra.mxu0 %v480
    %2759 = vmatprep.subr.mxu0 %v477
    %2760 = vmatpush1.msra.mxu0 %v476
    %2761 = vmatprep.subr.mxu0 %v473
    %2762 = vmatpush1.msra.mxu0 %v472
    %2763 = vmatprep.subr.mxu0 %v469
    %2764 = vmatpush1.msra.mxu0 %v468
    %2765 = vmatprep.subr.mxu0 %v465
    %2766 = vmatpush1.msra.mxu0 %v464
    %2767 = vmatprep.subr.mxu0 %v461
    %2768 = vmatpush1.msra.mxu0 %v460
    %2769 = vmatprep.subr.mxu0 %v457
    %2770 = vmatpush1.msra.mxu0 %v456
    %2771 = vmatprep.subr.mxu0 %v453
    %2772 = vmatpush1.msra.mxu0 %v452
    %2773 = vmatprep.subr.mxu0 %v449
    %2774 = vmatpush1.msra.mxu0 %v448
    %2775 = vmatprep.subr.mxu0 %v445
    %2776 = vmatpush1.msra.mxu0 %v444
    %2777 = vmatprep.subr.mxu0 %v441
    %2778 = vmatpush1.msra.mxu0 %v440
    %2779 = vmatprep.subr.mxu0 %v437
    %2780 = vmatpush1.msra.mxu0 %v436
    %2781 = vmatprep.subr.mxu0 %v433
    %2782 = vmatpush1.msra.mxu0 %v432
    %2783 = vmatprep.subr.mxu0 0.0
    %2784 = vmatpush2.msra.mxu0 0.0
    %2785 = vmatprep.subr.mxu0 0.0
    %2786 = vmatpush2.msra.mxu0 0.0
    %2787 = vmatprep.subr.mxu0 0.0
    %2788 = vmatpush2.msra.mxu0 0.0
    %2789 = vmatprep.subr.mxu0 0.0
    %2790 = vmatpush2.msra.mxu0 0.0
    %2791 = vmatprep.subr.mxu0 0.0
    %2792 = vmatpush2.msra.mxu0 0.0
    %2793 = vmatprep.subr.mxu0 0.0
    %2794 = vmatpush2.msra.mxu0 0.0
    %2795 = vmatprep.subr.mxu0 0.0
    %2796 = vmatpush2.msra.mxu0 0.0
    %2797 = vmatprep.subr.mxu0 0.0
    %2798 = vmatpush2.msra.mxu0 0.0
    %2799 = vmatprep.subr.mxu0 0.0
    %2800 = vmatpush2.msra.mxu0 0.0
    %2801 = vmatprep.subr.mxu0 0.0
    %2802 = vmatpush2.msra.mxu0 0.0
    %2803 = vmatprep.subr.mxu0 0.0
    %2804 = vmatpush2.msra.mxu0 0.0
    %2805 = vmatprep.subr.mxu0 0.0
    %2806 = vmatpush2.msra.mxu0 0.0
    %2807 = vmatprep.subr.mxu0 0.0
    %2808 = vmatpush2.msra.mxu0 0.0
    %2809 = vmatprep.subr.mxu0 0.0
    %2810 = vmatpush2.msra.mxu0 0.0
    %2811 = vmatprep.subr.mxu0 0.0
    %2812 = vmatpush2.msra.mxu0 0.0
    %2813 = vmatprep.subr.mxu0 0.0
    %2814 = vmatpush2.msra.mxu0 0.0
    %2815 = vmatprep.mubr.f32.mxu0 0.0
    %2816 = vmatmul.mubr.f32.gmra.mxu0 %v2506
    %v2817 = vpop.f32.mrf.mxu0
    %v2818 = vadd.f32 0.0, %v2817
    %v2819 = vpop.f32.mrf.mxu0
    %v2820 = vadd.f32 0.0, %v2819
    %2821 = vdwg.mxu0
    %v2822 = vadd.f32 %v2676, %v2747
    %v2823 = vadd.f32 %v2677, %v2749
    %v2824 = vadd.f32 %v2678, %v2818
    %v2825 = vadd.f32 %v2679, %v2820
    %v2826 = vxor.u32 %v2822, 2147483648
    %v2827 = vmul.f32 %v2826, 1.442695
    %v2828 = vpow.pop %v2827
    %v2829 = vadd.f32 %v2828, 1.0
    %v2830 = vrcp.pop %v2829
    %v2831 = vmul.f32 1.0, %v2830
    %v2832 = vxor.u32 %v2823, 2147483648
    %v2833 = vmul.f32 %v2832, 1.442695
    %v2834 = vpow.pop %v2833
    %v2835 = vadd.f32 %v2834, 1.0
    %v2836 = vrcp.pop %v2835
    %v2837 = vmul.f32 1.0, %v2836
    %v2838 = vtanh.pop %v2824
    %v2839 = vxor.u32 %v2825, 2147483648
    %v2840 = vmul.f32 %v2839, 1.442695
    %v2841 = vpow.pop %v2840
    %v2842 = vadd.f32 %v2841, 1.0
    %v2843 = vrcp.pop %v2842
    %v2844 = vmul.f32 1.0, %v2843
    %v2845 = vmul.f32 %v2837, %v2504
    %v2846 = vmul.f32 %v2831, %v2838
    %v2847 = vadd.f32 %v2845, %v2846
    %v2848 = vtanh.pop %v2847
    %v2849 = vmul.f32 %v2844, %v2848
    %2850 = vmatprep.subr.mxu0 %v725
    %2851 = vmatpush1.msra.mxu0 %v724
    %2852 = vmatprep.subr.mxu0 %v721
    %2853 = vmatpush1.msra.mxu0 %v720
    %2854 = vmatprep.subr.mxu0 %v717
    %2855 = vmatpush1.msra.mxu0 %v716
    %2856 = vmatprep.subr.mxu0 %v713
    %2857 = vmatpush1.msra.mxu0 %v712
    %2858 = vmatprep.subr.mxu0 %v709
    %2859 = vmatpush1.msra.mxu0 %v708
    %2860 = vmatprep.subr.mxu0 %v705
    %2861 = vmatpush1.msra.mxu0 %v704
    %2862 = vmatprep.subr.mxu0 %v701
    %2863 = vmatpush1.msra.mxu0 %v700
    %2864 = vmatprep.subr.mxu0 %v697
    %2865 = vmatpush1.msra.mxu0 %v696
    %2866 = vmatprep.subr.mxu0 %v693
    %2867 = vmatpush1.msra.mxu0 %v692
    %2868 = vmatprep.subr.mxu0 %v689
    %2869 = vmatpush1.msra.mxu0 %v688
    %2870 = vmatprep.subr.mxu0 %v685
    %2871 = vmatpush1.msra.mxu0 %v684
    %2872 = vmatprep.subr.mxu0 %v681
    %2873 = vmatpush1.msra.mxu0 %v680
    %2874 = vmatprep.subr.mxu0 %v677
    %2875 = vmatpush1.msra.mxu0 %v676
    %2876 = vmatprep.subr.mxu0 %v673
    %2877 = vmatpush1.msra.mxu0 %v672
    %2878 = vmatprep.subr.mxu0 %v669
    %2879 = vmatpush1.msra.mxu0 %v668
    %2880 = vmatprep.subr.mxu0 %v665
    %2881 = vmatpush1.msra.mxu0 %v664
    %2882 = vmatprep.subr.mxu0 %v789
    %2883 = vmatpush2.msra.mxu0 %v788
    %2884 = vmatprep.subr.mxu0 %v785
    %2885 = vmatpush2.msra.mxu0 %v784
    %2886 = vmatprep.subr.mxu0 %v781
    %2887 = vmatpush2.msra.mxu0 %v780
    %2888 = vmatprep.subr.mxu0 %v777
    %2889 = vmatpush2.msra.mxu0 %v776
    %2890 = vmatprep.subr.mxu0 %v773
    %2891 = vmatpush2.msra.mxu0 %v772
    %2892 = vmatprep.subr.mxu0 %v769
    %2893 = vmatpush2.msra.mxu0 %v768
    %2894 = vmatprep.subr.mxu0 %v765
    %2895 = vmatpush2.msra.mxu0 %v764
    %2896 = vmatprep.subr.mxu0 %v761
    %2897 = vmatpush2.msra.mxu0 %v760
    %2898 = vmatprep.subr.mxu0 %v757
    %2899 = vmatpush2.msra.mxu0 %v756
    %2900 = vmatprep.subr.mxu0 %v753
    %2901 = vmatpush2.msra.mxu0 %v752
    %2902 = vmatprep.subr.mxu0 %v749
    %2903 = vmatpush2.msra.mxu0 %v748
    %2904 = vmatprep.subr.mxu0 %v745
    %2905 = vmatpush2.msra.mxu0 %v744
    %2906 = vmatprep.subr.mxu0 %v741
    %2907 = vmatpush2.msra.mxu0 %v740
    %2908 = vmatprep.subr.mxu0 %v737
    %2909 = vmatpush2.msra.mxu0 %v736
    %2910 = vmatprep.subr.mxu0 %v733
    %2911 = vmatpush2.msra.mxu0 %v732
    %2912 = vmatprep.subr.mxu0 %v729
    %2913 = vmatpush2.msra.mxu0 %v728
    %2914 = vmatprep.mubr.f32.mxu0 %v2672
    %2915 = vmatmul.mubr.f32.gmra.mxu0 %v2849
    %v2916 = vpop.f32.mrf.mxu0
    %v2917 = vadd.f32 %v406, %v2916
    %v2918 = vpop.f32.mrf.mxu0
    %v2919 = vadd.f32 %v410, %v2918
    %2920 = vdwg.mxu0
    %2921 = vmatprep.subr.mxu0 %v727
    %2922 = vmatpush1.msra.mxu0 %v726
    %2923 = vmatprep.subr.mxu0 %v723
    %2924 = vmatpush1.msra.mxu0 %v722
    %2925 = vmatprep.subr.mxu0 %v719
    %2926 = vmatpush1.msra.mxu0 %v718
    %2927 = vmatprep.subr.mxu0 %v715
    %2928 = vmatpush1.msra.mxu0 %v714
    %2929 = vmatprep.subr.mxu0 %v711
    %2930 = vmatpush1.msra.mxu0 %v710
    %2931 = vmatprep.subr.mxu0 %v707
    %2932 = vmatpush1.msra.mxu0 %v706
    %2933 = vmatprep.subr.mxu0 %v703
    %2934 = vmatpush1.msra.mxu0 %v702
    %2935 = vmatprep.subr.mxu0 %v699
    %2936 = vmatpush1.msra.mxu0 %v698
    %2937 = vmatprep.subr.mxu0 %v695
    %2938 = vmatpush1.msra.mxu0 %v694
    %2939 = vmatprep.subr.mxu0 %v691
    %2940 = vmatpush1.msra.mxu0 %v690
    %2941 = vmatprep.subr.mxu0 %v687
    %2942 = vmatpush1.msra.mxu0 %v686
    %2943 = vmatprep.subr.mxu0 %v683
    %2944 = vmatpush1.msra.mxu0 %v682
    %2945 = vmatprep.subr.mxu0 %v679
    %2946 = vmatpush1.msra.mxu0 %v678
    %2947 = vmatprep.subr.mxu0 %v675
    %2948 = vmatpush1.msra.mxu0 %v674
    %2949 = vmatprep.subr.mxu0 %v671
    %2950 = vmatpush1.msra.mxu0 %v670
    %2951 = vmatprep.subr.mxu0 %v667
    %2952 = vmatpush1.msra.mxu0 %v666
    %2953 = vmatprep.subr.mxu0 %v791
    %2954 = vmatpush2.msra.mxu0 %v790
    %2955 = vmatprep.subr.mxu0 %v787
    %2956 = vmatpush2.msra.mxu0 %v786
    %2957 = vmatprep.subr.mxu0 %v783
    %2958 = vmatpush2.msra.mxu0 %v782
    %2959 = vmatprep.subr.mxu0 %v779
    %2960 = vmatpush2.msra.mxu0 %v778
    %2961 = vmatprep.subr.mxu0 %v775
    %2962 = vmatpush2.msra.mxu0 %v774
    %2963 = vmatprep.subr.mxu0 %v771
    %2964 = vmatpush2.msra.mxu0 %v770
    %2965 = vmatprep.subr.mxu0 %v767
    %2966 = vmatpush2.msra.mxu0 %v766
    %2967 = vmatprep.subr.mxu0 %v763
    %2968 = vmatpush2.msra.mxu0 %v762
    %2969 = vmatprep.subr.mxu0 %v759
    %2970 = vmatpush2.msra.mxu0 %v758
    %2971 = vmatprep.subr.mxu0 %v755
    %2972 = vmatpush2.msra.mxu0 %v754
    %2973 = vmatprep.subr.mxu0 %v751
    %2974 = vmatpush2.msra.mxu0 %v750
    %2975 = vmatprep.subr.mxu0 %v747
    %2976 = vmatpush2.msra.mxu0 %v746
    %2977 = vmatprep.subr.mxu0 %v743
    %2978 = vmatpush2.msra.mxu0 %v742
    %2979 = vmatprep.subr.mxu0 %v739
    %2980 = vmatpush2.msra.mxu0 %v738
    %2981 = vmatprep.subr.mxu0 %v735
    %2982 = vmatpush2.msra.mxu0 %v734
    %2983 = vmatprep.subr.mxu0 %v731
    %2984 = vmatpush2.msra.mxu0 %v730
    %2985 = vmatprep.mubr.f32.mxu0 %v2672
    %2986 = vmatmul.mubr.f32.gmra.mxu0 %v2849
    %v2987 = vpop.f32.mrf.mxu0
    %v2988 = vadd.f32 %v414, %v2987
    %v2989 = vpop.f32.mrf.mxu0
    %v2990 = vadd.f32 %v418, %v2989
    %2991 = vdwg.mxu0
    %v2992 = vxor.u32 %v2917, 2147483648
    %v2993 = vmul.f32 %v2992, 1.442695
    %v2994 = vpow.pop %v2993
    %v2995 = vadd.f32 %v2994, 1.0
    %v2996 = vrcp.pop %v2995
    %v2997 = vmul.f32 1.0, %v2996
    %v2998 = vxor.u32 %v2919, 2147483648
    %v2999 = vmul.f32 %v2998, 1.442695
    %v3000 = vpow.pop %v2999
    %v3001 = vadd.f32 %v3000, 1.0
    %v3002 = vrcp.pop %v3001
    %v3003 = vmul.f32 1.0, %v3002
    %v3004 = vtanh.pop %v2988
    %v3005 = vxor.u32 %v2990, 2147483648
    %v3006 = vmul.f32 %v3005, 1.442695
    %v3007 = vpow.pop %v3006
    %v3008 = vadd.f32 %v3007, 1.0
    %v3009 = vrcp.pop %v3008
    %v3010 = vmul.f32 1.0, %v3009
    %v3011 = vmul.f32 %v3003, %v2670
    %v3012 = vmul.f32 %v2997, %v3004
    %v3013 = vadd.f32 %v3011, %v3012
    %v3014 = vtanh.pop %v3013
    %v3015 = vmul.f32 %v3010, %v3014
    %s3016 = smul.u32 7, 4
    %s3017 = smul.addr %s3016, 8
    %s3018 = scalar_lea.vmem [#allocation2], %s3017
    %v3019 = vld [vmem:[%s3018] sm:$0xff]
    %v3020 = vld [vmem:[%s3018 + $0x8] sm:$0xff]
    %v3021 = vld [vmem:[%s3018 + $0x10] sm:$0xff]
    %v3022 = vld [vmem:[%s3018 + $0x18] sm:$0xff]
    %3023 = vmatprep.subr.mxu0 %v491
    %3024 = vmatpush1.msra.mxu0 %v490
    %3025 = vmatprep.subr.mxu0 %v487
    %3026 = vmatpush1.msra.mxu0 %v486
    %3027 = vmatprep.subr.mxu0 %v483
    %3028 = vmatpush1.msra.mxu0 %v482
    %3029 = vmatprep.subr.mxu0 %v479
    %3030 = vmatpush1.msra.mxu0 %v478
    %3031 = vmatprep.subr.mxu0 %v475
    %3032 = vmatpush1.msra.mxu0 %v474
    %3033 = vmatprep.subr.mxu0 %v471
    %3034 = vmatpush1.msra.mxu0 %v470
    %3035 = vmatprep.subr.mxu0 %v467
    %3036 = vmatpush1.msra.mxu0 %v466
    %3037 = vmatprep.subr.mxu0 %v463
    %3038 = vmatpush1.msra.mxu0 %v462
    %3039 = vmatprep.subr.mxu0 %v459
    %3040 = vmatpush1.msra.mxu0 %v458
    %3041 = vmatprep.subr.mxu0 %v455
    %3042 = vmatpush1.msra.mxu0 %v454
    %3043 = vmatprep.subr.mxu0 %v451
    %3044 = vmatpush1.msra.mxu0 %v450
    %3045 = vmatprep.subr.mxu0 %v447
    %3046 = vmatpush1.msra.mxu0 %v446
    %3047 = vmatprep.subr.mxu0 %v443
    %3048 = vmatpush1.msra.mxu0 %v442
    %3049 = vmatprep.subr.mxu0 %v439
    %3050 = vmatpush1.msra.mxu0 %v438
    %3051 = vmatprep.subr.mxu0 %v435
    %3052 = vmatpush1.msra.mxu0 %v434
    %3053 = vmatprep.subr.mxu0 %v431
    %3054 = vmatpush1.msra.mxu0 %v430
    %3055 = vmatprep.subr.mxu0 0.0
    %3056 = vmatpush2.msra.mxu0 0.0
    %3057 = vmatprep.subr.mxu0 0.0
    %3058 = vmatpush2.msra.mxu0 0.0
    %3059 = vmatprep.subr.mxu0 0.0
    %3060 = vmatpush2.msra.mxu0 0.0
    %3061 = vmatprep.subr.mxu0 0.0
    %3062 = vmatpush2.msra.mxu0 0.0
    %3063 = vmatprep.subr.mxu0 0.0
    %3064 = vmatpush2.msra.mxu0 0.0
    %3065 = vmatprep.subr.mxu0 0.0
    %3066 = vmatpush2.msra.mxu0 0.0
    %3067 = vmatprep.subr.mxu0 0.0
    %3068 = vmatpush2.msra.mxu0 0.0
    %3069 = vmatprep.subr.mxu0 0.0
    %3070 = vmatpush2.msra.mxu0 0.0
    %3071 = vmatprep.subr.mxu0 0.0
    %3072 = vmatpush2.msra.mxu0 0.0
    %3073 = vmatprep.subr.mxu0 0.0
    %3074 = vmatpush2.msra.mxu0 0.0
    %3075 = vmatprep.subr.mxu0 0.0
    %3076 = vmatpush2.msra.mxu0 0.0
    %3077 = vmatprep.subr.mxu0 0.0
    %3078 = vmatpush2.msra.mxu0 0.0
    %3079 = vmatprep.subr.mxu0 0.0
    %3080 = vmatpush2.msra.mxu0 0.0
    %3081 = vmatprep.subr.mxu0 0.0
    %3082 = vmatpush2.msra.mxu0 0.0
    %3083 = vmatprep.subr.mxu0 0.0
    %3084 = vmatpush2.msra.mxu0 0.0
    %3085 = vmatprep.subr.mxu0 0.0
    %3086 = vmatpush2.msra.mxu0 0.0
    %3087 = vmatprep.mubr.f32.mxu0 0.0
    %3088 = vmatmul.mubr.f32.gmra.mxu0 %v2849
    %v3089 = vpop.f32.mrf.mxu0
    %v3090 = vadd.f32 0.0, %v3089
    %v3091 = vpop.f32.mrf.mxu0
    %v3092 = vadd.f32 0.0, %v3091
    %3093 = vdwg.mxu0
    %3094 = vmatprep.subr.mxu0 %v493
    %3095 = vmatpush1.msra.mxu0 %v492
    %3096 = vmatprep.subr.mxu0 %v489
    %3097 = vmatpush1.msra.mxu0 %v488
    %3098 = vmatprep.subr.mxu0 %v485
    %3099 = vmatpush1.msra.mxu0 %v484
    %3100 = vmatprep.subr.mxu0 %v481
    %3101 = vmatpush1.msra.mxu0 %v480
    %3102 = vmatprep.subr.mxu0 %v477
    %3103 = vmatpush1.msra.mxu0 %v476
    %3104 = vmatprep.subr.mxu0 %v473
    %3105 = vmatpush1.msra.mxu0 %v472
    %3106 = vmatprep.subr.mxu0 %v469
    %3107 = vmatpush1.msra.mxu0 %v468
    %3108 = vmatprep.subr.mxu0 %v465
    %3109 = vmatpush1.msra.mxu0 %v464
    %3110 = vmatprep.subr.mxu0 %v461
    %3111 = vmatpush1.msra.mxu0 %v460
    %3112 = vmatprep.subr.mxu0 %v457
    %3113 = vmatpush1.msra.mxu0 %v456
    %3114 = vmatprep.subr.mxu0 %v453
    %3115 = vmatpush1.msra.mxu0 %v452
    %3116 = vmatprep.subr.mxu0 %v449
    %3117 = vmatpush1.msra.mxu0 %v448
    %3118 = vmatprep.subr.mxu0 %v445
    %3119 = vmatpush1.msra.mxu0 %v444
    %3120 = vmatprep.subr.mxu0 %v441
    %3121 = vmatpush1.msra.mxu0 %v440
    %3122 = vmatprep.subr.mxu0 %v437
    %3123 = vmatpush1.msra.mxu0 %v436
    %3124 = vmatprep.subr.mxu0 %v433
    %3125 = vmatpush1.msra.mxu0 %v432
    %3126 = vmatprep.subr.mxu0 0.0
    %3127 = vmatpush2.msra.mxu0 0.0
    %3128 = vmatprep.subr.mxu0 0.0
    %3129 = vmatpush2.msra.mxu0 0.0
    %3130 = vmatprep.subr.mxu0 0.0
    %3131 = vmatpush2.msra.mxu0 0.0
    %3132 = vmatprep.subr.mxu0 0.0
    %3133 = vmatpush2.msra.mxu0 0.0
    %3134 = vmatprep.subr.mxu0 0.0
    %3135 = vmatpush2.msra.mxu0 0.0
    %3136 = vmatprep.subr.mxu0 0.0
    %3137 = vmatpush2.msra.mxu0 0.0
    %3138 = vmatprep.subr.mxu0 0.0
    %3139 = vmatpush2.msra.mxu0 0.0
    %3140 = vmatprep.subr.mxu0 0.0
    %3141 = vmatpush2.msra.mxu0 0.0
    %3142 = vmatprep.subr.mxu0 0.0
    %3143 = vmatpush2.msra.mxu0 0.0
    %3144 = vmatprep.subr.mxu0 0.0
    %3145 = vmatpush2.msra.mxu0 0.0
    %3146 = vmatprep.subr.mxu0 0.0
    %3147 = vmatpush2.msra.mxu0 0.0
    %3148 = vmatprep.subr.mxu0 0.0
    %3149 = vmatpush2.msra.mxu0 0.0
    %3150 = vmatprep.subr.mxu0 0.0
    %3151 = vmatpush2.msra.mxu0 0.0
    %3152 = vmatprep.subr.mxu0 0.0
    %3153 = vmatpush2.msra.mxu0 0.0
    %3154 = vmatprep.subr.mxu0 0.0
    %3155 = vmatpush2.msra.mxu0 0.0
    %3156 = vmatprep.subr.mxu0 0.0
    %3157 = vmatpush2.msra.mxu0 0.0
    %3158 = vmatprep.mubr.f32.mxu0 0.0
    %3159 = vmatmul.mubr.f32.gmra.mxu0 %v2849
    %v3160 = vpop.f32.mrf.mxu0
    %v3161 = vadd.f32 0.0, %v3160
    %v3162 = vpop.f32.mrf.mxu0
    %v3163 = vadd.f32 0.0, %v3162
    %3164 = vdwg.mxu0
    %v3165 = vadd.f32 %v3019, %v3090
    %v3166 = vadd.f32 %v3020, %v3092
    %v3167 = vadd.f32 %v3021, %v3161
    %v3168 = vadd.f32 %v3022, %v3163
    %v3169 = vxor.u32 %v3165, 2147483648
    %v3170 = vmul.f32 %v3169, 1.442695
    %v3171 = vpow.pop %v3170
    %v3172 = vadd.f32 %v3171, 1.0
    %v3173 = vrcp.pop %v3172
    %v3174 = vmul.f32 1.0, %v3173
    %v3175 = vxor.u32 %v3166, 2147483648
    %v3176 = vmul.f32 %v3175, 1.442695
    %v3177 = vpow.pop %v3176
    %v3178 = vadd.f32 %v3177, 1.0
    %v3179 = vrcp.pop %v3178
    %v3180 = vmul.f32 1.0, %v3179
    %v3181 = vtanh.pop %v3167
    %v3182 = vxor.u32 %v3168, 2147483648
    %v3183 = vmul.f32 %v3182, 1.442695
    %v3184 = vpow.pop %v3183
    %v3185 = vadd.f32 %v3184, 1.0
    %v3186 = vrcp.pop %v3185
    %v3187 = vmul.f32 1.0, %v3186
    %v3188 = vmul.f32 %v3180, %v2847
    %v3189 = vmul.f32 %v3174, %v3181
    %v3190 = vadd.f32 %v3188, %v3189
    %v3191 = vtanh.pop %v3190
    %v3192 = vmul.f32 %v3187, %v3191
    %3193 = vmatprep.subr.mxu0 %v725
    %3194 = vmatpush1.msra.mxu0 %v724
    %3195 = vmatprep.subr.mxu0 %v721
    %3196 = vmatpush1.msra.mxu0 %v720
    %3197 = vmatprep.subr.mxu0 %v717
    %3198 = vmatpush1.msra.mxu0 %v716
    %3199 = vmatprep.subr.mxu0 %v713
    %3200 = vmatpush1.msra.mxu0 %v712
    %3201 = vmatprep.subr.mxu0 %v709
    %3202 = vmatpush1.msra.mxu0 %v708
    %3203 = vmatprep.subr.mxu0 %v705
    %3204 = vmatpush1.msra.mxu0 %v704
    %3205 = vmatprep.subr.mxu0 %v701
    %3206 = vmatpush1.msra.mxu0 %v700
    %3207 = vmatprep.subr.mxu0 %v697
    %3208 = vmatpush1.msra.mxu0 %v696
    %3209 = vmatprep.subr.mxu0 %v693
    %3210 = vmatpush1.msra.mxu0 %v692
    %3211 = vmatprep.subr.mxu0 %v689
    %3212 = vmatpush1.msra.mxu0 %v688
    %3213 = vmatprep.subr.mxu0 %v685
    %3214 = vmatpush1.msra.mxu0 %v684
    %3215 = vmatprep.subr.mxu0 %v681
    %3216 = vmatpush1.msra.mxu0 %v680
    %3217 = vmatprep.subr.mxu0 %v677
    %3218 = vmatpush1.msra.mxu0 %v676
    %3219 = vmatprep.subr.mxu0 %v673
    %3220 = vmatpush1.msra.mxu0 %v672
    %3221 = vmatprep.subr.mxu0 %v669
    %3222 = vmatpush1.msra.mxu0 %v668
    %3223 = vmatprep.subr.mxu0 %v665
    %3224 = vmatpush1.msra.mxu0 %v664
    %3225 = vmatprep.subr.mxu0 %v789
    %3226 = vmatpush2.msra.mxu0 %v788
    %3227 = vmatprep.subr.mxu0 %v785
    %3228 = vmatpush2.msra.mxu0 %v784
    %3229 = vmatprep.subr.mxu0 %v781
    %3230 = vmatpush2.msra.mxu0 %v780
    %3231 = vmatprep.subr.mxu0 %v777
    %3232 = vmatpush2.msra.mxu0 %v776
    %3233 = vmatprep.subr.mxu0 %v773
    %3234 = vmatpush2.msra.mxu0 %v772
    %3235 = vmatprep.subr.mxu0 %v769
    %3236 = vmatpush2.msra.mxu0 %v768
    %3237 = vmatprep.subr.mxu0 %v765
    %3238 = vmatpush2.msra.mxu0 %v764
    %3239 = vmatprep.subr.mxu0 %v761
    %3240 = vmatpush2.msra.mxu0 %v760
    %3241 = vmatprep.subr.mxu0 %v757
    %3242 = vmatpush2.msra.mxu0 %v756
    %3243 = vmatprep.subr.mxu0 %v753
    %3244 = vmatpush2.msra.mxu0 %v752
    %3245 = vmatprep.subr.mxu0 %v749
    %3246 = vmatpush2.msra.mxu0 %v748
    %3247 = vmatprep.subr.mxu0 %v745
    %3248 = vmatpush2.msra.mxu0 %v744
    %3249 = vmatprep.subr.mxu0 %v741
    %3250 = vmatpush2.msra.mxu0 %v740
    %3251 = vmatprep.subr.mxu0 %v737
    %3252 = vmatpush2.msra.mxu0 %v736
    %3253 = vmatprep.subr.mxu0 %v733
    %3254 = vmatpush2.msra.mxu0 %v732
    %3255 = vmatprep.subr.mxu0 %v729
    %3256 = vmatpush2.msra.mxu0 %v728
    %3257 = vmatprep.mubr.f32.mxu0 %v3015
    %3258 = vmatmul.mubr.f32.gmra.mxu0 %v3192
    %v3259 = vpop.f32.mrf.mxu0
    %v3260 = vadd.f32 %v406, %v3259
    %v3261 = vpop.f32.mrf.mxu0
    %v3262 = vadd.f32 %v410, %v3261
    %3263 = vdwg.mxu0
    %3264 = vmatprep.subr.mxu0 %v727
    %3265 = vmatpush1.msra.mxu0 %v726
    %3266 = vmatprep.subr.mxu0 %v723
    %3267 = vmatpush1.msra.mxu0 %v722
    %3268 = vmatprep.subr.mxu0 %v719
    %3269 = vmatpush1.msra.mxu0 %v718
    %3270 = vmatprep.subr.mxu0 %v715
    %3271 = vmatpush1.msra.mxu0 %v714
    %3272 = vmatprep.subr.mxu0 %v711
    %3273 = vmatpush1.msra.mxu0 %v710
    %3274 = vmatprep.subr.mxu0 %v707
    %3275 = vmatpush1.msra.mxu0 %v706
    %3276 = vmatprep.subr.mxu0 %v703
    %3277 = vmatpush1.msra.mxu0 %v702
    %3278 = vmatprep.subr.mxu0 %v699
    %3279 = vmatpush1.msra.mxu0 %v698
    %3280 = vmatprep.subr.mxu0 %v695
    %3281 = vmatpush1.msra.mxu0 %v694
    %3282 = vmatprep.subr.mxu0 %v691
    %3283 = vmatpush1.msra.mxu0 %v690
    %3284 = vmatprep.subr.mxu0 %v687
    %3285 = vmatpush1.msra.mxu0 %v686
    %3286 = vmatprep.subr.mxu0 %v683
    %3287 = vmatpush1.msra.mxu0 %v682
    %3288 = vmatprep.subr.mxu0 %v679
    %3289 = vmatpush1.msra.mxu0 %v678
    %3290 = vmatprep.subr.mxu0 %v675
    %3291 = vmatpush1.msra.mxu0 %v674
    %3292 = vmatprep.subr.mxu0 %v671
    %3293 = vmatpush1.msra.mxu0 %v670
    %3294 = vmatprep.subr.mxu0 %v667
    %3295 = vmatpush1.msra.mxu0 %v666
    %3296 = vmatprep.subr.mxu0 %v791
    %3297 = vmatpush2.msra.mxu0 %v790
    %3298 = vmatprep.subr.mxu0 %v787
    %3299 = vmatpush2.msra.mxu0 %v786
    %3300 = vmatprep.subr.mxu0 %v783
    %3301 = vmatpush2.msra.mxu0 %v782
    %3302 = vmatprep.subr.mxu0 %v779
    %3303 = vmatpush2.msra.mxu0 %v778
    %3304 = vmatprep.subr.mxu0 %v775
    %3305 = vmatpush2.msra.mxu0 %v774
    %3306 = vmatprep.subr.mxu0 %v771
    %3307 = vmatpush2.msra.mxu0 %v770
    %3308 = vmatprep.subr.mxu0 %v767
    %3309 = vmatpush2.msra.mxu0 %v766
    %3310 = vmatprep.subr.mxu0 %v763
    %3311 = vmatpush2.msra.mxu0 %v762
    %3312 = vmatprep.subr.mxu0 %v759
    %3313 = vmatpush2.msra.mxu0 %v758
    %3314 = vmatprep.subr.mxu0 %v755
    %3315 = vmatpush2.msra.mxu0 %v754
    %3316 = vmatprep.subr.mxu0 %v751
    %3317 = vmatpush2.msra.mxu0 %v750
    %3318 = vmatprep.subr.mxu0 %v747
    %3319 = vmatpush2.msra.mxu0 %v746
    %3320 = vmatprep.subr.mxu0 %v743
    %3321 = vmatpush2.msra.mxu0 %v742
    %3322 = vmatprep.subr.mxu0 %v739
    %3323 = vmatpush2.msra.mxu0 %v738
    %3324 = vmatprep.subr.mxu0 %v735
    %3325 = vmatpush2.msra.mxu0 %v734
    %3326 = vmatprep.subr.mxu0 %v731
    %3327 = vmatpush2.msra.mxu0 %v730
    %3328 = vmatprep.mubr.f32.mxu0 %v3015
    %3329 = vmatmul.mubr.f32.gmra.mxu0 %v3192
    %v3330 = vpop.f32.mrf.mxu0
    %v3331 = vadd.f32 %v414, %v3330
    %v3332 = vpop.f32.mrf.mxu0
    %v3333 = vadd.f32 %v418, %v3332
    %3334 = vdwg.mxu0
    %v3335 = vxor.u32 %v3260, 2147483648
    %v3336 = vmul.f32 %v3335, 1.442695
    %v3337 = vpow.pop %v3336
    %v3338 = vadd.f32 %v3337, 1.0
    %v3339 = vrcp.pop %v3338
    %v3340 = vmul.f32 1.0, %v3339
    %v3341 = vxor.u32 %v3262, 2147483648
    %v3342 = vmul.f32 %v3341, 1.442695
    %v3343 = vpow.pop %v3342
    %v3344 = vadd.f32 %v3343, 1.0
    %v3345 = vrcp.pop %v3344
    %v3346 = vmul.f32 1.0, %v3345
    %v3347 = vtanh.pop %v3331
    %v3348 = vxor.u32 %v3333, 2147483648
    %v3349 = vmul.f32 %v3348, 1.442695
    %v3350 = vpow.pop %v3349
    %v3351 = vadd.f32 %v3350, 1.0
    %v3352 = vrcp.pop %v3351
    %v3353 = vmul.f32 1.0, %v3352
    %v3354 = vmul.f32 %v3346, %v3013
    %v3355 = vmul.f32 %v3340, %v3347
    %v3356 = vadd.f32 %v3354, %v3355
    %v3357 = vtanh.pop %v3356
    %v3358 = vmul.f32 %v3353, %v3357
    %v3359 = vld [vmem:[%s6] sm:$0x1]
    %v3361 = vlaneseq
    %v3362 = vshrl.u32 %v3361, 7
    %v3363 = vsub.s32 0, %v3362
    %v3364 = vrot.slane %v3359, %v3363
    %v3366 = vmul.f32 %v3358, %v3364
    %3367 = vadd.xlane.f32.xlu0 %v3366
    %v3368 = vpop.xlane.xlu0 %3367
    %v3369 = vld [vmem:[#allocation3] sm:$0x1]
    %v3371 = vlaneseq
    %v3372 = vshrl.u32 %v3371, 7
    %v3373 = vsub.s32 0, %v3372
    %v3374 = vrot.slane %v3369, %v3373
    %v3376 = vadd.f32 %v3368, %v3374
    %vm3377 = vcmask 7168
    %3378 = vst.msk [vmem:[%s8] sm:$0xff] %vm3377, %v3376
    // Predicated region
    $region46: #{tpu_custom_call.1} parent=1 // pred_check
      _
    $region47: #{tpu_custom_call.1} parent=1 // pred_check_branch
      %3380 = sbr.rel (0) target = $region49
    $region48: #{tpu_custom_call.1} parent=1 // pred_region
      _
    $region49: #{tpu_custom_call.1} parent=1 // pred_fallthru
      _
    // Predicated region
    $region50: #{tpu_custom_call.1} parent=1 // pred_check
      _
    $region51: #{tpu_custom_call.1} parent=1 // pred_check_branch
      %3382 = sbr.rel (0) target = $region53
    $region52: #{tpu_custom_call.1} parent=1 // pred_region
      _
    $region53: #{tpu_custom_call.1} parent=1 // pred_fallthru
      _
    %3383 = vsyncpa [#allocation5], 1
    %3384 = vsyncpa [#allocation7], 1

</llo_original>
